<compile_context>
chip_gen: v5e
topology: v5e:2x2
jax: 0.10.0
libtpu: 0.0.40
codegen_flags: <defaults>
</compile_context>

<pallas_src>
import numpy as np

import jax
import jax.numpy as jnp
from jax import lax
from jax.experimental import pallas as pl
from jax.experimental.pallas import tpu as pltpu

PLANES = 8
NUM_CLASSES = 10
IN_CH = 3
H_IN = W_IN = 28          # spatial size the architecture implies (conv7 output must be 1x1)
BN_EPS = 1e-5
POOL_AFTER = 1            # MaxPool2d(2) sits after conv2 (conv layer index 1)

CONV_SPECS = ([(3, IN_CH, PLANES)]
              + [(3, PLANES, PLANES)] * 5
              + [(4, PLANES, PLANES)])            # (kernel, Cin, Cout) per conv layer


def _layer_dims():
    """Static per-layer spatial bookkeeping shared by kernel + operand builder."""
    dims = []
    h = w = H_IN
    for li, (k, cin, cout) in enumerate(CONV_SPECS):
        ho, wo = h - k + 1, w - k + 1
        dims.append(dict(K=k, Cin=cin, Cout=cout, H=h, W=w, Ho=ho, Wo=wo))
        h, w = ho, wo
        if li == POOL_AFTER:
            assert h % 2 == 0 and w % 2 == 0, (h, w)
            h, w = h // 2, w // 2
    # fc(planes -> num_classes) only type-checks if the final feature map is 1x1.
    assert h == 1 and w == 1, (h, w)
    return dims


LAYER_DIMS = _layer_dims()
_N_LAYERS = len(LAYER_DIMS)


# --------------------------------------------------------------------------
# Fused whole-network kernel: one image per grid step, everything in VMEM.
# --------------------------------------------------------------------------
def _cnn_fused_kernel(x_ref, *refs):
    # refs = [bw_1, sb_1, ..., bw_7, sb_7, pool_row, pool_col, fc_w, fc_b, o_ref]
    bw_refs = refs[0:2 * _N_LAYERS:2]     # (K, W*Cin, Wo*Cout) banded conv weights
    sb_refs = refs[1:2 * _N_LAYERS:2]     # (2, Wo*Cout) folded BN scale / bias slabs
    pr_ref, pc_ref, fcw_ref, fcb_ref, o_ref = refs[2 * _N_LAYERS:]

    x = x_ref[0]                          # (H_IN, W_IN*IN_CH) lane-dense input slab

    for li, d in enumerate(LAYER_DIMS):
        K, Ho = d["K"], d["Ho"]
        # conv: K tall matmuls; taps + input channels folded into the contraction.
        acc = jnp.dot(x[0:Ho, :], bw_refs[li][0],
                      preferred_element_type=jnp.float32)
        for i in range(1, K):
            acc = acc + jnp.dot(x[i:i + Ho, :], bw_refs[li][i],
                                preferred_element_type=jnp.float32)
        # folded BatchNorm (eval running stats) + ReLU; broadcast hoisted (once/layer).
        sb = sb_refs[li][...]                             # (2, Wo*Cout)
        x = jnp.maximum(acc * sb[0:1, :] + sb[1:2, :], 0.0)

        if li == POOL_AFTER:
            # 2x2 stride-2 max-pool via constant 0/1 selection matmuls (exact):
            #   rows:    max(E_r @ x, O_r @ x)     cols: max(y @ E_c, y @ O_c)
            xr = jnp.maximum(
                jnp.dot(pr_ref[0], x, preferred_element_type=jnp.float32),
                jnp.dot(pr_ref[1], x, preferred_element_type=jnp.float32))
            x = jnp.maximum(
                jnp.dot(xr, pc_ref[0], preferred_element_type=jnp.float32),
                jnp.dot(xr, pc_ref[1], preferred_element_type=jnp.float32))

    # Final feature map is a (1, planes) slab == x.view(B, -1) per image.
    logits = jnp.dot(x, fcw_ref[...],
                     preferred_element_type=jnp.float32) + fcb_ref[...]   # (1, classes)
    m = jnp.max(logits, axis=-1, keepdims=True)
    s = logits - m
    o_ref[0] = s - jnp.log(jnp.sum(jnp.exp(s), axis=-1, keepdims=True))   # log_softmax


def _const_index_map(ndim):
    return lambda b: (0,) * ndim


def cnn_forward(x_nchw, ops):
    """x_nchw: (B, 3, 28, 28) f32; ops: flat tuple from build_operands()."""
    B = x_nchw.shape[0]
    assert x_nchw.shape[1:] == (IN_CH, H_IN, W_IN), x_nchw.shape
    # NCHW -> NHWC -> lane-dense (H, W*C) slab per image (one-time layout shuffle).
    x = jnp.transpose(x_nchw, (0, 2, 3, 1)).astype(jnp.float32)
    x = x.reshape(B, H_IN, W_IN * IN_CH)

    in_specs = [pl.BlockSpec((1, H_IN, W_IN * IN_CH), lambda b: (b, 0, 0))]
    in_specs += [pl.BlockSpec(a.shape, _const_index_map(a.ndim)) for a in ops]

    out = pl.pallas_call(
        _cnn_fused_kernel,
        out_shape=jax.ShapeDtypeStruct((B, 1, NUM_CLASSES), jnp.float32),
        grid=(B,),
        in_specs=in_specs,
        out_specs=pl.BlockSpec((1, 1, NUM_CLASSES), lambda b: (b, 0, 0)),
        compiler_params=pltpu.CompilerParams(
            dimension_semantics=("parallel",)),   # v7x: one image per TensorCore
    )(x, *ops)
    return out.reshape(B, NUM_CLASSES)


# --------------------------------------------------------------------------
# Host-side operand construction (banded conv weights, BN slabs, pool matrices).
# --------------------------------------------------------------------------
def _banded_weight(w, w_in):
    """BW_i[(wo+j)*Cin+ci, wo*Cout+co] = w[i, j, ci, co]  (zero elsewhere)."""
    k, _, cin, cout = w.shape
    wo_n = w_in - k + 1
    bw = np.zeros((k, w_in * cin, wo_n * cout), np.float32)
    for i in range(k):
        for j in range(k):
            for wo in range(wo_n):
                wi = wo + j
                bw[i, wi * cin:(wi + 1) * cin, wo * cout:(wo + 1) * cout] = w[i, j]
    return bw


def _pool_matrices(h, w, c):
    """0/1 selection matrices turning 2x2/stride-2 max-pool into 4 matmuls + 2 maxes."""
    ho, wo = h // 2, w // 2
    e_r = np.zeros((ho, h), np.float32)
    o_r = np.zeros((ho, h), np.float32)
    for r in range(ho):
        e_r[r, 2 * r] = 1.0
        o_r[r, 2 * r + 1] = 1.0
    e_c = np.zeros((w * c, wo * c), np.float32)
    o_c = np.zeros((w * c, wo * c), np.float32)
    for q in range(wo):
        for ch in range(c):
            e_c[(2 * q) * c + ch, q * c + ch] = 1.0
            o_c[(2 * q + 1) * c + ch, q * c + ch] = 1.0
    return np.stack([e_r, o_r]), np.stack([e_c, o_c])


def build_operands(conv_params, fc_params):
    assert len(conv_params) == _N_LAYERS
    ops = []
    pool_row = pool_col = None
    for li, ((w, scale, bias), d) in enumerate(zip(conv_params, LAYER_DIMS)):
        w = np.asarray(w, np.float32)
        scale = np.asarray(scale, np.float32)
        bias = np.asarray(bias, np.float32)
        assert w.shape == (d["K"], d["K"], d["Cin"], d["Cout"]), w.shape
        bw = _banded_weight(w, d["W"])                                  # (K, W*Cin, Wo*Cout)
        sb = np.stack([np.tile(scale, d["Wo"]),
                       np.tile(bias, d["Wo"])]).astype(np.float32)      # (2, Wo*Cout)
        ops += [jnp.asarray(bw), jnp.asarray(sb)]
        if li == POOL_AFTER:
            pr, pc = _pool_matrices(d["Ho"], d["Wo"], d["Cout"])
            pool_row, pool_col = jnp.asarray(pr), jnp.asarray(pc)
    fc_w, fc_b = fc_params
    ops += [pool_row, pool_col,
            jnp.asarray(fc_w, jnp.float32),
            jnp.asarray(fc_b, jnp.float32).reshape(1, NUM_CLASSES)]
    return tuple(ops)


# --------------------------------------------------------------------------
# Deterministic parameter init (shapes from CNN.__init__, planes=PLANES).
# Conv weights stored as HWIO; BN (eval) folded into per-channel (scale, bias).
# --------------------------------------------------------------------------
def init_params(key, planes=PLANES, num_classes=NUM_CLASSES):
    conv_params = []
    for K, cin, cout in CONV_SPECS:
        key, k1, k2, k3, k4, k5, k6 = jax.random.split(key, 7)
        fan_in = float(cin * K * K)
        w = jax.random.normal(k1, (K, K, cin, cout), jnp.float32) / jnp.sqrt(fan_in)
        conv_b = 0.01 * jax.random.normal(k2, (cout,), jnp.float32)
        gamma = 1.0 + 0.1 * jax.random.normal(k3, (cout,), jnp.float32)
        beta = 0.1 * jax.random.normal(k4, (cout,), jnp.float32)
        run_mean = 0.1 * jax.random.normal(k5, (cout,), jnp.float32)
        run_var = jnp.abs(jax.random.normal(k6, (cout,), jnp.float32)) + 0.5
        scale = gamma / jnp.sqrt(run_var + BN_EPS)
        bias = beta + (conv_b - run_mean) * scale
        conv_params.append((w, scale, bias))

    key, kfc1, kfc2 = jax.random.split(key, 3)
    fc_w = jax.random.normal(kfc1, (planes, num_classes), jnp.float32) / jnp.sqrt(float(planes))
    fc_b = 0.01 * jax.random.normal(kfc2, (num_classes,), jnp.float32)
    return conv_params, (fc_w, fc_b)


# --------------------------------------------------------------------------
# Pure-JAX (XLA) reference of the same eval-mode math, for correctness check.
# --------------------------------------------------------------------------
def reference_forward(x_nchw, conv_params, fc_params):
    x = jnp.transpose(x_nchw, (0, 2, 3, 1)).astype(jnp.float32)
    for li, (w, scale, bias) in enumerate(conv_params):
        x = lax.conv_general_dilated(
            x, w, (1, 1), "VALID",
            dimension_numbers=("NHWC", "HWIO", "NHWC"),
            precision=lax.Precision.HIGHEST)
        x = jnp.maximum(x * scale + bias, 0.0)
        if li == POOL_AFTER:
            B, H, W, C = x.shape
            x = x.reshape(B, H // 2, 2, W // 2, 2, C).max(axis=(2, 4))
    x = x.reshape(x.shape[0], -1)
    logits = jnp.dot(x, fc_params[0], precision=lax.Precision.HIGHEST) + fc_params[1]
    return jax.nn.log_softmax(logits, axis=-1)


if __name__ == "__main__":
    key = jax.random.PRNGKey(0)
    kx, kp = jax.random.split(key)

    # 28x28 input is what the forward implies: the final feature map must be 1x1 so that
    # fc(planes -> num_classes) type-checks (asserted in _layer_dims()).
    x = jax.random.normal(kx, (2, IN_CH, H_IN, W_IN), jnp.float32)

    conv_params, fc_params = init_params(kp)
    ops = build_operands(conv_params, fc_params)

    out = jax.jit(cnn_forward)(x, ops)
    out = jax.block_until_ready(out)

    assert out.shape == (2, NUM_CLASSES), out.shape
    assert bool(jnp.all(jnp.isfinite(out)))
    # rows of exp(log_softmax) must sum to 1
    assert bool(jnp.allclose(jnp.sum(jnp.exp(out), axis=1), 1.0, atol=1e-4))

    # cross-check the fused-kernel formulation against a plain XLA reference
    ref = jax.jit(reference_forward)(x, conv_params, fc_params)
    assert bool(jnp.allclose(out, ref, atol=5e-2, rtol=5e-2)), (
        float(jnp.max(jnp.abs(out - ref))))

    print("KERNEL_OK")
</pallas_src>

<mosaic_0001>
module attributes {stable_mosaic.version = 11 : i64} {
  func.func @_cnn_fused_kernel(%arg0: i32, %arg1: memref<1x28x84xf32, #tpu.memory_space<vmem>>, %arg2: memref<3x84x208xf32, #tpu.memory_space<vmem>>, %arg3: memref<2x208xf32, #tpu.memory_space<vmem>>, %arg4: memref<3x208x192xf32, #tpu.memory_space<vmem>>, %arg5: memref<2x192xf32, #tpu.memory_space<vmem>>, %arg6: memref<3x96x80xf32, #tpu.memory_space<vmem>>, %arg7: memref<2x80xf32, #tpu.memory_space<vmem>>, %arg8: memref<3x80x64xf32, #tpu.memory_space<vmem>>, %arg9: memref<2x64xf32, #tpu.memory_space<vmem>>, %arg10: memref<3x64x48xf32, #tpu.memory_space<vmem>>, %arg11: memref<2x48xf32, #tpu.memory_space<vmem>>, %arg12: memref<3x48x32xf32, #tpu.memory_space<vmem>>, %arg13: memref<2x32xf32, #tpu.memory_space<vmem>>, %arg14: memref<4x32x8xf32, #tpu.memory_space<vmem>>, %arg15: memref<2x8xf32, #tpu.memory_space<vmem>>, %arg16: memref<2x12x24xf32, #tpu.memory_space<vmem>>, %arg17: memref<2x192x96xf32, #tpu.memory_space<vmem>>, %arg18: memref<8x10xf32, #tpu.memory_space<vmem>>, %arg19: memref<1x10xf32, #tpu.memory_space<vmem>>, %arg20: memref<1x1x10xf32, #tpu.memory_space<vmem>>) attributes {dimension_semantics = [#tpu.dimension_semantics<parallel>], iteration_bounds = array<i64: 2>, scalar_prefetch = 0 : i64, scratch_operands = 0 : i64, tpu.core_type = #tpu.core_type<tc>, window_params = [{transform_indices = @transform_0, window_bounds = array<i64: 1, 28, 84>}, {pipeline_mode = #tpu.pipeline_mode<synchronous>, transform_indices = @transform_1, window_bounds = array<i64: 3, 84, 208>}, {pipeline_mode = #tpu.pipeline_mode<synchronous>, transform_indices = @transform_2, window_bounds = array<i64: 2, 208>}, {pipeline_mode = #tpu.pipeline_mode<synchronous>, transform_indices = @transform_3, window_bounds = array<i64: 3, 208, 192>}, {pipeline_mode = #tpu.pipeline_mode<synchronous>, transform_indices = @transform_4, window_bounds = array<i64: 2, 192>}, {pipeline_mode = #tpu.pipeline_mode<synchronous>, transform_indices = @transform_5, window_bounds = array<i64: 3, 96, 80>}, {pipeline_mode = #tpu.pipeline_mode<synchronous>, transform_indices = @transform_6, window_bounds = array<i64: 2, 80>}, {pipeline_mode = #tpu.pipeline_mode<synchronous>, transform_indices = @transform_7, window_bounds = array<i64: 3, 80, 64>}, {pipeline_mode = #tpu.pipeline_mode<synchronous>, transform_indices = @transform_8, window_bounds = array<i64: 2, 64>}, {pipeline_mode = #tpu.pipeline_mode<synchronous>, transform_indices = @transform_9, window_bounds = array<i64: 3, 64, 48>}, {pipeline_mode = #tpu.pipeline_mode<synchronous>, transform_indices = @transform_10, window_bounds = array<i64: 2, 48>}, {pipeline_mode = #tpu.pipeline_mode<synchronous>, transform_indices = @transform_11, window_bounds = array<i64: 3, 48, 32>}, {pipeline_mode = #tpu.pipeline_mode<synchronous>, transform_indices = @transform_12, window_bounds = array<i64: 2, 32>}, {pipeline_mode = #tpu.pipeline_mode<synchronous>, transform_indices = @transform_13, window_bounds = array<i64: 4, 32, 8>}, {pipeline_mode = #tpu.pipeline_mode<synchronous>, transform_indices = @transform_14, window_bounds = array<i64: 2, 8>}, {pipeline_mode = #tpu.pipeline_mode<synchronous>, transform_indices = @transform_15, window_bounds = array<i64: 2, 12, 24>}, {pipeline_mode = #tpu.pipeline_mode<synchronous>, transform_indices = @transform_16, window_bounds = array<i64: 2, 192, 96>}, {pipeline_mode = #tpu.pipeline_mode<synchronous>, transform_indices = @transform_17, window_bounds = array<i64: 8, 10>}, {pipeline_mode = #tpu.pipeline_mode<synchronous>, transform_indices = @transform_18, window_bounds = array<i64: 1, 10>}, {transform_indices = @transform_19, window_bounds = array<i64: 1, 1, 10>}]} {
    %c0 = arith.constant 0 : index
    %c0_0 = arith.constant 0 : index
    %c0_1 = arith.constant 0 : index
    %0 = vector.load %arg1[%c0, %c0_0, %c0_1] : memref<1x28x84xf32, #tpu.memory_space<vmem>>, vector<1x28x84xf32>
    %1 = vector.shape_cast %0 : vector<1x28x84xf32> to vector<28x84xf32>
    %2 = vector.extract_strided_slice %1 {offsets = [0, 0], sizes = [26, 84], strides = [1, 1]} : vector<28x84xf32> to vector<26x84xf32>
    %c0_2 = arith.constant 0 : index
    %c0_3 = arith.constant 0 : index
    %c0_4 = arith.constant 0 : index
    %3 = vector.load %arg2[%c0_2, %c0_3, %c0_4] : memref<3x84x208xf32, #tpu.memory_space<vmem>>, vector<1x84x208xf32>
    %4 = vector.shape_cast %3 : vector<1x84x208xf32> to vector<84x208xf32>
    %cst = arith.constant dense<0.000000e+00> : vector<26x208xf32>
    %5 = tpu.matmul %2, %4, %cst {dimension_numbers = #tpu.dot_dimension_numbers<[1], [0], [0], [1], [0, 0, 1, 1], [], []>} : vector<26x84xf32>, vector<84x208xf32>, vector<26x208xf32> -> vector<26x208xf32>
    %6 = vector.extract_strided_slice %1 {offsets = [1, 0], sizes = [26, 84], strides = [1, 1]} : vector<28x84xf32> to vector<26x84xf32>
    %c1 = arith.constant 1 : index
    %c0_5 = arith.constant 0 : index
    %c0_6 = arith.constant 0 : index
    %7 = vector.load %arg2[%c1, %c0_5, %c0_6] : memref<3x84x208xf32, #tpu.memory_space<vmem>>, vector<1x84x208xf32>
    %8 = vector.shape_cast %7 : vector<1x84x208xf32> to vector<84x208xf32>
    %cst_7 = arith.constant dense<0.000000e+00> : vector<26x208xf32>
    %9 = tpu.matmul %6, %8, %cst_7 {dimension_numbers = #tpu.dot_dimension_numbers<[1], [0], [0], [1], [0, 0, 1, 1], [], []>} : vector<26x84xf32>, vector<84x208xf32>, vector<26x208xf32> -> vector<26x208xf32>
    %10 = arith.addf %5, %9 : vector<26x208xf32>
    %11 = vector.extract_strided_slice %1 {offsets = [2, 0], sizes = [26, 84], strides = [1, 1]} : vector<28x84xf32> to vector<26x84xf32>
    %c2 = arith.constant 2 : index
    %c0_8 = arith.constant 0 : index
    %c0_9 = arith.constant 0 : index
    %12 = vector.load %arg2[%c2, %c0_8, %c0_9] : memref<3x84x208xf32, #tpu.memory_space<vmem>>, vector<1x84x208xf32>
    %13 = vector.shape_cast %12 : vector<1x84x208xf32> to vector<84x208xf32>
    %cst_10 = arith.constant dense<0.000000e+00> : vector<26x208xf32>
    %14 = tpu.matmul %11, %13, %cst_10 {dimension_numbers = #tpu.dot_dimension_numbers<[1], [0], [0], [1], [0, 0, 1, 1], [], []>} : vector<26x84xf32>, vector<84x208xf32>, vector<26x208xf32> -> vector<26x208xf32>
    %15 = arith.addf %10, %14 : vector<26x208xf32>
    %c0_11 = arith.constant 0 : index
    %c0_12 = arith.constant 0 : index
    %16 = vector.load %arg3[%c0_11, %c0_12] : memref<2x208xf32, #tpu.memory_space<vmem>>, vector<2x208xf32>
    %17 = vector.extract_strided_slice %16 {offsets = [0, 0], sizes = [1, 208], strides = [1, 1]} : vector<2x208xf32> to vector<1x208xf32>
    %18 = vector.broadcast %17 : vector<1x208xf32> to vector<26x208xf32>
    %19 = arith.mulf %15, %18 : vector<26x208xf32>
    %20 = vector.extract_strided_slice %16 {offsets = [1, 0], sizes = [1, 208], strides = [1, 1]} : vector<2x208xf32> to vector<1x208xf32>
    %21 = vector.broadcast %20 : vector<1x208xf32> to vector<26x208xf32>
    %22 = arith.addf %19, %21 : vector<26x208xf32>
    %cst_13 = arith.constant 0.000000e+00 : f32
    %23 = vector.broadcast %cst_13 : f32 to vector<26x208xf32>
    %24 = arith.maximumf %22, %23 : vector<26x208xf32>
    %25 = vector.extract_strided_slice %24 {offsets = [0, 0], sizes = [24, 208], strides = [1, 1]} : vector<26x208xf32> to vector<24x208xf32>
    %c0_14 = arith.constant 0 : index
    %c0_15 = arith.constant 0 : index
    %c0_16 = arith.constant 0 : index
    %26 = vector.load %arg4[%c0_14, %c0_15, %c0_16] : memref<3x208x192xf32, #tpu.memory_space<vmem>>, vector<1x208x192xf32>
    %27 = vector.shape_cast %26 : vector<1x208x192xf32> to vector<208x192xf32>
    %cst_17 = arith.constant dense<0.000000e+00> : vector<24x192xf32>
    %28 = tpu.matmul %25, %27, %cst_17 {dimension_numbers = #tpu.dot_dimension_numbers<[1], [0], [0], [1], [0, 0, 1, 1], [], []>} : vector<24x208xf32>, vector<208x192xf32>, vector<24x192xf32> -> vector<24x192xf32>
    %29 = vector.extract_strided_slice %24 {offsets = [1, 0], sizes = [24, 208], strides = [1, 1]} : vector<26x208xf32> to vector<24x208xf32>
    %c1_18 = arith.constant 1 : index
    %c0_19 = arith.constant 0 : index
    %c0_20 = arith.constant 0 : index
    %30 = vector.load %arg4[%c1_18, %c0_19, %c0_20] : memref<3x208x192xf32, #tpu.memory_space<vmem>>, vector<1x208x192xf32>
    %31 = vector.shape_cast %30 : vector<1x208x192xf32> to vector<208x192xf32>
    %cst_21 = arith.constant dense<0.000000e+00> : vector<24x192xf32>
    %32 = tpu.matmul %29, %31, %cst_21 {dimension_numbers = #tpu.dot_dimension_numbers<[1], [0], [0], [1], [0, 0, 1, 1], [], []>} : vector<24x208xf32>, vector<208x192xf32>, vector<24x192xf32> -> vector<24x192xf32>
    %33 = arith.addf %28, %32 : vector<24x192xf32>
    %34 = vector.extract_strided_slice %24 {offsets = [2, 0], sizes = [24, 208], strides = [1, 1]} : vector<26x208xf32> to vector<24x208xf32>
    %c2_22 = arith.constant 2 : index
    %c0_23 = arith.constant 0 : index
    %c0_24 = arith.constant 0 : index
    %35 = vector.load %arg4[%c2_22, %c0_23, %c0_24] : memref<3x208x192xf32, #tpu.memory_space<vmem>>, vector<1x208x192xf32>
    %36 = vector.shape_cast %35 : vector<1x208x192xf32> to vector<208x192xf32>
    %cst_25 = arith.constant dense<0.000000e+00> : vector<24x192xf32>
    %37 = tpu.matmul %34, %36, %cst_25 {dimension_numbers = #tpu.dot_dimension_numbers<[1], [0], [0], [1], [0, 0, 1, 1], [], []>} : vector<24x208xf32>, vector<208x192xf32>, vector<24x192xf32> -> vector<24x192xf32>
    %38 = arith.addf %33, %37 : vector<24x192xf32>
    %c0_26 = arith.constant 0 : index
    %c0_27 = arith.constant 0 : index
    %39 = vector.load %arg5[%c0_26, %c0_27] : memref<2x192xf32, #tpu.memory_space<vmem>>, vector<2x192xf32>
    %40 = vector.extract_strided_slice %39 {offsets = [0, 0], sizes = [1, 192], strides = [1, 1]} : vector<2x192xf32> to vector<1x192xf32>
    %41 = vector.broadcast %40 : vector<1x192xf32> to vector<24x192xf32>
    %42 = arith.mulf %38, %41 : vector<24x192xf32>
    %43 = vector.extract_strided_slice %39 {offsets = [1, 0], sizes = [1, 192], strides = [1, 1]} : vector<2x192xf32> to vector<1x192xf32>
    %44 = vector.broadcast %43 : vector<1x192xf32> to vector<24x192xf32>
    %45 = arith.addf %42, %44 : vector<24x192xf32>
    %cst_28 = arith.constant 0.000000e+00 : f32
    %46 = vector.broadcast %cst_28 : f32 to vector<24x192xf32>
    %47 = arith.maximumf %45, %46 : vector<24x192xf32>
    %c0_29 = arith.constant 0 : index
    %c0_30 = arith.constant 0 : index
    %c0_31 = arith.constant 0 : index
    %48 = vector.load %arg16[%c0_29, %c0_30, %c0_31] : memref<2x12x24xf32, #tpu.memory_space<vmem>>, vector<1x12x24xf32>
    %49 = vector.shape_cast %48 : vector<1x12x24xf32> to vector<12x24xf32>
    %cst_32 = arith.constant dense<0.000000e+00> : vector<12x192xf32>
    %50 = tpu.matmul %49, %47, %cst_32 {dimension_numbers = #tpu.dot_dimension_numbers<[1], [0], [0], [1], [0, 0, 1, 1], [], []>} : vector<12x24xf32>, vector<24x192xf32>, vector<12x192xf32> -> vector<12x192xf32>
    %c1_33 = arith.constant 1 : index
    %c0_34 = arith.constant 0 : index
    %c0_35 = arith.constant 0 : index
    %51 = vector.load %arg16[%c1_33, %c0_34, %c0_35] : memref<2x12x24xf32, #tpu.memory_space<vmem>>, vector<1x12x24xf32>
    %52 = vector.shape_cast %51 : vector<1x12x24xf32> to vector<12x24xf32>
    %cst_36 = arith.constant dense<0.000000e+00> : vector<12x192xf32>
    %53 = tpu.matmul %52, %47, %cst_36 {dimension_numbers = #tpu.dot_dimension_numbers<[1], [0], [0], [1], [0, 0, 1, 1], [], []>} : vector<12x24xf32>, vector<24x192xf32>, vector<12x192xf32> -> vector<12x192xf32>
    %54 = arith.maximumf %50, %53 : vector<12x192xf32>
    %c0_37 = arith.constant 0 : index
    %c0_38 = arith.constant 0 : index
    %c0_39 = arith.constant 0 : index
    %55 = vector.load %arg17[%c0_37, %c0_38, %c0_39] : memref<2x192x96xf32, #tpu.memory_space<vmem>>, vector<1x192x96xf32>
    %56 = vector.shape_cast %55 : vector<1x192x96xf32> to vector<192x96xf32>
    %cst_40 = arith.constant dense<0.000000e+00> : vector<12x96xf32>
    %57 = tpu.matmul %54, %56, %cst_40 {dimension_numbers = #tpu.dot_dimension_numbers<[1], [0], [0], [1], [0, 0, 1, 1], [], []>} : vector<12x192xf32>, vector<192x96xf32>, vector<12x96xf32> -> vector<12x96xf32>
    %c1_41 = arith.constant 1 : index
    %c0_42 = arith.constant 0 : index
    %c0_43 = arith.constant 0 : index
    %58 = vector.load %arg17[%c1_41, %c0_42, %c0_43] : memref<2x192x96xf32, #tpu.memory_space<vmem>>, vector<1x192x96xf32>
    %59 = vector.shape_cast %58 : vector<1x192x96xf32> to vector<192x96xf32>
    %cst_44 = arith.constant dense<0.000000e+00> : vector<12x96xf32>
    %60 = tpu.matmul %54, %59, %cst_44 {dimension_numbers = #tpu.dot_dimension_numbers<[1], [0], [0], [1], [0, 0, 1, 1], [], []>} : vector<12x192xf32>, vector<192x96xf32>, vector<12x96xf32> -> vector<12x96xf32>
    %61 = arith.maximumf %57, %60 : vector<12x96xf32>
    %62 = vector.extract_strided_slice %61 {offsets = [0, 0], sizes = [10, 96], strides = [1, 1]} : vector<12x96xf32> to vector<10x96xf32>
    %c0_45 = arith.constant 0 : index
    %c0_46 = arith.constant 0 : index
    %c0_47 = arith.constant 0 : index
    %63 = vector.load %arg6[%c0_45, %c0_46, %c0_47] : memref<3x96x80xf32, #tpu.memory_space<vmem>>, vector<1x96x80xf32>
    %64 = vector.shape_cast %63 : vector<1x96x80xf32> to vector<96x80xf32>
    %cst_48 = arith.constant dense<0.000000e+00> : vector<10x80xf32>
    %65 = tpu.matmul %62, %64, %cst_48 {dimension_numbers = #tpu.dot_dimension_numbers<[1], [0], [0], [1], [0, 0, 1, 1], [], []>} : vector<10x96xf32>, vector<96x80xf32>, vector<10x80xf32> -> vector<10x80xf32>
    %66 = vector.extract_strided_slice %61 {offsets = [1, 0], sizes = [10, 96], strides = [1, 1]} : vector<12x96xf32> to vector<10x96xf32>
    %c1_49 = arith.constant 1 : index
    %c0_50 = arith.constant 0 : index
    %c0_51 = arith.constant 0 : index
    %67 = vector.load %arg6[%c1_49, %c0_50, %c0_51] : memref<3x96x80xf32, #tpu.memory_space<vmem>>, vector<1x96x80xf32>
    %68 = vector.shape_cast %67 : vector<1x96x80xf32> to vector<96x80xf32>
    %cst_52 = arith.constant dense<0.000000e+00> : vector<10x80xf32>
    %69 = tpu.matmul %66, %68, %cst_52 {dimension_numbers = #tpu.dot_dimension_numbers<[1], [0], [0], [1], [0, 0, 1, 1], [], []>} : vector<10x96xf32>, vector<96x80xf32>, vector<10x80xf32> -> vector<10x80xf32>
    %70 = arith.addf %65, %69 : vector<10x80xf32>
    %71 = vector.extract_strided_slice %61 {offsets = [2, 0], sizes = [10, 96], strides = [1, 1]} : vector<12x96xf32> to vector<10x96xf32>
    %c2_53 = arith.constant 2 : index
    %c0_54 = arith.constant 0 : index
    %c0_55 = arith.constant 0 : index
    %72 = vector.load %arg6[%c2_53, %c0_54, %c0_55] : memref<3x96x80xf32, #tpu.memory_space<vmem>>, vector<1x96x80xf32>
    %73 = vector.shape_cast %72 : vector<1x96x80xf32> to vector<96x80xf32>
    %cst_56 = arith.constant dense<0.000000e+00> : vector<10x80xf32>
    %74 = tpu.matmul %71, %73, %cst_56 {dimension_numbers = #tpu.dot_dimension_numbers<[1], [0], [0], [1], [0, 0, 1, 1], [], []>} : vector<10x96xf32>, vector<96x80xf32>, vector<10x80xf32> -> vector<10x80xf32>
    %75 = arith.addf %70, %74 : vector<10x80xf32>
    %c0_57 = arith.constant 0 : index
    %c0_58 = arith.constant 0 : index
    %76 = vector.load %arg7[%c0_57, %c0_58] : memref<2x80xf32, #tpu.memory_space<vmem>>, vector<2x80xf32>
    %77 = vector.extract_strided_slice %76 {offsets = [0, 0], sizes = [1, 80], strides = [1, 1]} : vector<2x80xf32> to vector<1x80xf32>
    %78 = vector.broadcast %77 : vector<1x80xf32> to vector<10x80xf32>
    %79 = arith.mulf %75, %78 : vector<10x80xf32>
    %80 = vector.extract_strided_slice %76 {offsets = [1, 0], sizes = [1, 80], strides = [1, 1]} : vector<2x80xf32> to vector<1x80xf32>
    %81 = vector.broadcast %80 : vector<1x80xf32> to vector<10x80xf32>
    %82 = arith.addf %79, %81 : vector<10x80xf32>
    %cst_59 = arith.constant 0.000000e+00 : f32
    %83 = vector.broadcast %cst_59 : f32 to vector<10x80xf32>
    %84 = arith.maximumf %82, %83 : vector<10x80xf32>
    %85 = vector.extract_strided_slice %84 {offsets = [0, 0], sizes = [8, 80], strides = [1, 1]} : vector<10x80xf32> to vector<8x80xf32>
    %c0_60 = arith.constant 0 : index
    %c0_61 = arith.constant 0 : index
    %c0_62 = arith.constant 0 : index
    %86 = vector.load %arg8[%c0_60, %c0_61, %c0_62] : memref<3x80x64xf32, #tpu.memory_space<vmem>>, vector<1x80x64xf32>
    %87 = vector.shape_cast %86 : vector<1x80x64xf32> to vector<80x64xf32>
    %cst_63 = arith.constant dense<0.000000e+00> : vector<8x64xf32>
    %88 = tpu.matmul %85, %87, %cst_63 {dimension_numbers = #tpu.dot_dimension_numbers<[1], [0], [0], [1], [0, 0, 1, 1], [], []>} : vector<8x80xf32>, vector<80x64xf32>, vector<8x64xf32> -> vector<8x64xf32>
    %89 = vector.extract_strided_slice %84 {offsets = [1, 0], sizes = [8, 80], strides = [1, 1]} : vector<10x80xf32> to vector<8x80xf32>
    %c1_64 = arith.constant 1 : index
    %c0_65 = arith.constant 0 : index
    %c0_66 = arith.constant 0 : index
    %90 = vector.load %arg8[%c1_64, %c0_65, %c0_66] : memref<3x80x64xf32, #tpu.memory_space<vmem>>, vector<1x80x64xf32>
    %91 = vector.shape_cast %90 : vector<1x80x64xf32> to vector<80x64xf32>
    %cst_67 = arith.constant dense<0.000000e+00> : vector<8x64xf32>
    %92 = tpu.matmul %89, %91, %cst_67 {dimension_numbers = #tpu.dot_dimension_numbers<[1], [0], [0], [1], [0, 0, 1, 1], [], []>} : vector<8x80xf32>, vector<80x64xf32>, vector<8x64xf32> -> vector<8x64xf32>
    %93 = arith.addf %88, %92 : vector<8x64xf32>
    %94 = vector.extract_strided_slice %84 {offsets = [2, 0], sizes = [8, 80], strides = [1, 1]} : vector<10x80xf32> to vector<8x80xf32>
    %c2_68 = arith.constant 2 : index
    %c0_69 = arith.constant 0 : index
    %c0_70 = arith.constant 0 : index
    %95 = vector.load %arg8[%c2_68, %c0_69, %c0_70] : memref<3x80x64xf32, #tpu.memory_space<vmem>>, vector<1x80x64xf32>
    %96 = vector.shape_cast %95 : vector<1x80x64xf32> to vector<80x64xf32>
    %cst_71 = arith.constant dense<0.000000e+00> : vector<8x64xf32>
    %97 = tpu.matmul %94, %96, %cst_71 {dimension_numbers = #tpu.dot_dimension_numbers<[1], [0], [0], [1], [0, 0, 1, 1], [], []>} : vector<8x80xf32>, vector<80x64xf32>, vector<8x64xf32> -> vector<8x64xf32>
    %98 = arith.addf %93, %97 : vector<8x64xf32>
    %c0_72 = arith.constant 0 : index
    %c0_73 = arith.constant 0 : index
    %99 = vector.load %arg9[%c0_72, %c0_73] : memref<2x64xf32, #tpu.memory_space<vmem>>, vector<2x64xf32>
    %100 = vector.extract_strided_slice %99 {offsets = [0, 0], sizes = [1, 64], strides = [1, 1]} : vector<2x64xf32> to vector<1x64xf32>
    %101 = vector.broadcast %100 : vector<1x64xf32> to vector<8x64xf32>
    %102 = arith.mulf %98, %101 : vector<8x64xf32>
    %103 = vector.extract_strided_slice %99 {offsets = [1, 0], sizes = [1, 64], strides = [1, 1]} : vector<2x64xf32> to vector<1x64xf32>
    %104 = vector.broadcast %103 : vector<1x64xf32> to vector<8x64xf32>
    %105 = arith.addf %102, %104 : vector<8x64xf32>
    %cst_74 = arith.constant 0.000000e+00 : f32
    %106 = vector.broadcast %cst_74 : f32 to vector<8x64xf32>
    %107 = arith.maximumf %105, %106 : vector<8x64xf32>
    %108 = vector.extract_strided_slice %107 {offsets = [0, 0], sizes = [6, 64], strides = [1, 1]} : vector<8x64xf32> to vector<6x64xf32>
    %c0_75 = arith.constant 0 : index
    %c0_76 = arith.constant 0 : index
    %c0_77 = arith.constant 0 : index
    %109 = vector.load %arg10[%c0_75, %c0_76, %c0_77] : memref<3x64x48xf32, #tpu.memory_space<vmem>>, vector<1x64x48xf32>
    %110 = vector.shape_cast %109 : vector<1x64x48xf32> to vector<64x48xf32>
    %cst_78 = arith.constant dense<0.000000e+00> : vector<6x48xf32>
    %111 = tpu.matmul %108, %110, %cst_78 {dimension_numbers = #tpu.dot_dimension_numbers<[1], [0], [0], [1], [0, 0, 1, 1], [], []>} : vector<6x64xf32>, vector<64x48xf32>, vector<6x48xf32> -> vector<6x48xf32>
    %112 = vector.extract_strided_slice %107 {offsets = [1, 0], sizes = [6, 64], strides = [1, 1]} : vector<8x64xf32> to vector<6x64xf32>
    %c1_79 = arith.constant 1 : index
    %c0_80 = arith.constant 0 : index
    %c0_81 = arith.constant 0 : index
    %113 = vector.load %arg10[%c1_79, %c0_80, %c0_81] : memref<3x64x48xf32, #tpu.memory_space<vmem>>, vector<1x64x48xf32>
    %114 = vector.shape_cast %113 : vector<1x64x48xf32> to vector<64x48xf32>
    %cst_82 = arith.constant dense<0.000000e+00> : vector<6x48xf32>
    %115 = tpu.matmul %112, %114, %cst_82 {dimension_numbers = #tpu.dot_dimension_numbers<[1], [0], [0], [1], [0, 0, 1, 1], [], []>} : vector<6x64xf32>, vector<64x48xf32>, vector<6x48xf32> -> vector<6x48xf32>
    %116 = arith.addf %111, %115 : vector<6x48xf32>
    %117 = vector.extract_strided_slice %107 {offsets = [2, 0], sizes = [6, 64], strides = [1, 1]} : vector<8x64xf32> to vector<6x64xf32>
    %c2_83 = arith.constant 2 : index
    %c0_84 = arith.constant 0 : index
    %c0_85 = arith.constant 0 : index
    %118 = vector.load %arg10[%c2_83, %c0_84, %c0_85] : memref<3x64x48xf32, #tpu.memory_space<vmem>>, vector<1x64x48xf32>
    %119 = vector.shape_cast %118 : vector<1x64x48xf32> to vector<64x48xf32>
    %cst_86 = arith.constant dense<0.000000e+00> : vector<6x48xf32>
    %120 = tpu.matmul %117, %119, %cst_86 {dimension_numbers = #tpu.dot_dimension_numbers<[1], [0], [0], [1], [0, 0, 1, 1], [], []>} : vector<6x64xf32>, vector<64x48xf32>, vector<6x48xf32> -> vector<6x48xf32>
    %121 = arith.addf %116, %120 : vector<6x48xf32>
    %c0_87 = arith.constant 0 : index
    %c0_88 = arith.constant 0 : index
    %122 = vector.load %arg11[%c0_87, %c0_88] : memref<2x48xf32, #tpu.memory_space<vmem>>, vector<2x48xf32>
    %123 = vector.extract_strided_slice %122 {offsets = [0, 0], sizes = [1, 48], strides = [1, 1]} : vector<2x48xf32> to vector<1x48xf32>
    %124 = vector.broadcast %123 : vector<1x48xf32> to vector<6x48xf32>
    %125 = arith.mulf %121, %124 : vector<6x48xf32>
    %126 = vector.extract_strided_slice %122 {offsets = [1, 0], sizes = [1, 48], strides = [1, 1]} : vector<2x48xf32> to vector<1x48xf32>
    %127 = vector.broadcast %126 : vector<1x48xf32> to vector<6x48xf32>
    %128 = arith.addf %125, %127 : vector<6x48xf32>
    %cst_89 = arith.constant 0.000000e+00 : f32
    %129 = vector.broadcast %cst_89 : f32 to vector<6x48xf32>
    %130 = arith.maximumf %128, %129 : vector<6x48xf32>
    %131 = vector.extract_strided_slice %130 {offsets = [0, 0], sizes = [4, 48], strides = [1, 1]} : vector<6x48xf32> to vector<4x48xf32>
    %c0_90 = arith.constant 0 : index
    %c0_91 = arith.constant 0 : index
    %c0_92 = arith.constant 0 : index
    %132 = vector.load %arg12[%c0_90, %c0_91, %c0_92] : memref<3x48x32xf32, #tpu.memory_space<vmem>>, vector<1x48x32xf32>
    %133 = vector.shape_cast %132 : vector<1x48x32xf32> to vector<48x32xf32>
    %cst_93 = arith.constant dense<0.000000e+00> : vector<4x32xf32>
    %134 = tpu.matmul %131, %133, %cst_93 {dimension_numbers = #tpu.dot_dimension_numbers<[1], [0], [0], [1], [0, 0, 1, 1], [], []>} : vector<4x48xf32>, vector<48x32xf32>, vector<4x32xf32> -> vector<4x32xf32>
    %135 = vector.extract_strided_slice %130 {offsets = [1, 0], sizes = [4, 48], strides = [1, 1]} : vector<6x48xf32> to vector<4x48xf32>
    %c1_94 = arith.constant 1 : index
    %c0_95 = arith.constant 0 : index
    %c0_96 = arith.constant 0 : index
    %136 = vector.load %arg12[%c1_94, %c0_95, %c0_96] : memref<3x48x32xf32, #tpu.memory_space<vmem>>, vector<1x48x32xf32>
    %137 = vector.shape_cast %136 : vector<1x48x32xf32> to vector<48x32xf32>
    %cst_97 = arith.constant dense<0.000000e+00> : vector<4x32xf32>
    %138 = tpu.matmul %135, %137, %cst_97 {dimension_numbers = #tpu.dot_dimension_numbers<[1], [0], [0], [1], [0, 0, 1, 1], [], []>} : vector<4x48xf32>, vector<48x32xf32>, vector<4x32xf32> -> vector<4x32xf32>
    %139 = arith.addf %134, %138 : vector<4x32xf32>
    %140 = vector.extract_strided_slice %130 {offsets = [2, 0], sizes = [4, 48], strides = [1, 1]} : vector<6x48xf32> to vector<4x48xf32>
    %c2_98 = arith.constant 2 : index
    %c0_99 = arith.constant 0 : index
    %c0_100 = arith.constant 0 : index
    %141 = vector.load %arg12[%c2_98, %c0_99, %c0_100] : memref<3x48x32xf32, #tpu.memory_space<vmem>>, vector<1x48x32xf32>
    %142 = vector.shape_cast %141 : vector<1x48x32xf32> to vector<48x32xf32>
    %cst_101 = arith.constant dense<0.000000e+00> : vector<4x32xf32>
    %143 = tpu.matmul %140, %142, %cst_101 {dimension_numbers = #tpu.dot_dimension_numbers<[1], [0], [0], [1], [0, 0, 1, 1], [], []>} : vector<4x48xf32>, vector<48x32xf32>, vector<4x32xf32> -> vector<4x32xf32>
    %144 = arith.addf %139, %143 : vector<4x32xf32>
    %c0_102 = arith.constant 0 : index
    %c0_103 = arith.constant 0 : index
    %145 = vector.load %arg13[%c0_102, %c0_103] : memref<2x32xf32, #tpu.memory_space<vmem>>, vector<2x32xf32>
    %146 = vector.extract_strided_slice %145 {offsets = [0, 0], sizes = [1, 32], strides = [1, 1]} : vector<2x32xf32> to vector<1x32xf32>
    %147 = vector.broadcast %146 : vector<1x32xf32> to vector<4x32xf32>
    %148 = arith.mulf %144, %147 : vector<4x32xf32>
    %149 = vector.extract_strided_slice %145 {offsets = [1, 0], sizes = [1, 32], strides = [1, 1]} : vector<2x32xf32> to vector<1x32xf32>
    %150 = vector.broadcast %149 : vector<1x32xf32> to vector<4x32xf32>
    %151 = arith.addf %148, %150 : vector<4x32xf32>
    %cst_104 = arith.constant 0.000000e+00 : f32
    %152 = vector.broadcast %cst_104 : f32 to vector<4x32xf32>
    %153 = arith.maximumf %151, %152 : vector<4x32xf32>
    %154 = vector.extract_strided_slice %153 {offsets = [0, 0], sizes = [1, 32], strides = [1, 1]} : vector<4x32xf32> to vector<1x32xf32>
    %c0_105 = arith.constant 0 : index
    %c0_106 = arith.constant 0 : index
    %c0_107 = arith.constant 0 : index
    %155 = vector.load %arg14[%c0_105, %c0_106, %c0_107] : memref<4x32x8xf32, #tpu.memory_space<vmem>>, vector<1x32x8xf32>
    %156 = vector.shape_cast %155 : vector<1x32x8xf32> to vector<32x8xf32>
    %cst_108 = arith.constant dense<0.000000e+00> : vector<1x8xf32>
    %157 = tpu.matmul %154, %156, %cst_108 {dimension_numbers = #tpu.dot_dimension_numbers<[1], [0], [0], [1], [0, 0, 1, 1], [], []>} : vector<1x32xf32>, vector<32x8xf32>, vector<1x8xf32> -> vector<1x8xf32>
    %158 = vector.extract_strided_slice %153 {offsets = [1, 0], sizes = [1, 32], strides = [1, 1]} : vector<4x32xf32> to vector<1x32xf32>
    %c1_109 = arith.constant 1 : index
    %c0_110 = arith.constant 0 : index
    %c0_111 = arith.constant 0 : index
    %159 = vector.load %arg14[%c1_109, %c0_110, %c0_111] : memref<4x32x8xf32, #tpu.memory_space<vmem>>, vector<1x32x8xf32>
    %160 = vector.shape_cast %159 : vector<1x32x8xf32> to vector<32x8xf32>
    %cst_112 = arith.constant dense<0.000000e+00> : vector<1x8xf32>
    %161 = tpu.matmul %158, %160, %cst_112 {dimension_numbers = #tpu.dot_dimension_numbers<[1], [0], [0], [1], [0, 0, 1, 1], [], []>} : vector<1x32xf32>, vector<32x8xf32>, vector<1x8xf32> -> vector<1x8xf32>
    %162 = arith.addf %157, %161 : vector<1x8xf32>
    %163 = vector.extract_strided_slice %153 {offsets = [2, 0], sizes = [1, 32], strides = [1, 1]} : vector<4x32xf32> to vector<1x32xf32>
    %c2_113 = arith.constant 2 : index
    %c0_114 = arith.constant 0 : index
    %c0_115 = arith.constant 0 : index
    %164 = vector.load %arg14[%c2_113, %c0_114, %c0_115] : memref<4x32x8xf32, #tpu.memory_space<vmem>>, vector<1x32x8xf32>
    %165 = vector.shape_cast %164 : vector<1x32x8xf32> to vector<32x8xf32>
    %cst_116 = arith.constant dense<0.000000e+00> : vector<1x8xf32>
    %166 = tpu.matmul %163, %165, %cst_116 {dimension_numbers = #tpu.dot_dimension_numbers<[1], [0], [0], [1], [0, 0, 1, 1], [], []>} : vector<1x32xf32>, vector<32x8xf32>, vector<1x8xf32> -> vector<1x8xf32>
    %167 = arith.addf %162, %166 : vector<1x8xf32>
    %168 = vector.extract_strided_slice %153 {offsets = [3, 0], sizes = [1, 32], strides = [1, 1]} : vector<4x32xf32> to vector<1x32xf32>
    %c3 = arith.constant 3 : index
    %c0_117 = arith.constant 0 : index
    %c0_118 = arith.constant 0 : index
    %169 = vector.load %arg14[%c3, %c0_117, %c0_118] : memref<4x32x8xf32, #tpu.memory_space<vmem>>, vector<1x32x8xf32>
    %170 = vector.shape_cast %169 : vector<1x32x8xf32> to vector<32x8xf32>
    %cst_119 = arith.constant dense<0.000000e+00> : vector<1x8xf32>
    %171 = tpu.matmul %168, %170, %cst_119 {dimension_numbers = #tpu.dot_dimension_numbers<[1], [0], [0], [1], [0, 0, 1, 1], [], []>} : vector<1x32xf32>, vector<32x8xf32>, vector<1x8xf32> -> vector<1x8xf32>
    %172 = arith.addf %167, %171 : vector<1x8xf32>
    %c0_120 = arith.constant 0 : index
    %c0_121 = arith.constant 0 : index
    %173 = vector.load %arg15[%c0_120, %c0_121] : memref<2x8xf32, #tpu.memory_space<vmem>>, vector<2x8xf32>
    %174 = vector.extract_strided_slice %173 {offsets = [0, 0], sizes = [1, 8], strides = [1, 1]} : vector<2x8xf32> to vector<1x8xf32>
    %175 = arith.mulf %172, %174 : vector<1x8xf32>
    %176 = vector.extract_strided_slice %173 {offsets = [1, 0], sizes = [1, 8], strides = [1, 1]} : vector<2x8xf32> to vector<1x8xf32>
    %177 = arith.addf %175, %176 : vector<1x8xf32>
    %cst_122 = arith.constant 0.000000e+00 : f32
    %178 = vector.broadcast %cst_122 : f32 to vector<1x8xf32>
    %179 = arith.maximumf %177, %178 : vector<1x8xf32>
    %c0_123 = arith.constant 0 : index
    %c0_124 = arith.constant 0 : index
    %180 = vector.load %arg18[%c0_123, %c0_124] : memref<8x10xf32, #tpu.memory_space<vmem>>, vector<8x10xf32>
    %cst_125 = arith.constant dense<0.000000e+00> : vector<1x10xf32>
    %181 = tpu.matmul %179, %180, %cst_125 {dimension_numbers = #tpu.dot_dimension_numbers<[1], [0], [0], [1], [0, 0, 1, 1], [], []>} : vector<1x8xf32>, vector<8x10xf32>, vector<1x10xf32> -> vector<1x10xf32>
    %c0_126 = arith.constant 0 : index
    %c0_127 = arith.constant 0 : index
    %182 = vector.load %arg19[%c0_126, %c0_127] : memref<1x10xf32, #tpu.memory_space<vmem>>, vector<1x10xf32>
    %183 = arith.addf %181, %182 : vector<1x10xf32>
    %cst_128 = arith.constant dense<0xFF800000> : vector<1xf32>
    %184 = vector.multi_reduction <maximumf>, %183, %cst_128 [1] : vector<1x10xf32> to vector<1xf32>
    %185 = vector.shape_cast %184 : vector<1xf32> to vector<1x1xf32>
    %186 = vector.broadcast %185 : vector<1x1xf32> to vector<1x10xf32>
    %187 = arith.subf %183, %186 : vector<1x10xf32>
    %188 = math.exp %187 : vector<1x10xf32>
    %cst_129 = arith.constant dense<0.000000e+00> : vector<1xf32>
    %189 = vector.multi_reduction <add>, %188, %cst_129 [1] : vector<1x10xf32> to vector<1xf32>
    %190 = vector.shape_cast %189 : vector<1xf32> to vector<1x1xf32>
    %191 = math.log %190 : vector<1x1xf32>
    %192 = vector.broadcast %191 : vector<1x1xf32> to vector<1x10xf32>
    %193 = arith.subf %187, %192 : vector<1x10xf32>
    %c0_130 = arith.constant 0 : index
    %c0_131 = arith.constant 0 : index
    %c0_132 = arith.constant 0 : index
    %194 = vector.load %arg20[%c0_130, %c0_131, %c0_132] : memref<1x1x10xf32, #tpu.memory_space<vmem>>, vector<1x1x10xf32>
    %195 = vector.shape_cast %194 : vector<1x1x10xf32> to vector<1x10xf32>
    %196 = vector.shape_cast %193 : vector<1x10xf32> to vector<1x1x10xf32>
    tpu.vector_store %arg20[%c0_130, %c0_131, %c0_132], %196 {strides = array<i32>} : memref<1x1x10xf32, #tpu.memory_space<vmem>>, vector<1x1x10xf32>,
    return
  }
  func.func @transform_0(%arg0: i32) -> (i32, i32, i32) {
    %c0_i32 = arith.constant 0 : i32
    %c0_i32_0 = arith.constant 0 : i32
    %c0_i32_1 = arith.constant 0 : i32
    return %arg0, %c0_i32, %c0_i32_0 : i32, i32, i32
  }
  func.func @transform_1(%arg0: i32) -> (i32, i32, i32) {
    %c0_i32 = arith.constant 0 : i32
    %c0_i32_0 = arith.constant 0 : i32
    %c0_i32_1 = arith.constant 0 : i32
    %c0_i32_2 = arith.constant 0 : i32
    return %c0_i32, %c0_i32_0, %c0_i32_1 : i32, i32, i32
  }
  func.func @transform_2(%arg0: i32) -> (i32, i32) {
    %c0_i32 = arith.constant 0 : i32
    %c0_i32_0 = arith.constant 0 : i32
    %c0_i32_1 = arith.constant 0 : i32
    return %c0_i32, %c0_i32_0 : i32, i32
  }
  func.func @transform_3(%arg0: i32) -> (i32, i32, i32) {
    %c0_i32 = arith.constant 0 : i32
    %c0_i32_0 = arith.constant 0 : i32
    %c0_i32_1 = arith.constant 0 : i32
    %c0_i32_2 = arith.constant 0 : i32
    return %c0_i32, %c0_i32_0, %c0_i32_1 : i32, i32, i32
  }
  func.func @transform_4(%arg0: i32) -> (i32, i32) {
    %c0_i32 = arith.constant 0 : i32
    %c0_i32_0 = arith.constant 0 : i32
    %c0_i32_1 = arith.constant 0 : i32
    return %c0_i32, %c0_i32_0 : i32, i32
  }
  func.func @transform_5(%arg0: i32) -> (i32, i32, i32) {
    %c0_i32 = arith.constant 0 : i32
    %c0_i32_0 = arith.constant 0 : i32
    %c0_i32_1 = arith.constant 0 : i32
    %c0_i32_2 = arith.constant 0 : i32
    return %c0_i32, %c0_i32_0, %c0_i32_1 : i32, i32, i32
  }
  func.func @transform_6(%arg0: i32) -> (i32, i32) {
    %c0_i32 = arith.constant 0 : i32
    %c0_i32_0 = arith.constant 0 : i32
    %c0_i32_1 = arith.constant 0 : i32
    return %c0_i32, %c0_i32_0 : i32, i32
  }
  func.func @transform_7(%arg0: i32) -> (i32, i32, i32) {
    %c0_i32 = arith.constant 0 : i32
    %c0_i32_0 = arith.constant 0 : i32
    %c0_i32_1 = arith.constant 0 : i32
    %c0_i32_2 = arith.constant 0 : i32
    return %c0_i32, %c0_i32_0, %c0_i32_1 : i32, i32, i32
  }
  func.func @transform_8(%arg0: i32) -> (i32, i32) {
    %c0_i32 = arith.constant 0 : i32
    %c0_i32_0 = arith.constant 0 : i32
    %c0_i32_1 = arith.constant 0 : i32
    return %c0_i32, %c0_i32_0 : i32, i32
  }
  func.func @transform_9(%arg0: i32) -> (i32, i32, i32) {
    %c0_i32 = arith.constant 0 : i32
    %c0_i32_0 = arith.constant 0 : i32
    %c0_i32_1 = arith.constant 0 : i32
    %c0_i32_2 = arith.constant 0 : i32
    return %c0_i32, %c0_i32_0, %c0_i32_1 : i32, i32, i32
  }
  func.func @transform_10(%arg0: i32) -> (i32, i32) {
    %c0_i32 = arith.constant 0 : i32
    %c0_i32_0 = arith.constant 0 : i32
    %c0_i32_1 = arith.constant 0 : i32
    return %c0_i32, %c0_i32_0 : i32, i32
  }
  func.func @transform_11(%arg0: i32) -> (i32, i32, i32) {
    %c0_i32 = arith.constant 0 : i32
    %c0_i32_0 = arith.constant 0 : i32
    %c0_i32_1 = arith.constant 0 : i32
    %c0_i32_2 = arith.constant 0 : i32
    return %c0_i32, %c0_i32_0, %c0_i32_1 : i32, i32, i32
  }
  func.func @transform_12(%arg0: i32) -> (i32, i32) {
    %c0_i32 = arith.constant 0 : i32
    %c0_i32_0 = arith.constant 0 : i32
    %c0_i32_1 = arith.constant 0 : i32
    return %c0_i32, %c0_i32_0 : i32, i32
  }
  func.func @transform_13(%arg0: i32) -> (i32, i32, i32) {
    %c0_i32 = arith.constant 0 : i32
    %c0_i32_0 = arith.constant 0 : i32
    %c0_i32_1 = arith.constant 0 : i32
    %c0_i32_2 = arith.constant 0 : i32
    return %c0_i32, %c0_i32_0, %c0_i32_1 : i32, i32, i32
  }
  func.func @transform_14(%arg0: i32) -> (i32, i32) {
    %c0_i32 = arith.constant 0 : i32
    %c0_i32_0 = arith.constant 0 : i32
    %c0_i32_1 = arith.constant 0 : i32
    return %c0_i32, %c0_i32_0 : i32, i32
  }
  func.func @transform_15(%arg0: i32) -> (i32, i32, i32) {
    %c0_i32 = arith.constant 0 : i32
    %c0_i32_0 = arith.constant 0 : i32
    %c0_i32_1 = arith.constant 0 : i32
    %c0_i32_2 = arith.constant 0 : i32
    return %c0_i32, %c0_i32_0, %c0_i32_1 : i32, i32, i32
  }
  func.func @transform_16(%arg0: i32) -> (i32, i32, i32) {
    %c0_i32 = arith.constant 0 : i32
    %c0_i32_0 = arith.constant 0 : i32
    %c0_i32_1 = arith.constant 0 : i32
    %c0_i32_2 = arith.constant 0 : i32
    return %c0_i32, %c0_i32_0, %c0_i32_1 : i32, i32, i32
  }
  func.func @transform_17(%arg0: i32) -> (i32, i32) {
    %c0_i32 = arith.constant 0 : i32
    %c0_i32_0 = arith.constant 0 : i32
    %c0_i32_1 = arith.constant 0 : i32
    return %c0_i32, %c0_i32_0 : i32, i32
  }
  func.func @transform_18(%arg0: i32) -> (i32, i32) {
    %c0_i32 = arith.constant 0 : i32
    %c0_i32_0 = arith.constant 0 : i32
    %c0_i32_1 = arith.constant 0 : i32
    return %c0_i32, %c0_i32_0 : i32, i32
  }
  func.func @transform_19(%arg0: i32) -> (i32, i32, i32) {
    %c0_i32 = arith.constant 0 : i32
    %c0_i32_0 = arith.constant 0 : i32
    %c0_i32_1 = arith.constant 0 : i32
    return %arg0, %c0_i32, %c0_i32_0 : i32, i32, i32
  }
}

</mosaic_0001>

<llo_original>
// kernel: cnn_forward.1
$region0: #{cnn_forward.1}
  #allocation0 [shape = 'u32[]', space=smem, size = 0x4, offset = 0x4, fixed_abs, tag = 'smem constant byte address 0x4 - core index']
  #allocation1 [shape = 'u32[72,128]{1,0:T(1,128)}', space=vmem, size = 0x9000, scoped, tag = 'internal scratch']
  %s0 = inlined_call_operand.vmem [shape: f32[2,28,84], index: 0, kind: input, shape index: {}]
  %s1 = inlined_call_operand.vmem [shape: f32[3,84,208], index: 1, kind: input, shape index: {}]
  %s2 = inlined_call_operand.vmem [shape: f32[2,208], index: 2, kind: input, shape index: {}]
  %s3 = inlined_call_operand.vmem [shape: f32[3,208,192], index: 3, kind: input, shape index: {}]
  %s4 = inlined_call_operand.vmem [shape: f32[2,192], index: 4, kind: input, shape index: {}]
  %s5 = inlined_call_operand.vmem [shape: f32[3,96,80], index: 5, kind: input, shape index: {}]
  %s6 = inlined_call_operand.vmem [shape: f32[2,80], index: 6, kind: input, shape index: {}]
  %s7 = inlined_call_operand.vmem [shape: f32[3,80,64], index: 7, kind: input, shape index: {}]
  %s8 = inlined_call_operand.vmem [shape: f32[2,64], index: 8, kind: input, shape index: {}]
  %s9 = inlined_call_operand.vmem [shape: f32[3,64,48], index: 9, kind: input, shape index: {}]
  %s10 = inlined_call_operand.vmem [shape: f32[2,48], index: 10, kind: input, shape index: {}]
  %s11 = inlined_call_operand.vmem [shape: f32[3,48,32], index: 11, kind: input, shape index: {}]
  %s12 = inlined_call_operand.vmem [shape: f32[2,32], index: 12, kind: input, shape index: {}]
  %s13 = inlined_call_operand.vmem [shape: f32[4,32,8], index: 13, kind: input, shape index: {}]
  %s14 = inlined_call_operand.vmem [shape: f32[2,8], index: 14, kind: input, shape index: {}]
  %s15 = inlined_call_operand.vmem [shape: f32[2,12,24], index: 15, kind: input, shape index: {}]
  %s16 = inlined_call_operand.vmem [shape: f32[2,192,96], index: 16, kind: input, shape index: {}]
  %s17 = inlined_call_operand.vmem [shape: f32[8,10], index: 17, kind: input, shape index: {}]
  %s18 = inlined_call_operand.vmem [shape: f32[1,10], index: 18, kind: input, shape index: {}]
  %s19 = inlined_call_operand.hbm [shape: f32[2,1,10], index: 19, kind: output, shape index: {}]
  %s20 = sld [smem:[#allocation0]]
  $region109: #{cnn_forward.1} parent=0
    _
  %s22 = ssub.s32 1, %s20
  %s23 = scalar_select 0, %s22, %s20
  $region1: #{cnn_forward.1} parent=0
    #allocation2 [shape = 'u8[1024]{0}', space=vmem, size = 0x400, scoped, tag = 'output window, operand 0']
    #allocation3 [shape = 's32[2]{0}', space=sflag, size = 0x8, scoped, tag = 'scoped memory for cnn_forward.1']
    %24 = vsyncpa [#allocation3], 0
    %s25 = scalar_lea.sflag [#allocation3], 1
    %26 = vsyncpa %s25, 0
    loop: start=0, step=1, limit=4
    $region2: #{cnn_forward.1} parent=1 // loop_pre_header
      _
    $region3: #{cnn_forward.1} parent=1 // loop_header
      %s28 = sphi 0, %s32
      %p29 = scmp.ge.s32.totalorder %s28, 4
      %s38 = sphi 0, %s40
      %s41 = sphi 0, %s38
      %s42 = sphi 0, %s41
      %s58 = sphi 0, %s42
      %s62 = sphi 0, %s62
      %s64 = sphi 0, %s62
      %s65 = sphi 0, %s64
      %s79 = sphi 0, %s65
      %s83 = sphi 0, %s83
      %s85 = sphi 0, %s83
      %s86 = sphi 0, %s85
      %s100 = sphi 0, %s86
      %s104 = sphi 0, %s104
      %s106 = sphi 0, %s104
      %s107 = sphi 0, %s106
      %s121 = sphi 0, %s107
      %s125 = sphi 0, %s125
      %s127 = sphi 0, %s125
      %s128 = sphi 0, %s127
      %s142 = sphi 0, %s128
      %s146 = sphi 0, %s146
      %s148 = sphi 0, %s146
      %s149 = sphi 0, %s148
      %s163 = sphi 0, %s149
      %s167 = sphi 0, %s167
      %s169 = sphi 0, %s167
      %s170 = sphi 0, %s169
      %s184 = sphi 0, %s170
      %s188 = sphi 0, %s188
      %s190 = sphi 0, %s188
      %s191 = sphi 0, %s190
      %s205 = sphi 0, %s191
      %s209 = sphi 0, %s209
      %s211 = sphi 0, %s209
      %s212 = sphi 0, %s211
      %s226 = sphi 0, %s212
      %s230 = sphi 0, %s230
      %s232 = sphi 0, %s230
      %s233 = sphi 0, %s232
      %s247 = sphi 0, %s233
      %s251 = sphi 0, %s251
      %s253 = sphi 0, %s251
      %s254 = sphi 0, %s253
      %s268 = sphi 0, %s254
      %s272 = sphi 0, %s272
      %s274 = sphi 0, %s272
      %s275 = sphi 0, %s274
      %s289 = sphi 0, %s275
      %s293 = sphi 0, %s293
      %s295 = sphi 0, %s293
      %s296 = sphi 0, %s295
      %s310 = sphi 0, %s296
      %s314 = sphi 0, %s314
      %s316 = sphi 0, %s314
      %s317 = sphi 0, %s316
      %s331 = sphi 0, %s317
      %s335 = sphi 0, %s335
      %s337 = sphi 0, %s335
      %s338 = sphi 0, %s337
      %s352 = sphi 0, %s338
      %s356 = sphi 0, %s356
      %s358 = sphi 0, %s356
      %s359 = sphi 0, %s358
      %s373 = sphi 0, %s359
      %s377 = sphi 0, %s377
      %s379 = sphi 0, %s377
      %s380 = sphi 0, %s379
      %s394 = sphi 0, %s380
      %s398 = sphi 0, %s398
      %s400 = sphi 0, %s398
      %s401 = sphi 0, %s400
      %s415 = sphi 0, %s401
      %s419 = sphi 0, %s419
      %s421 = sphi 0, %s419
      %s422 = sphi 0, %s421
      %s436 = sphi 0, %s422
      %s442 = sphi 0, %s444
      %s445 = sphi 0, %s442
      %s446 = sphi 0, %s445
      %s462 = sphi 0, %s446
    $region4: #{cnn_forward.1} parent=1 // loop_header_branch
      %31 = sbr.rel (%p29) target = $region8
    $region5: #{cnn_forward.1} parent=1 // loop_body
      %s33 = ssub.s32 %s28, 1
      %s34 = ssub.s32 %s28, 2
      %s35 = sadd.s32 %s28, 1
      %s36 = ssub.s32 %s28, %s35
      %p37 = scmp.eq.s32.totalorder %s36, 0
      %s39 = sadd.s32 %s38, 1
      %s40 = scalar_select %p37, %s38, %s39
      %p43 = pneg %p37
      %p44 = scmp.eq.s32.totalorder %s28, 1
      %p45 = por %p43, %p44
      %p46 = scmp.ne.s32.totalorder %s38, %s41
      %p47 = scmp.eq.s32.totalorder %s28, 0
      %p48 = por %p46, %p47
      %p49 = scmp.ne.s32.totalorder %s38, %s41
      %p50 = scmp.eq.s32.totalorder %s33, 1
      %p51 = por %p49, %p50
      %p52 = scmp.ne.s32.totalorder %s41, %s42
      %p53 = scmp.eq.s32.totalorder %s33, 0
      %p54 = por %p52, %p53
      %p55 = scmp.ne.s32.totalorder %s41, %s42
      %p56 = scmp.eq.s32.totalorder %s34, 1
      %p57 = por %p55, %p56
      %p59 = scmp.ne.s32.totalorder %s42, %s58
      %p60 = scmp.eq.s32.totalorder %s34, 0
      %p61 = por %p59, %p60
      %s63 = sadd.s32 %s62, 1
      %p66 = scmp.eq.s32.totalorder %s28, 1
      %p67 = scmp.ne.s32.totalorder %s62, %s64
      %p68 = scmp.eq.s32.totalorder %s28, 0
      %p69 = por %p67, %p68
      %p70 = scmp.ne.s32.totalorder %s62, %s64
      %p71 = scmp.eq.s32.totalorder %s33, 1
      %p72 = por %p70, %p71
      %p73 = scmp.ne.s32.totalorder %s64, %s65
      %p74 = scmp.eq.s32.totalorder %s33, 0
      %p75 = por %p73, %p74
      %p76 = scmp.ne.s32.totalorder %s64, %s65
      %p77 = scmp.eq.s32.totalorder %s34, 1
      %p78 = por %p76, %p77
      %p80 = scmp.ne.s32.totalorder %s65, %s79
      %p81 = scmp.eq.s32.totalorder %s34, 0
      %p82 = por %p80, %p81
      %s84 = sadd.s32 %s83, 1
      %p87 = scmp.eq.s32.totalorder %s28, 1
      %p88 = scmp.ne.s32.totalorder %s83, %s85
      %p89 = scmp.eq.s32.totalorder %s28, 0
      %p90 = por %p88, %p89
      %p91 = scmp.ne.s32.totalorder %s83, %s85
      %p92 = scmp.eq.s32.totalorder %s33, 1
      %p93 = por %p91, %p92
      %p94 = scmp.ne.s32.totalorder %s85, %s86
      %p95 = scmp.eq.s32.totalorder %s33, 0
      %p96 = por %p94, %p95
      %p97 = scmp.ne.s32.totalorder %s85, %s86
      %p98 = scmp.eq.s32.totalorder %s34, 1
      %p99 = por %p97, %p98
      %p101 = scmp.ne.s32.totalorder %s86, %s100
      %p102 = scmp.eq.s32.totalorder %s34, 0
      %p103 = por %p101, %p102
      %s105 = sadd.s32 %s104, 1
      %p108 = scmp.eq.s32.totalorder %s28, 1
      %p109 = scmp.ne.s32.totalorder %s104, %s106
      %p110 = scmp.eq.s32.totalorder %s28, 0
      %p111 = por %p109, %p110
      %p112 = scmp.ne.s32.totalorder %s104, %s106
      %p113 = scmp.eq.s32.totalorder %s33, 1
      %p114 = por %p112, %p113
      %p115 = scmp.ne.s32.totalorder %s106, %s107
      %p116 = scmp.eq.s32.totalorder %s33, 0
      %p117 = por %p115, %p116
      %p118 = scmp.ne.s32.totalorder %s106, %s107
      %p119 = scmp.eq.s32.totalorder %s34, 1
      %p120 = por %p118, %p119
      %p122 = scmp.ne.s32.totalorder %s107, %s121
      %p123 = scmp.eq.s32.totalorder %s34, 0
      %p124 = por %p122, %p123
      %s126 = sadd.s32 %s125, 1
      %p129 = scmp.eq.s32.totalorder %s28, 1
      %p130 = scmp.ne.s32.totalorder %s125, %s127
      %p131 = scmp.eq.s32.totalorder %s28, 0
      %p132 = por %p130, %p131
      %p133 = scmp.ne.s32.totalorder %s125, %s127
      %p134 = scmp.eq.s32.totalorder %s33, 1
      %p135 = por %p133, %p134
      %p136 = scmp.ne.s32.totalorder %s127, %s128
      %p137 = scmp.eq.s32.totalorder %s33, 0
      %p138 = por %p136, %p137
      %p139 = scmp.ne.s32.totalorder %s127, %s128
      %p140 = scmp.eq.s32.totalorder %s34, 1
      %p141 = por %p139, %p140
      %p143 = scmp.ne.s32.totalorder %s128, %s142
      %p144 = scmp.eq.s32.totalorder %s34, 0
      %p145 = por %p143, %p144
      %s147 = sadd.s32 %s146, 1
      %p150 = scmp.eq.s32.totalorder %s28, 1
      %p151 = scmp.ne.s32.totalorder %s146, %s148
      %p152 = scmp.eq.s32.totalorder %s28, 0
      %p153 = por %p151, %p152
      %p154 = scmp.ne.s32.totalorder %s146, %s148
      %p155 = scmp.eq.s32.totalorder %s33, 1
      %p156 = por %p154, %p155
      %p157 = scmp.ne.s32.totalorder %s148, %s149
      %p158 = scmp.eq.s32.totalorder %s33, 0
      %p159 = por %p157, %p158
      %p160 = scmp.ne.s32.totalorder %s148, %s149
      %p161 = scmp.eq.s32.totalorder %s34, 1
      %p162 = por %p160, %p161
      %p164 = scmp.ne.s32.totalorder %s149, %s163
      %p165 = scmp.eq.s32.totalorder %s34, 0
      %p166 = por %p164, %p165
      %s168 = sadd.s32 %s167, 1
      %p171 = scmp.eq.s32.totalorder %s28, 1
      %p172 = scmp.ne.s32.totalorder %s167, %s169
      %p173 = scmp.eq.s32.totalorder %s28, 0
      %p174 = por %p172, %p173
      %p175 = scmp.ne.s32.totalorder %s167, %s169
      %p176 = scmp.eq.s32.totalorder %s33, 1
      %p177 = por %p175, %p176
      %p178 = scmp.ne.s32.totalorder %s169, %s170
      %p179 = scmp.eq.s32.totalorder %s33, 0
      %p180 = por %p178, %p179
      %p181 = scmp.ne.s32.totalorder %s169, %s170
      %p182 = scmp.eq.s32.totalorder %s34, 1
      %p183 = por %p181, %p182
      %p185 = scmp.ne.s32.totalorder %s170, %s184
      %p186 = scmp.eq.s32.totalorder %s34, 0
      %p187 = por %p185, %p186
      %s189 = sadd.s32 %s188, 1
      %p192 = scmp.eq.s32.totalorder %s28, 1
      %p193 = scmp.ne.s32.totalorder %s188, %s190
      %p194 = scmp.eq.s32.totalorder %s28, 0
      %p195 = por %p193, %p194
      %p196 = scmp.ne.s32.totalorder %s188, %s190
      %p197 = scmp.eq.s32.totalorder %s33, 1
      %p198 = por %p196, %p197
      %p199 = scmp.ne.s32.totalorder %s190, %s191
      %p200 = scmp.eq.s32.totalorder %s33, 0
      %p201 = por %p199, %p200
      %p202 = scmp.ne.s32.totalorder %s190, %s191
      %p203 = scmp.eq.s32.totalorder %s34, 1
      %p204 = por %p202, %p203
      %p206 = scmp.ne.s32.totalorder %s191, %s205
      %p207 = scmp.eq.s32.totalorder %s34, 0
      %p208 = por %p206, %p207
      %s210 = sadd.s32 %s209, 1
      %p213 = scmp.eq.s32.totalorder %s28, 1
      %p214 = scmp.ne.s32.totalorder %s209, %s211
      %p215 = scmp.eq.s32.totalorder %s28, 0
      %p216 = por %p214, %p215
      %p217 = scmp.ne.s32.totalorder %s209, %s211
      %p218 = scmp.eq.s32.totalorder %s33, 1
      %p219 = por %p217, %p218
      %p220 = scmp.ne.s32.totalorder %s211, %s212
      %p221 = scmp.eq.s32.totalorder %s33, 0
      %p222 = por %p220, %p221
      %p223 = scmp.ne.s32.totalorder %s211, %s212
      %p224 = scmp.eq.s32.totalorder %s34, 1
      %p225 = por %p223, %p224
      %p227 = scmp.ne.s32.totalorder %s212, %s226
      %p228 = scmp.eq.s32.totalorder %s34, 0
      %p229 = por %p227, %p228
      %s231 = sadd.s32 %s230, 1
      %p234 = scmp.eq.s32.totalorder %s28, 1
      %p235 = scmp.ne.s32.totalorder %s230, %s232
      %p236 = scmp.eq.s32.totalorder %s28, 0
      %p237 = por %p235, %p236
      %p238 = scmp.ne.s32.totalorder %s230, %s232
      %p239 = scmp.eq.s32.totalorder %s33, 1
      %p240 = por %p238, %p239
      %p241 = scmp.ne.s32.totalorder %s232, %s233
      %p242 = scmp.eq.s32.totalorder %s33, 0
      %p243 = por %p241, %p242
      %p244 = scmp.ne.s32.totalorder %s232, %s233
      %p245 = scmp.eq.s32.totalorder %s34, 1
      %p246 = por %p244, %p245
      %p248 = scmp.ne.s32.totalorder %s233, %s247
      %p249 = scmp.eq.s32.totalorder %s34, 0
      %p250 = por %p248, %p249
      %s252 = sadd.s32 %s251, 1
      %p255 = scmp.eq.s32.totalorder %s28, 1
      %p256 = scmp.ne.s32.totalorder %s251, %s253
      %p257 = scmp.eq.s32.totalorder %s28, 0
      %p258 = por %p256, %p257
      %p259 = scmp.ne.s32.totalorder %s251, %s253
      %p260 = scmp.eq.s32.totalorder %s33, 1
      %p261 = por %p259, %p260
      %p262 = scmp.ne.s32.totalorder %s253, %s254
      %p263 = scmp.eq.s32.totalorder %s33, 0
      %p264 = por %p262, %p263
      %p265 = scmp.ne.s32.totalorder %s253, %s254
      %p266 = scmp.eq.s32.totalorder %s34, 1
      %p267 = por %p265, %p266
      %p269 = scmp.ne.s32.totalorder %s254, %s268
      %p270 = scmp.eq.s32.totalorder %s34, 0
      %p271 = por %p269, %p270
      %s273 = sadd.s32 %s272, 1
      %p276 = scmp.eq.s32.totalorder %s28, 1
      %p277 = scmp.ne.s32.totalorder %s272, %s274
      %p278 = scmp.eq.s32.totalorder %s28, 0
      %p279 = por %p277, %p278
      %p280 = scmp.ne.s32.totalorder %s272, %s274
      %p281 = scmp.eq.s32.totalorder %s33, 1
      %p282 = por %p280, %p281
      %p283 = scmp.ne.s32.totalorder %s274, %s275
      %p284 = scmp.eq.s32.totalorder %s33, 0
      %p285 = por %p283, %p284
      %p286 = scmp.ne.s32.totalorder %s274, %s275
      %p287 = scmp.eq.s32.totalorder %s34, 1
      %p288 = por %p286, %p287
      %p290 = scmp.ne.s32.totalorder %s275, %s289
      %p291 = scmp.eq.s32.totalorder %s34, 0
      %p292 = por %p290, %p291
      %s294 = sadd.s32 %s293, 1
      %p297 = scmp.eq.s32.totalorder %s28, 1
      %p298 = scmp.ne.s32.totalorder %s293, %s295
      %p299 = scmp.eq.s32.totalorder %s28, 0
      %p300 = por %p298, %p299
      %p301 = scmp.ne.s32.totalorder %s293, %s295
      %p302 = scmp.eq.s32.totalorder %s33, 1
      %p303 = por %p301, %p302
      %p304 = scmp.ne.s32.totalorder %s295, %s296
      %p305 = scmp.eq.s32.totalorder %s33, 0
      %p306 = por %p304, %p305
      %p307 = scmp.ne.s32.totalorder %s295, %s296
      %p308 = scmp.eq.s32.totalorder %s34, 1
      %p309 = por %p307, %p308
      %p311 = scmp.ne.s32.totalorder %s296, %s310
      %p312 = scmp.eq.s32.totalorder %s34, 0
      %p313 = por %p311, %p312
      %s315 = sadd.s32 %s314, 1
      %p318 = scmp.eq.s32.totalorder %s28, 1
      %p319 = scmp.ne.s32.totalorder %s314, %s316
      %p320 = scmp.eq.s32.totalorder %s28, 0
      %p321 = por %p319, %p320
      %p322 = scmp.ne.s32.totalorder %s314, %s316
      %p323 = scmp.eq.s32.totalorder %s33, 1
      %p324 = por %p322, %p323
      %p325 = scmp.ne.s32.totalorder %s316, %s317
      %p326 = scmp.eq.s32.totalorder %s33, 0
      %p327 = por %p325, %p326
      %p328 = scmp.ne.s32.totalorder %s316, %s317
      %p329 = scmp.eq.s32.totalorder %s34, 1
      %p330 = por %p328, %p329
      %p332 = scmp.ne.s32.totalorder %s317, %s331
      %p333 = scmp.eq.s32.totalorder %s34, 0
      %p334 = por %p332, %p333
      %s336 = sadd.s32 %s335, 1
      %p339 = scmp.eq.s32.totalorder %s28, 1
      %p340 = scmp.ne.s32.totalorder %s335, %s337
      %p341 = scmp.eq.s32.totalorder %s28, 0
      %p342 = por %p340, %p341
      %p343 = scmp.ne.s32.totalorder %s335, %s337
      %p344 = scmp.eq.s32.totalorder %s33, 1
      %p345 = por %p343, %p344
      %p346 = scmp.ne.s32.totalorder %s337, %s338
      %p347 = scmp.eq.s32.totalorder %s33, 0
      %p348 = por %p346, %p347
      %p349 = scmp.ne.s32.totalorder %s337, %s338
      %p350 = scmp.eq.s32.totalorder %s34, 1
      %p351 = por %p349, %p350
      %p353 = scmp.ne.s32.totalorder %s338, %s352
      %p354 = scmp.eq.s32.totalorder %s34, 0
      %p355 = por %p353, %p354
      %s357 = sadd.s32 %s356, 1
      %p360 = scmp.eq.s32.totalorder %s28, 1
      %p361 = scmp.ne.s32.totalorder %s356, %s358
      %p362 = scmp.eq.s32.totalorder %s28, 0
      %p363 = por %p361, %p362
      %p364 = scmp.ne.s32.totalorder %s356, %s358
      %p365 = scmp.eq.s32.totalorder %s33, 1
      %p366 = por %p364, %p365
      %p367 = scmp.ne.s32.totalorder %s358, %s359
      %p368 = scmp.eq.s32.totalorder %s33, 0
      %p369 = por %p367, %p368
      %p370 = scmp.ne.s32.totalorder %s358, %s359
      %p371 = scmp.eq.s32.totalorder %s34, 1
      %p372 = por %p370, %p371
      %p374 = scmp.ne.s32.totalorder %s359, %s373
      %p375 = scmp.eq.s32.totalorder %s34, 0
      %p376 = por %p374, %p375
      %s378 = sadd.s32 %s377, 1
      %p381 = scmp.eq.s32.totalorder %s28, 1
      %p382 = scmp.ne.s32.totalorder %s377, %s379
      %p383 = scmp.eq.s32.totalorder %s28, 0
      %p384 = por %p382, %p383
      %p385 = scmp.ne.s32.totalorder %s377, %s379
      %p386 = scmp.eq.s32.totalorder %s33, 1
      %p387 = por %p385, %p386
      %p388 = scmp.ne.s32.totalorder %s379, %s380
      %p389 = scmp.eq.s32.totalorder %s33, 0
      %p390 = por %p388, %p389
      %p391 = scmp.ne.s32.totalorder %s379, %s380
      %p392 = scmp.eq.s32.totalorder %s34, 1
      %p393 = por %p391, %p392
      %p395 = scmp.ne.s32.totalorder %s380, %s394
      %p396 = scmp.eq.s32.totalorder %s34, 0
      %p397 = por %p395, %p396
      %s399 = sadd.s32 %s398, 1
      %p402 = scmp.eq.s32.totalorder %s28, 1
      %p403 = scmp.ne.s32.totalorder %s398, %s400
      %p404 = scmp.eq.s32.totalorder %s28, 0
      %p405 = por %p403, %p404
      %p406 = scmp.ne.s32.totalorder %s398, %s400
      %p407 = scmp.eq.s32.totalorder %s33, 1
      %p408 = por %p406, %p407
      %p409 = scmp.ne.s32.totalorder %s400, %s401
      %p410 = scmp.eq.s32.totalorder %s33, 0
      %p411 = por %p409, %p410
      %p412 = scmp.ne.s32.totalorder %s400, %s401
      %p413 = scmp.eq.s32.totalorder %s34, 1
      %p414 = por %p412, %p413
      %p416 = scmp.ne.s32.totalorder %s401, %s415
      %p417 = scmp.eq.s32.totalorder %s34, 0
      %p418 = por %p416, %p417
      %s420 = sadd.s32 %s419, 1
      %p423 = scmp.eq.s32.totalorder %s28, 1
      %p424 = scmp.ne.s32.totalorder %s419, %s421
      %p425 = scmp.eq.s32.totalorder %s28, 0
      %p426 = por %p424, %p425
      %p427 = scmp.ne.s32.totalorder %s419, %s421
      %p428 = scmp.eq.s32.totalorder %s33, 1
      %p429 = por %p427, %p428
      %p430 = scmp.ne.s32.totalorder %s421, %s422
      %p431 = scmp.eq.s32.totalorder %s33, 0
      %p432 = por %p430, %p431
      %p433 = scmp.ne.s32.totalorder %s421, %s422
      %p434 = scmp.eq.s32.totalorder %s34, 1
      %p435 = por %p433, %p434
      %p437 = scmp.ne.s32.totalorder %s422, %s436
      %p438 = scmp.eq.s32.totalorder %s34, 0
      %p439 = por %p437, %p438
      %s440 = ssub.s32 %s28, %s35
      %p441 = scmp.eq.s32.totalorder %s440, 0
      %s443 = sadd.s32 %s442, 1
      %s444 = scalar_select %p441, %s442, %s443
      %p447 = pneg %p441
      %p448 = scmp.eq.s32.totalorder %s28, 1
      %p449 = por %p447, %p448
      %p450 = scmp.ne.s32.totalorder %s442, %s445
      %p451 = scmp.eq.s32.totalorder %s28, 0
      %p452 = por %p450, %p451
      %p453 = scmp.ne.s32.totalorder %s442, %s445
      %p454 = scmp.eq.s32.totalorder %s33, 1
      %p455 = por %p453, %p454
      %p456 = scmp.ne.s32.totalorder %s445, %s446
      %p457 = scmp.eq.s32.totalorder %s33, 0
      %p458 = por %p456, %p457
      %p459 = scmp.ne.s32.totalorder %s445, %s446
      %p460 = scmp.eq.s32.totalorder %s34, 1
      %p461 = por %p459, %p460
      %p463 = scmp.ne.s32.totalorder %s446, %s462
      %p464 = scmp.eq.s32.totalorder %s34, 0
      %p465 = por %p463, %p464
      %p466 = scmp.le.s32.totalorder 1, %s28
      %p467 = scmp.lt.s32.totalorder %s28, 3
      %p468 = pnand %p466, %p467
      %p469 = pneg %p468
      // Predicated region
      $region9: #{cnn_forward.1} parent=5 // pred_check
        _
      $region10: #{cnn_forward.1} parent=5 // pred_check_branch
        %471 = sbr.rel (%p468) target = $region12
      $region11: #{cnn_forward.1} parent=5 // pred_region
        %s472 = ssub.s32 %s28, 1
        // Predicated region
        $region13: #{cnn_forward.1} parent=11 // pred_check
          %p473 = pneg %p75
        $region14: #{cnn_forward.1} parent=11 // pred_check_branch
          %475 = sbr.rel (%p473) target = $region16
        $region15: #{cnn_forward.1} parent=11 // pred_region
          _
        $region16: #{cnn_forward.1} parent=11 // pred_fallthru
          _
        // Predicated region
        $region17: #{cnn_forward.1} parent=11 // pred_check
          %p476 = pneg %p96
        $region18: #{cnn_forward.1} parent=11 // pred_check_branch
          %478 = sbr.rel (%p476) target = $region20
        $region19: #{cnn_forward.1} parent=11 // pred_region
          _
        $region20: #{cnn_forward.1} parent=11 // pred_fallthru
          _
        // Predicated region
        $region21: #{cnn_forward.1} parent=11 // pred_check
          %p479 = pneg %p117
        $region22: #{cnn_forward.1} parent=11 // pred_check_branch
          %481 = sbr.rel (%p479) target = $region24
        $region23: #{cnn_forward.1} parent=11 // pred_region
          _
        $region24: #{cnn_forward.1} parent=11 // pred_fallthru
          _
        // Predicated region
        $region25: #{cnn_forward.1} parent=11 // pred_check
          %p482 = pneg %p138
        $region26: #{cnn_forward.1} parent=11 // pred_check_branch
          %484 = sbr.rel (%p482) target = $region28
        $region27: #{cnn_forward.1} parent=11 // pred_region
          _
        $region28: #{cnn_forward.1} parent=11 // pred_fallthru
          _
        // Predicated region
        $region29: #{cnn_forward.1} parent=11 // pred_check
          %p485 = pneg %p159
        $region30: #{cnn_forward.1} parent=11 // pred_check_branch
          %487 = sbr.rel (%p485) target = $region32
        $region31: #{cnn_forward.1} parent=11 // pred_region
          _
        $region32: #{cnn_forward.1} parent=11 // pred_fallthru
          _
        // Predicated region
        $region33: #{cnn_forward.1} parent=11 // pred_check
          %p488 = pneg %p180
        $region34: #{cnn_forward.1} parent=11 // pred_check_branch
          %490 = sbr.rel (%p488) target = $region36
        $region35: #{cnn_forward.1} parent=11 // pred_region
          _
        $region36: #{cnn_forward.1} parent=11 // pred_fallthru
          _
        // Predicated region
        $region37: #{cnn_forward.1} parent=11 // pred_check
          %p491 = pneg %p201
        $region38: #{cnn_forward.1} parent=11 // pred_check_branch
          %493 = sbr.rel (%p491) target = $region40
        $region39: #{cnn_forward.1} parent=11 // pred_region
          _
        $region40: #{cnn_forward.1} parent=11 // pred_fallthru
          _
        // Predicated region
        $region41: #{cnn_forward.1} parent=11 // pred_check
          %p494 = pneg %p222
        $region42: #{cnn_forward.1} parent=11 // pred_check_branch
          %496 = sbr.rel (%p494) target = $region44
        $region43: #{cnn_forward.1} parent=11 // pred_region
          _
        $region44: #{cnn_forward.1} parent=11 // pred_fallthru
          _
        // Predicated region
        $region45: #{cnn_forward.1} parent=11 // pred_check
          %p497 = pneg %p243
        $region46: #{cnn_forward.1} parent=11 // pred_check_branch
          %499 = sbr.rel (%p497) target = $region48
        $region47: #{cnn_forward.1} parent=11 // pred_region
          _
        $region48: #{cnn_forward.1} parent=11 // pred_fallthru
          _
        // Predicated region
        $region49: #{cnn_forward.1} parent=11 // pred_check
          %p500 = pneg %p264
        $region50: #{cnn_forward.1} parent=11 // pred_check_branch
          %502 = sbr.rel (%p500) target = $region52
        $region51: #{cnn_forward.1} parent=11 // pred_region
          _
        $region52: #{cnn_forward.1} parent=11 // pred_fallthru
          _
        // Predicated region
        $region53: #{cnn_forward.1} parent=11 // pred_check
          %p503 = pneg %p285
        $region54: #{cnn_forward.1} parent=11 // pred_check_branch
          %505 = sbr.rel (%p503) target = $region56
        $region55: #{cnn_forward.1} parent=11 // pred_region
          _
        $region56: #{cnn_forward.1} parent=11 // pred_fallthru
          _
        // Predicated region
        $region57: #{cnn_forward.1} parent=11 // pred_check
          %p506 = pneg %p306
        $region58: #{cnn_forward.1} parent=11 // pred_check_branch
          %508 = sbr.rel (%p506) target = $region60
        $region59: #{cnn_forward.1} parent=11 // pred_region
          _
        $region60: #{cnn_forward.1} parent=11 // pred_fallthru
          _
        // Predicated region
        $region61: #{cnn_forward.1} parent=11 // pred_check
          %p509 = pneg %p327
        $region62: #{cnn_forward.1} parent=11 // pred_check_branch
          %511 = sbr.rel (%p509) target = $region64
        $region63: #{cnn_forward.1} parent=11 // pred_region
          _
        $region64: #{cnn_forward.1} parent=11 // pred_fallthru
          _
        // Predicated region
        $region65: #{cnn_forward.1} parent=11 // pred_check
          %p512 = pneg %p348
        $region66: #{cnn_forward.1} parent=11 // pred_check_branch
          %514 = sbr.rel (%p512) target = $region68
        $region67: #{cnn_forward.1} parent=11 // pred_region
          _
        $region68: #{cnn_forward.1} parent=11 // pred_fallthru
          _
        // Predicated region
        $region69: #{cnn_forward.1} parent=11 // pred_check
          %p515 = pneg %p369
        $region70: #{cnn_forward.1} parent=11 // pred_check_branch
          %517 = sbr.rel (%p515) target = $region72
        $region71: #{cnn_forward.1} parent=11 // pred_region
          _
        $region72: #{cnn_forward.1} parent=11 // pred_fallthru
          _
        // Predicated region
        $region73: #{cnn_forward.1} parent=11 // pred_check
          %p518 = pneg %p390
        $region74: #{cnn_forward.1} parent=11 // pred_check_branch
          %520 = sbr.rel (%p518) target = $region76
        $region75: #{cnn_forward.1} parent=11 // pred_region
          _
        $region76: #{cnn_forward.1} parent=11 // pred_fallthru
          _
        // Predicated region
        $region77: #{cnn_forward.1} parent=11 // pred_check
          %p521 = pneg %p411
        $region78: #{cnn_forward.1} parent=11 // pred_check_branch
          %523 = sbr.rel (%p521) target = $region80
        $region79: #{cnn_forward.1} parent=11 // pred_region
          _
        $region80: #{cnn_forward.1} parent=11 // pred_fallthru
          _
        // Predicated region
        $region81: #{cnn_forward.1} parent=11 // pred_check
          %p524 = pneg %p432
        $region82: #{cnn_forward.1} parent=11 // pred_check_branch
          %526 = sbr.rel (%p524) target = $region84
        $region83: #{cnn_forward.1} parent=11 // pred_region
          _
        $region84: #{cnn_forward.1} parent=11 // pred_fallthru
          _
      $region12: #{cnn_forward.1} parent=5 // pred_fallthru
        _
      %p527 = scmp.lt.s32.totalorder %s28, 2
      // Predicated region
      $region85: #{cnn_forward.1} parent=5 // pred_check
        %p528 = pneg %p527
      $region86: #{cnn_forward.1} parent=5 // pred_check_branch
        %530 = sbr.rel (%p528) target = $region88
      $region87: #{cnn_forward.1} parent=5 // pred_region
        // Predicated region
        $region89: #{cnn_forward.1} parent=87 // pred_check
          %p531 = pneg %p48
        $region90: #{cnn_forward.1} parent=87 // pred_check_branch
          %533 = sbr.rel (%p531) target = $region92
        $region91: #{cnn_forward.1} parent=87 // pred_region
          %p534 = scmp.lt.s32.totalorder %s28, 1
          %s535 = scalar_select %p534, %s28, 1
          %s536 = smul.addr %s535, 4
          %s537 = smul.addr %s536, 8
          %s538 = scalar_lea.vmem %s0, %s537
        $region92: #{cnn_forward.1} parent=87 // pred_fallthru
          _
      $region88: #{cnn_forward.1} parent=5 // pred_fallthru
        _
      %p539 = scmp.le.s32.totalorder 1, %s28
      %p540 = scmp.lt.s32.totalorder %s28, 3
      %p541 = pnand %p539, %p540
      %p542 = pneg %p541
      // Predicated region
      $region93: #{cnn_forward.1} parent=5 // pred_check
        _
      $region94: #{cnn_forward.1} parent=5 // pred_check_branch
        %544 = sbr.rel (%p541) target = $region96
      $region95: #{cnn_forward.1} parent=5 // pred_region
        %s545 = ssub.s32 %s28, 1
        %p546 = scmp.lt.s32.totalorder %s33, 1
        %s547 = scalar_select %p546, %s33, 1
        %s548 = smul.addr %s547, 4
        %s549 = smul.addr %s548, 8
        %s550 = scalar_lea.vmem %s0, %s549
        %p551 = pneg %p54
        %p552 = pneg %p51
        %p553 = pneg %p75
        %p554 = pneg %p72
        %p555 = pneg %p96
        %p556 = pneg %p93
        %p557 = pneg %p117
        %p558 = pneg %p114
        %p559 = pneg %p138
        %p560 = pneg %p135
        %p561 = pneg %p159
        %p562 = pneg %p156
        %p563 = pneg %p180
        %p564 = pneg %p177
        %p565 = pneg %p201
        %p566 = pneg %p198
        %p567 = pneg %p222
        %p568 = pneg %p219
        %p569 = pneg %p243
        %p570 = pneg %p240
        %p571 = pneg %p264
        %p572 = pneg %p261
        %p573 = pneg %p285
        %p574 = pneg %p282
        %p575 = pneg %p306
        %p576 = pneg %p303
        %p577 = pneg %p327
        %p578 = pneg %p324
        %p579 = pneg %p348
        %p580 = pneg %p345
        %p581 = pneg %p369
        %p582 = pneg %p366
        %p583 = pneg %p390
        %p584 = pneg %p387
        %p585 = pneg %p411
        %p586 = pneg %p408
        %p587 = pneg %p432
        %p588 = pneg %p429
        %p589 = pneg %p458
        %p590 = pneg %p455
        %s591 = sand.u32 %s445, 1
        %s592 = scalar_lea.sflag [#allocation3], %s591
        %s593 = sand.u32 %s445, 1
        %s594 = scalar_lea.vmem [#allocation2], %s593
        %p595 = scmp.lt.s32.totalorder %s33, 1
        %s596 = scalar_select %p595, %s33, 1
        %s597 = smul.addr %s596, 4
        %s598 = smul.addr %s597, 8
        %s599 = scalar_lea.vmem %s0, %s598
        %v600 = vld [vmem:[%s599] sm:$0xff]
        %v601 = vld [vmem:[%s599 + $0x8] sm:$0xff]
        %v602 = vld [vmem:[%s599 + $0x10] sm:$0xff]
        %v603 = vld [vmem:[%s599 + $0x18] sm:$0xf]
        %v604 = vld [vmem:[%s1] sm:$0xff]
        %v605 = vld [vmem:[%s1 + $0x8] sm:$0xff]
        %v606 = vld [vmem:[%s1 + $0x10] sm:$0xff]
        %v607 = vld [vmem:[%s1 + $0x18] sm:$0xff]
        %v608 = vld [vmem:[%s1 + $0x20] sm:$0xff]
        %v609 = vld [vmem:[%s1 + $0x28] sm:$0xff]
        %v610 = vld [vmem:[%s1 + $0x30] sm:$0xff]
        %v611 = vld [vmem:[%s1 + $0x38] sm:$0xff]
        %v612 = vld [vmem:[%s1 + $0x40] sm:$0xff]
        %v613 = vld [vmem:[%s1 + $0x48] sm:$0xff]
        %v614 = vld [vmem:[%s1 + $0x50] sm:$0xff]
        %v615 = vld [vmem:[%s1 + $0x58] sm:$0xff]
        %v616 = vld [vmem:[%s1 + $0x60] sm:$0xff]
        %v617 = vld [vmem:[%s1 + $0x68] sm:$0xff]
        %v618 = vld [vmem:[%s1 + $0x70] sm:$0xff]
        %v619 = vld [vmem:[%s1 + $0x78] sm:$0xff]
        %v620 = vld [vmem:[%s1 + $0x80] sm:$0xff]
        %v621 = vld [vmem:[%s1 + $0x88] sm:$0xff]
        %v622 = vld [vmem:[%s1 + $0x90] sm:$0xff]
        %v623 = vld [vmem:[%s1 + $0x98] sm:$0xff]
        %v624 = vld [vmem:[%s1 + $0xa0] sm:$0xf]
        %v625 = vld [vmem:[%s1 + $0xa8] sm:$0xf]
        %s626 = scalar_lea.vmem %s1, 176
        %v627 = vld [vmem:[%s626] sm:$0xff]
        %v628 = vld [vmem:[%s626 + $0x8] sm:$0xff]
        %v629 = vld [vmem:[%s626 + $0x10] sm:$0xff]
        %v630 = vld [vmem:[%s626 + $0x18] sm:$0xff]
        %v631 = vld [vmem:[%s626 + $0x20] sm:$0xff]
        %v632 = vld [vmem:[%s626 + $0x28] sm:$0xff]
        %v633 = vld [vmem:[%s626 + $0x30] sm:$0xff]
        %v634 = vld [vmem:[%s626 + $0x38] sm:$0xff]
        %v635 = vld [vmem:[%s626 + $0x40] sm:$0xff]
        %v636 = vld [vmem:[%s626 + $0x48] sm:$0xff]
        %v637 = vld [vmem:[%s626 + $0x50] sm:$0xff]
        %v638 = vld [vmem:[%s626 + $0x58] sm:$0xff]
        %v639 = vld [vmem:[%s626 + $0x60] sm:$0xff]
        %v640 = vld [vmem:[%s626 + $0x68] sm:$0xff]
        %v641 = vld [vmem:[%s626 + $0x70] sm:$0xff]
        %v642 = vld [vmem:[%s626 + $0x78] sm:$0xff]
        %v643 = vld [vmem:[%s626 + $0x80] sm:$0xff]
        %v644 = vld [vmem:[%s626 + $0x88] sm:$0xff]
        %v645 = vld [vmem:[%s626 + $0x90] sm:$0xff]
        %v646 = vld [vmem:[%s626 + $0x98] sm:$0xff]
        %v647 = vld [vmem:[%s626 + $0xa0] sm:$0xf]
        %v648 = vld [vmem:[%s626 + $0xa8] sm:$0xf]
        %vm653 = vcmask 1046528
        %v654 = vrot.slane %v600, 1
        %v655 = vrot.slane %v601, 1
        %v656 = vsel %vm653, %v654, %v655
        %v657 = vrot.slane %v602, 1
        %v658 = vsel %vm653, %v655, %v657
        %v659 = vrot.slane %v603, 1
        %v660 = vsel %vm653, %v657, %v659
        %vm661 = vcmask 687104
        %v662 = vsel %vm661, %v656, 0
        %v664 = vsel %vm661, %v658, 0
        %v666 = vsel %vm661, %v660, 0
        %v668 = vsel %vm661, %v659, 0
        %vm670 = vcmask 1043456
        %v672 = vsel %vm670, %v647, 0
        %v675 = vsel %vm670, %v648, 0
        %677 = vmatpush.msra.mxu0 0.0
        %678 = vmatpush.msra.mxu0 0.0
        %679 = vmatpush.msra.mxu0 0.0
        %680 = vmatpush.msra.mxu0 0.0
        %681 = vmatpush.msra.mxu0 0.0
        %682 = vmatpush.msra.mxu0 %v672
        %683 = vmatpush.msra.mxu0 %v645
        %684 = vmatpush.msra.mxu0 %v643
        %685 = vmatpush.msra.mxu0 %v641
        %686 = vmatpush.msra.mxu0 %v639
        %687 = vmatpush.msra.mxu0 %v637
        %688 = vmatpush.msra.mxu0 %v635
        %689 = vmatpush.msra.mxu0 %v633
        %690 = vmatpush.msra.mxu0 %v631
        %691 = vmatpush.msra.mxu0 %v629
        %692 = vmatpush.msra.mxu0 %v627
        %693 = vmatmul.f32.gmra.mxu0 %v662
        %v694 = vpop.f32.mrf.mxu0
        %v695 = vadd.f32 0.0, %v694
        %696 = vmatmul.f32.gmra.mxu0 %v664
        %v697 = vpop.f32.mrf.mxu0
        %v698 = vadd.f32 0.0, %v697
        %699 = vmatmul.f32.gmra.mxu0 %v666
        %v700 = vpop.f32.mrf.mxu0
        %v701 = vadd.f32 0.0, %v700
        %702 = vmatmul.f32.gmra.mxu0 %v668
        %v703 = vpop.f32.mrf.mxu0
        %v704 = vadd.f32 0.0, %v703
        %705 = vdwg.mxu0
        %706 = vmatpush.msra.mxu0 0.0
        %707 = vmatpush.msra.mxu0 0.0
        %708 = vmatpush.msra.mxu0 0.0
        %709 = vmatpush.msra.mxu0 0.0
        %710 = vmatpush.msra.mxu0 0.0
        %711 = vmatpush.msra.mxu0 %v675
        %712 = vmatpush.msra.mxu0 %v646
        %713 = vmatpush.msra.mxu0 %v644
        %714 = vmatpush.msra.mxu0 %v642
        %715 = vmatpush.msra.mxu0 %v640
        %716 = vmatpush.msra.mxu0 %v638
        %717 = vmatpush.msra.mxu0 %v636
        %718 = vmatpush.msra.mxu0 %v634
        %719 = vmatpush.msra.mxu0 %v632
        %720 = vmatpush.msra.mxu0 %v630
        %721 = vmatpush.msra.mxu0 %v628
        %722 = vmatmul.f32.gmra.mxu0 %v662
        %v723 = vpop.f32.mrf.mxu0
        %v724 = vadd.f32 0.0, %v723
        %725 = vmatmul.f32.gmra.mxu0 %v664
        %v726 = vpop.f32.mrf.mxu0
        %v727 = vadd.f32 0.0, %v726
        %728 = vmatmul.f32.gmra.mxu0 %v666
        %v729 = vpop.f32.mrf.mxu0
        %v730 = vadd.f32 0.0, %v729
        %731 = vmatmul.f32.gmra.mxu0 %v668
        %v732 = vpop.f32.mrf.mxu0
        %v733 = vadd.f32 0.0, %v732
        %734 = vdwg.mxu0
        %v735 = vsel %vm661, %v600, 0
        %v737 = vsel %vm661, %v601, 0
        %v739 = vsel %vm661, %v602, 0
        %v741 = vsel %vm661, %v603, 0
        %v744 = vsel %vm670, %v624, 0
        %v747 = vsel %vm670, %v625, 0
        %749 = vmatpush.msra.mxu0 0.0
        %750 = vmatpush.msra.mxu0 0.0
        %751 = vmatpush.msra.mxu0 0.0
        %752 = vmatpush.msra.mxu0 0.0
        %753 = vmatpush.msra.mxu0 0.0
        %754 = vmatpush.msra.mxu0 %v744
        %755 = vmatpush.msra.mxu0 %v622
        %756 = vmatpush.msra.mxu0 %v620
        %757 = vmatpush.msra.mxu0 %v618
        %758 = vmatpush.msra.mxu0 %v616
        %759 = vmatpush.msra.mxu0 %v614
        %760 = vmatpush.msra.mxu0 %v612
        %761 = vmatpush.msra.mxu0 %v610
        %762 = vmatpush.msra.mxu0 %v608
        %763 = vmatpush.msra.mxu0 %v606
        %764 = vmatpush.msra.mxu0 %v604
        %765 = vmatmul.f32.gmra.mxu0 %v735
        %v766 = vpop.f32.mrf.mxu0
        %v767 = vadd.f32 %v695, %v766
        %768 = vmatmul.f32.gmra.mxu0 %v737
        %v769 = vpop.f32.mrf.mxu0
        %v770 = vadd.f32 %v698, %v769
        %771 = vmatmul.f32.gmra.mxu0 %v739
        %v772 = vpop.f32.mrf.mxu0
        %v773 = vadd.f32 %v701, %v772
        %774 = vmatmul.f32.gmra.mxu0 %v741
        %v775 = vpop.f32.mrf.mxu0
        %v776 = vadd.f32 %v704, %v775
        %777 = vdwg.mxu0
        %778 = vmatpush.msra.mxu0 0.0
        %779 = vmatpush.msra.mxu0 0.0
        %780 = vmatpush.msra.mxu0 0.0
        %781 = vmatpush.msra.mxu0 0.0
        %782 = vmatpush.msra.mxu0 0.0
        %783 = vmatpush.msra.mxu0 %v747
        %784 = vmatpush.msra.mxu0 %v623
        %785 = vmatpush.msra.mxu0 %v621
        %786 = vmatpush.msra.mxu0 %v619
        %787 = vmatpush.msra.mxu0 %v617
        %788 = vmatpush.msra.mxu0 %v615
        %789 = vmatpush.msra.mxu0 %v613
        %790 = vmatpush.msra.mxu0 %v611
        %791 = vmatpush.msra.mxu0 %v609
        %792 = vmatpush.msra.mxu0 %v607
        %793 = vmatpush.msra.mxu0 %v605
        %794 = vmatmul.f32.gmra.mxu0 %v735
        %v795 = vpop.f32.mrf.mxu0
        %v796 = vadd.f32 %v724, %v795
        %797 = vmatmul.f32.gmra.mxu0 %v737
        %v798 = vpop.f32.mrf.mxu0
        %v799 = vadd.f32 %v727, %v798
        %800 = vmatmul.f32.gmra.mxu0 %v739
        %v801 = vpop.f32.mrf.mxu0
        %v802 = vadd.f32 %v730, %v801
        %803 = vmatmul.f32.gmra.mxu0 %v741
        %v804 = vpop.f32.mrf.mxu0
        %v805 = vadd.f32 %v733, %v804
        %806 = vdwg.mxu0
        %s807 = scalar_lea.vmem %s1, 352
        %v808 = vld [vmem:[%s807] sm:$0xff]
        %v809 = vld [vmem:[%s807 + $0x8] sm:$0xff]
        %v810 = vld [vmem:[%s807 + $0x10] sm:$0xff]
        %v811 = vld [vmem:[%s807 + $0x18] sm:$0xff]
        %v812 = vld [vmem:[%s807 + $0x20] sm:$0xff]
        %v813 = vld [vmem:[%s807 + $0x28] sm:$0xff]
        %v814 = vld [vmem:[%s807 + $0x30] sm:$0xff]
        %v815 = vld [vmem:[%s807 + $0x38] sm:$0xff]
        %v816 = vld [vmem:[%s807 + $0x40] sm:$0xff]
        %v817 = vld [vmem:[%s807 + $0x48] sm:$0xff]
        %v818 = vld [vmem:[%s807 + $0x50] sm:$0xff]
        %v819 = vld [vmem:[%s807 + $0x58] sm:$0xff]
        %v820 = vld [vmem:[%s807 + $0x60] sm:$0xff]
        %v821 = vld [vmem:[%s807 + $0x68] sm:$0xff]
        %v822 = vld [vmem:[%s807 + $0x70] sm:$0xff]
        %v823 = vld [vmem:[%s807 + $0x78] sm:$0xff]
        %v824 = vld [vmem:[%s807 + $0x80] sm:$0xff]
        %v825 = vld [vmem:[%s807 + $0x88] sm:$0xff]
        %v826 = vld [vmem:[%s807 + $0x90] sm:$0xff]
        %v827 = vld [vmem:[%s807 + $0x98] sm:$0xff]
        %v828 = vld [vmem:[%s807 + $0xa0] sm:$0xf]
        %v829 = vld [vmem:[%s807 + $0xa8] sm:$0xf]
        %vm830 = vcmask 1045504
        %v831 = vrot.slane %v600, 2
        %v832 = vrot.slane %v601, 2
        %v833 = vsel %vm830, %v831, %v832
        %v834 = vrot.slane %v602, 2
        %v835 = vsel %vm830, %v832, %v834
        %v836 = vrot.slane %v603, 2
        %v837 = vsel %vm830, %v834, %v836
        %v838 = vsel %vm661, %v833, 0
        %v840 = vsel %vm661, %v835, 0
        %v842 = vsel %vm661, %v837, 0
        %v844 = vsel %vm661, %v836, 0
        %v847 = vsel %vm670, %v828, 0
        %v850 = vsel %vm670, %v829, 0
        %852 = vmatpush.msra.mxu0 0.0
        %853 = vmatpush.msra.mxu0 0.0
        %854 = vmatpush.msra.mxu0 0.0
        %855 = vmatpush.msra.mxu0 0.0
        %856 = vmatpush.msra.mxu0 0.0
        %857 = vmatpush.msra.mxu0 %v847
        %858 = vmatpush.msra.mxu0 %v826
        %859 = vmatpush.msra.mxu0 %v824
        %860 = vmatpush.msra.mxu0 %v822
        %861 = vmatpush.msra.mxu0 %v820
        %862 = vmatpush.msra.mxu0 %v818
        %863 = vmatpush.msra.mxu0 %v816
        %864 = vmatpush.msra.mxu0 %v814
        %865 = vmatpush.msra.mxu0 %v812
        %866 = vmatpush.msra.mxu0 %v810
        %867 = vmatpush.msra.mxu0 %v808
        %868 = vmatmul.f32.gmra.mxu0 %v838
        %v869 = vpop.f32.mrf.mxu0
        %v870 = vadd.f32 0.0, %v869
        %871 = vmatmul.f32.gmra.mxu0 %v840
        %v872 = vpop.f32.mrf.mxu0
        %v873 = vadd.f32 0.0, %v872
        %874 = vmatmul.f32.gmra.mxu0 %v842
        %v875 = vpop.f32.mrf.mxu0
        %v876 = vadd.f32 0.0, %v875
        %877 = vmatmul.f32.gmra.mxu0 %v844
        %v878 = vpop.f32.mrf.mxu0
        %v879 = vadd.f32 0.0, %v878
        %880 = vdwg.mxu0
        %881 = vmatpush.msra.mxu0 0.0
        %882 = vmatpush.msra.mxu0 0.0
        %883 = vmatpush.msra.mxu0 0.0
        %884 = vmatpush.msra.mxu0 0.0
        %885 = vmatpush.msra.mxu0 0.0
        %886 = vmatpush.msra.mxu0 %v850
        %887 = vmatpush.msra.mxu0 %v827
        %888 = vmatpush.msra.mxu0 %v825
        %889 = vmatpush.msra.mxu0 %v823
        %890 = vmatpush.msra.mxu0 %v821
        %891 = vmatpush.msra.mxu0 %v819
        %892 = vmatpush.msra.mxu0 %v817
        %893 = vmatpush.msra.mxu0 %v815
        %894 = vmatpush.msra.mxu0 %v813
        %895 = vmatpush.msra.mxu0 %v811
        %896 = vmatpush.msra.mxu0 %v809
        %897 = vmatmul.f32.gmra.mxu0 %v838
        %v898 = vpop.f32.mrf.mxu0
        %v899 = vadd.f32 0.0, %v898
        %900 = vmatmul.f32.gmra.mxu0 %v840
        %v901 = vpop.f32.mrf.mxu0
        %v902 = vadd.f32 0.0, %v901
        %903 = vmatmul.f32.gmra.mxu0 %v842
        %v904 = vpop.f32.mrf.mxu0
        %v905 = vadd.f32 0.0, %v904
        %906 = vmatmul.f32.gmra.mxu0 %v844
        %v907 = vpop.f32.mrf.mxu0
        %v908 = vadd.f32 0.0, %v907
        %909 = vdwg.mxu0
        %v910 = vadd.f32 %v767, %v870
        %v911 = vadd.f32 %v796, %v899
        %v912 = vadd.f32 %v770, %v873
        %v913 = vadd.f32 %v799, %v902
        %v914 = vadd.f32 %v773, %v876
        %v915 = vadd.f32 %v802, %v905
        %v916 = vadd.f32 %v776, %v879
        %v917 = vadd.f32 %v805, %v908
        %v918 = vld [vmem:[%s2] sm:$0xf]
        %v920 = vperm.slane %v918, 0
        %v921 = vperm.slane %v918, 2
        %v924 = vperm.slane %v920, 0
        %v925 = vperm.slane %v921, 0
        %v926 = vmul.f32 %v910, %v924
        %v927 = vmul.f32 %v911, %v925
        %v928 = vmul.f32 %v912, %v924
        %v929 = vmul.f32 %v913, %v925
        %v930 = vmul.f32 %v914, %v924
        %v931 = vmul.f32 %v915, %v925
        %v932 = vmul.f32 %v916, %v924
        %v933 = vmul.f32 %v917, %v925
        %v934 = vperm.slane %v918, 1
        %v935 = vperm.slane %v918, 3
        %v938 = vperm.slane %v934, 1
        %v939 = vperm.slane %v935, 1
        %v940 = vadd.f32 %v926, %v938
        %v941 = vadd.f32 %v927, %v939
        %v942 = vadd.f32 %v928, %v938
        %v943 = vadd.f32 %v929, %v939
        %v944 = vadd.f32 %v930, %v938
        %v945 = vadd.f32 %v931, %v939
        %v946 = vadd.f32 %v932, %v938
        %v947 = vadd.f32 %v933, %v939
        %v948 = vmax.f32 %v940, 0.0
        %v949 = vmax.f32 %v941, 0.0
        %v950 = vmax.f32 %v942, 0.0
        %v951 = vmax.f32 %v943, 0.0
        %v952 = vmax.f32 %v944, 0.0
        %v953 = vmax.f32 %v945, 0.0
        %v954 = vmax.f32 %v946, 0.0
        %v955 = vmax.f32 %v947, 0.0
        %v956 = vld [vmem:[%s3] sm:$0xff]
        %v957 = vld [vmem:[%s3 + $0x8] sm:$0xff]
        %v958 = vld [vmem:[%s3 + $0x10] sm:$0xff]
        %v959 = vld [vmem:[%s3 + $0x18] sm:$0xff]
        %v960 = vld [vmem:[%s3 + $0x20] sm:$0xff]
        %v961 = vld [vmem:[%s3 + $0x28] sm:$0xff]
        %v962 = vld [vmem:[%s3 + $0x30] sm:$0xff]
        %v963 = vld [vmem:[%s3 + $0x38] sm:$0xff]
        %v964 = vld [vmem:[%s3 + $0x40] sm:$0xff]
        %v965 = vld [vmem:[%s3 + $0x48] sm:$0xff]
        %v966 = vld [vmem:[%s3 + $0x50] sm:$0xff]
        %v967 = vld [vmem:[%s3 + $0x58] sm:$0xff]
        %v968 = vld [vmem:[%s3 + $0x60] sm:$0xff]
        %v969 = vld [vmem:[%s3 + $0x68] sm:$0xff]
        %v970 = vld [vmem:[%s3 + $0x70] sm:$0xff]
        %v971 = vld [vmem:[%s3 + $0x78] sm:$0xff]
        %v972 = vld [vmem:[%s3 + $0x80] sm:$0xff]
        %v973 = vld [vmem:[%s3 + $0x88] sm:$0xff]
        %v974 = vld [vmem:[%s3 + $0x90] sm:$0xff]
        %v975 = vld [vmem:[%s3 + $0x98] sm:$0xff]
        %v976 = vld [vmem:[%s3 + $0xa0] sm:$0xff]
        %v977 = vld [vmem:[%s3 + $0xa8] sm:$0xff]
        %v978 = vld [vmem:[%s3 + $0xb0] sm:$0xff]
        %v979 = vld [vmem:[%s3 + $0xb8] sm:$0xff]
        %v980 = vld [vmem:[%s3 + $0xc0] sm:$0xff]
        %v981 = vld [vmem:[%s3 + $0xc8] sm:$0xff]
        %v982 = vld [vmem:[%s3 + $0xd0] sm:$0xff]
        %v983 = vld [vmem:[%s3 + $0xd8] sm:$0xff]
        %v984 = vld [vmem:[%s3 + $0xe0] sm:$0xff]
        %v985 = vld [vmem:[%s3 + $0xe8] sm:$0xff]
        %v986 = vld [vmem:[%s3 + $0xf0] sm:$0xff]
        %v987 = vld [vmem:[%s3 + $0xf8] sm:$0xff]
        %v988 = vld [vmem:[%s3 + $0x100] sm:$0xff]
        %v989 = vld [vmem:[%s3 + $0x108] sm:$0xff]
        %v990 = vld [vmem:[%s3 + $0x110] sm:$0xff]
        %v991 = vld [vmem:[%s3 + $0x118] sm:$0xff]
        %v992 = vld [vmem:[%s3 + $0x120] sm:$0xff]
        %v993 = vld [vmem:[%s3 + $0x128] sm:$0xff]
        %v994 = vld [vmem:[%s3 + $0x130] sm:$0xff]
        %v995 = vld [vmem:[%s3 + $0x138] sm:$0xff]
        %v996 = vld [vmem:[%s3 + $0x140] sm:$0xff]
        %v997 = vld [vmem:[%s3 + $0x148] sm:$0xff]
        %v998 = vld [vmem:[%s3 + $0x150] sm:$0xff]
        %v999 = vld [vmem:[%s3 + $0x158] sm:$0xff]
        %v1000 = vld [vmem:[%s3 + $0x160] sm:$0xff]
        %v1001 = vld [vmem:[%s3 + $0x168] sm:$0xff]
        %v1002 = vld [vmem:[%s3 + $0x170] sm:$0xff]
        %v1003 = vld [vmem:[%s3 + $0x178] sm:$0xff]
        %v1004 = vld [vmem:[%s3 + $0x180] sm:$0xff]
        %v1005 = vld [vmem:[%s3 + $0x188] sm:$0xff]
        %v1006 = vld [vmem:[%s3 + $0x190] sm:$0xff]
        %v1007 = vld [vmem:[%s3 + $0x198] sm:$0xff]
        %s1008 = scalar_lea.vmem %s3, 416
        %v1009 = vld [vmem:[%s1008] sm:$0xff]
        %v1010 = vld [vmem:[%s1008 + $0x8] sm:$0xff]
        %v1011 = vld [vmem:[%s1008 + $0x10] sm:$0xff]
        %v1012 = vld [vmem:[%s1008 + $0x18] sm:$0xff]
        %v1013 = vld [vmem:[%s1008 + $0x20] sm:$0xff]
        %v1014 = vld [vmem:[%s1008 + $0x28] sm:$0xff]
        %v1015 = vld [vmem:[%s1008 + $0x30] sm:$0xff]
        %v1016 = vld [vmem:[%s1008 + $0x38] sm:$0xff]
        %v1017 = vld [vmem:[%s1008 + $0x40] sm:$0xff]
        %v1018 = vld [vmem:[%s1008 + $0x48] sm:$0xff]
        %v1019 = vld [vmem:[%s1008 + $0x50] sm:$0xff]
        %v1020 = vld [vmem:[%s1008 + $0x58] sm:$0xff]
        %v1021 = vld [vmem:[%s1008 + $0x60] sm:$0xff]
        %v1022 = vld [vmem:[%s1008 + $0x68] sm:$0xff]
        %v1023 = vld [vmem:[%s1008 + $0x70] sm:$0xff]
        %v1024 = vld [vmem:[%s1008 + $0x78] sm:$0xff]
        %v1025 = vld [vmem:[%s1008 + $0x80] sm:$0xff]
        %v1026 = vld [vmem:[%s1008 + $0x88] sm:$0xff]
        %v1027 = vld [vmem:[%s1008 + $0x90] sm:$0xff]
        %v1028 = vld [vmem:[%s1008 + $0x98] sm:$0xff]
        %v1029 = vld [vmem:[%s1008 + $0xa0] sm:$0xff]
        %v1030 = vld [vmem:[%s1008 + $0xa8] sm:$0xff]
        %v1031 = vld [vmem:[%s1008 + $0xb0] sm:$0xff]
        %v1032 = vld [vmem:[%s1008 + $0xb8] sm:$0xff]
        %v1033 = vld [vmem:[%s1008 + $0xc0] sm:$0xff]
        %v1034 = vld [vmem:[%s1008 + $0xc8] sm:$0xff]
        %v1035 = vld [vmem:[%s1008 + $0xd0] sm:$0xff]
        %v1036 = vld [vmem:[%s1008 + $0xd8] sm:$0xff]
        %v1037 = vld [vmem:[%s1008 + $0xe0] sm:$0xff]
        %v1038 = vld [vmem:[%s1008 + $0xe8] sm:$0xff]
        %v1039 = vld [vmem:[%s1008 + $0xf0] sm:$0xff]
        %v1040 = vld [vmem:[%s1008 + $0xf8] sm:$0xff]
        %v1041 = vld [vmem:[%s1008 + $0x100] sm:$0xff]
        %v1042 = vld [vmem:[%s1008 + $0x108] sm:$0xff]
        %v1043 = vld [vmem:[%s1008 + $0x110] sm:$0xff]
        %v1044 = vld [vmem:[%s1008 + $0x118] sm:$0xff]
        %v1045 = vld [vmem:[%s1008 + $0x120] sm:$0xff]
        %v1046 = vld [vmem:[%s1008 + $0x128] sm:$0xff]
        %v1047 = vld [vmem:[%s1008 + $0x130] sm:$0xff]
        %v1048 = vld [vmem:[%s1008 + $0x138] sm:$0xff]
        %v1049 = vld [vmem:[%s1008 + $0x140] sm:$0xff]
        %v1050 = vld [vmem:[%s1008 + $0x148] sm:$0xff]
        %v1051 = vld [vmem:[%s1008 + $0x150] sm:$0xff]
        %v1052 = vld [vmem:[%s1008 + $0x158] sm:$0xff]
        %v1053 = vld [vmem:[%s1008 + $0x160] sm:$0xff]
        %v1054 = vld [vmem:[%s1008 + $0x168] sm:$0xff]
        %v1055 = vld [vmem:[%s1008 + $0x170] sm:$0xff]
        %v1056 = vld [vmem:[%s1008 + $0x178] sm:$0xff]
        %v1057 = vld [vmem:[%s1008 + $0x180] sm:$0xff]
        %v1058 = vld [vmem:[%s1008 + $0x188] sm:$0xff]
        %v1059 = vld [vmem:[%s1008 + $0x190] sm:$0xff]
        %v1060 = vld [vmem:[%s1008 + $0x198] sm:$0xff]
        %v1069 = vrot.slane %v948, 1
        %v1070 = vrot.slane %v950, 1
        %v1071 = vsel %vm653, %v1069, %v1070
        %v1072 = vrot.slane %v949, 1
        %v1073 = vrot.slane %v951, 1
        %v1074 = vsel %vm653, %v1072, %v1073
        %v1075 = vrot.slane %v952, 1
        %v1076 = vsel %vm653, %v1070, %v1075
        %v1077 = vrot.slane %v953, 1
        %v1078 = vsel %vm653, %v1073, %v1077
        %v1079 = vrot.slane %v954, 1
        %v1080 = vsel %vm653, %v1075, %v1079
        %v1081 = vrot.slane %v955, 1
        %v1082 = vsel %vm653, %v1077, %v1081
        %vm1086 = vcmask 654336
        %v1087 = vsel %vm1086, %v1074, 0
        %v1089 = vsel %vm1086, %v1078, 0
        %v1091 = vsel %vm1086, %v1082, 0
        %1093 = vmatpush.msra.mxu0 %v1039
        %1094 = vmatpush.msra.mxu0 %v1037
        %1095 = vmatpush.msra.mxu0 %v1035
        %1096 = vmatpush.msra.mxu0 %v1033
        %1097 = vmatpush.msra.mxu0 %v1031
        %1098 = vmatpush.msra.mxu0 %v1029
        %1099 = vmatpush.msra.mxu0 %v1027
        %1100 = vmatpush.msra.mxu0 %v1025
        %1101 = vmatpush.msra.mxu0 %v1023
        %1102 = vmatpush.msra.mxu0 %v1021
        %1103 = vmatpush.msra.mxu0 %v1019
        %1104 = vmatpush.msra.mxu0 %v1017
        %1105 = vmatpush.msra.mxu0 %v1015
        %1106 = vmatpush.msra.mxu0 %v1013
        %1107 = vmatpush.msra.mxu0 %v1011
        %1108 = vmatpush.msra.mxu0 %v1009
        %1109 = vmatmul.f32.gmra.mxu0 %v1071
        %v1110 = vpop.f32.mrf.mxu0
        %v1111 = vadd.f32 0.0, %v1110
        %1112 = vmatmul.f32.gmra.mxu0 %v1076
        %v1113 = vpop.f32.mrf.mxu0
        %v1114 = vadd.f32 0.0, %v1113
        %1115 = vmatmul.f32.gmra.mxu0 %v1080
        %v1116 = vpop.f32.mrf.mxu0
        %v1117 = vadd.f32 0.0, %v1116
        %1118 = vdwg.mxu0
        %1119 = vmatpush.msra.mxu0 0.0
        %1120 = vmatpush.msra.mxu0 0.0
        %1121 = vmatpush.msra.mxu0 0.0
        %1122 = vmatpush.msra.mxu0 0.0
        %1123 = vmatpush.msra.mxu0 0.0
        %1124 = vmatpush.msra.mxu0 0.0
        %1125 = vmatpush.msra.mxu0 %v1059
        %1126 = vmatpush.msra.mxu0 %v1057
        %1127 = vmatpush.msra.mxu0 %v1055
        %1128 = vmatpush.msra.mxu0 %v1053
        %1129 = vmatpush.msra.mxu0 %v1051
        %1130 = vmatpush.msra.mxu0 %v1049
        %1131 = vmatpush.msra.mxu0 %v1047
        %1132 = vmatpush.msra.mxu0 %v1045
        %1133 = vmatpush.msra.mxu0 %v1043
        %1134 = vmatpush.msra.mxu0 %v1041
        %1135 = vmatmul.f32.gmra.mxu0 %v1087
        %v1136 = vpop.f32.mrf.mxu0
        %v1137 = vadd.f32 %v1111, %v1136
        %1138 = vmatmul.f32.gmra.mxu0 %v1089
        %v1139 = vpop.f32.mrf.mxu0
        %v1140 = vadd.f32 %v1114, %v1139
        %1141 = vmatmul.f32.gmra.mxu0 %v1091
        %v1142 = vpop.f32.mrf.mxu0
        %v1143 = vadd.f32 %v1117, %v1142
        %1144 = vdwg.mxu0
        %1145 = vmatpush.msra.mxu0 %v1040
        %1146 = vmatpush.msra.mxu0 %v1038
        %1147 = vmatpush.msra.mxu0 %v1036
        %1148 = vmatpush.msra.mxu0 %v1034
        %1149 = vmatpush.msra.mxu0 %v1032
        %1150 = vmatpush.msra.mxu0 %v1030
        %1151 = vmatpush.msra.mxu0 %v1028
        %1152 = vmatpush.msra.mxu0 %v1026
        %1153 = vmatpush.msra.mxu0 %v1024
        %1154 = vmatpush.msra.mxu0 %v1022
        %1155 = vmatpush.msra.mxu0 %v1020
        %1156 = vmatpush.msra.mxu0 %v1018
        %1157 = vmatpush.msra.mxu0 %v1016
        %1158 = vmatpush.msra.mxu0 %v1014
        %1159 = vmatpush.msra.mxu0 %v1012
        %1160 = vmatpush.msra.mxu0 %v1010
        %1161 = vmatmul.f32.gmra.mxu0 %v1071
        %v1162 = vpop.f32.mrf.mxu0
        %v1163 = vadd.f32 0.0, %v1162
        %1164 = vmatmul.f32.gmra.mxu0 %v1076
        %v1165 = vpop.f32.mrf.mxu0
        %v1166 = vadd.f32 0.0, %v1165
        %1167 = vmatmul.f32.gmra.mxu0 %v1080
        %v1168 = vpop.f32.mrf.mxu0
        %v1169 = vadd.f32 0.0, %v1168
        %1170 = vdwg.mxu0
        %1171 = vmatpush.msra.mxu0 0.0
        %1172 = vmatpush.msra.mxu0 0.0
        %1173 = vmatpush.msra.mxu0 0.0
        %1174 = vmatpush.msra.mxu0 0.0
        %1175 = vmatpush.msra.mxu0 0.0
        %1176 = vmatpush.msra.mxu0 0.0
        %1177 = vmatpush.msra.mxu0 %v1060
        %1178 = vmatpush.msra.mxu0 %v1058
        %1179 = vmatpush.msra.mxu0 %v1056
        %1180 = vmatpush.msra.mxu0 %v1054
        %1181 = vmatpush.msra.mxu0 %v1052
        %1182 = vmatpush.msra.mxu0 %v1050
        %1183 = vmatpush.msra.mxu0 %v1048
        %1184 = vmatpush.msra.mxu0 %v1046
        %1185 = vmatpush.msra.mxu0 %v1044
        %1186 = vmatpush.msra.mxu0 %v1042
        %1187 = vmatmul.f32.gmra.mxu0 %v1087
        %v1188 = vpop.f32.mrf.mxu0
        %v1189 = vadd.f32 %v1163, %v1188
        %1190 = vmatmul.f32.gmra.mxu0 %v1089
        %v1191 = vpop.f32.mrf.mxu0
        %v1192 = vadd.f32 %v1166, %v1191
        %1193 = vmatmul.f32.gmra.mxu0 %v1091
        %v1194 = vpop.f32.mrf.mxu0
        %v1195 = vadd.f32 %v1169, %v1194
        %1196 = vdwg.mxu0
        %v1197 = vsel %vm1086, %v949, 0
        %v1199 = vsel %vm1086, %v951, 0
        %v1201 = vsel %vm1086, %v953, 0
        %1203 = vmatpush.msra.mxu0 %v986
        %1204 = vmatpush.msra.mxu0 %v984
        %1205 = vmatpush.msra.mxu0 %v982
        %1206 = vmatpush.msra.mxu0 %v980
        %1207 = vmatpush.msra.mxu0 %v978
        %1208 = vmatpush.msra.mxu0 %v976
        %1209 = vmatpush.msra.mxu0 %v974
        %1210 = vmatpush.msra.mxu0 %v972
        %1211 = vmatpush.msra.mxu0 %v970
        %1212 = vmatpush.msra.mxu0 %v968
        %1213 = vmatpush.msra.mxu0 %v966
        %1214 = vmatpush.msra.mxu0 %v964
        %1215 = vmatpush.msra.mxu0 %v962
        %1216 = vmatpush.msra.mxu0 %v960
        %1217 = vmatpush.msra.mxu0 %v958
        %1218 = vmatpush.msra.mxu0 %v956
        %1219 = vmatmul.f32.gmra.mxu0 %v948
        %v1220 = vpop.f32.mrf.mxu0
        %v1221 = vadd.f32 %v1137, %v1220
        %1222 = vmatmul.f32.gmra.mxu0 %v950
        %v1223 = vpop.f32.mrf.mxu0
        %v1224 = vadd.f32 %v1140, %v1223
        %1225 = vmatmul.f32.gmra.mxu0 %v952
        %v1226 = vpop.f32.mrf.mxu0
        %v1227 = vadd.f32 %v1143, %v1226
        %1228 = vdwg.mxu0
        %1229 = vmatpush.msra.mxu0 0.0
        %1230 = vmatpush.msra.mxu0 0.0
        %1231 = vmatpush.msra.mxu0 0.0
        %1232 = vmatpush.msra.mxu0 0.0
        %1233 = vmatpush.msra.mxu0 0.0
        %1234 = vmatpush.msra.mxu0 0.0
        %1235 = vmatpush.msra.mxu0 %v1006
        %1236 = vmatpush.msra.mxu0 %v1004
        %1237 = vmatpush.msra.mxu0 %v1002
        %1238 = vmatpush.msra.mxu0 %v1000
        %1239 = vmatpush.msra.mxu0 %v998
        %1240 = vmatpush.msra.mxu0 %v996
        %1241 = vmatpush.msra.mxu0 %v994
        %1242 = vmatpush.msra.mxu0 %v992
        %1243 = vmatpush.msra.mxu0 %v990
        %1244 = vmatpush.msra.mxu0 %v988
        %1245 = vmatmul.f32.gmra.mxu0 %v1197
        %v1246 = vpop.f32.mrf.mxu0
        %v1247 = vadd.f32 %v1221, %v1246
        %1248 = vmatmul.f32.gmra.mxu0 %v1199
        %v1249 = vpop.f32.mrf.mxu0
        %v1250 = vadd.f32 %v1224, %v1249
        %1251 = vmatmul.f32.gmra.mxu0 %v1201
        %v1252 = vpop.f32.mrf.mxu0
        %v1253 = vadd.f32 %v1227, %v1252
        %1254 = vdwg.mxu0
        %1255 = vmatpush.msra.mxu0 %v987
        %1256 = vmatpush.msra.mxu0 %v985
        %1257 = vmatpush.msra.mxu0 %v983
        %1258 = vmatpush.msra.mxu0 %v981
        %1259 = vmatpush.msra.mxu0 %v979
        %1260 = vmatpush.msra.mxu0 %v977
        %1261 = vmatpush.msra.mxu0 %v975
        %1262 = vmatpush.msra.mxu0 %v973
        %1263 = vmatpush.msra.mxu0 %v971
        %1264 = vmatpush.msra.mxu0 %v969
        %1265 = vmatpush.msra.mxu0 %v967
        %1266 = vmatpush.msra.mxu0 %v965
        %1267 = vmatpush.msra.mxu0 %v963
        %1268 = vmatpush.msra.mxu0 %v961
        %1269 = vmatpush.msra.mxu0 %v959
        %1270 = vmatpush.msra.mxu0 %v957
        %1271 = vmatmul.f32.gmra.mxu0 %v948
        %v1272 = vpop.f32.mrf.mxu0
        %v1273 = vadd.f32 %v1189, %v1272
        %1274 = vmatmul.f32.gmra.mxu0 %v950
        %v1275 = vpop.f32.mrf.mxu0
        %v1276 = vadd.f32 %v1192, %v1275
        %1277 = vmatmul.f32.gmra.mxu0 %v952
        %v1278 = vpop.f32.mrf.mxu0
        %v1279 = vadd.f32 %v1195, %v1278
        %1280 = vdwg.mxu0
        %1281 = vmatpush.msra.mxu0 0.0
        %1282 = vmatpush.msra.mxu0 0.0
        %1283 = vmatpush.msra.mxu0 0.0
        %1284 = vmatpush.msra.mxu0 0.0
        %1285 = vmatpush.msra.mxu0 0.0
        %1286 = vmatpush.msra.mxu0 0.0
        %1287 = vmatpush.msra.mxu0 %v1007
        %1288 = vmatpush.msra.mxu0 %v1005
        %1289 = vmatpush.msra.mxu0 %v1003
        %1290 = vmatpush.msra.mxu0 %v1001
        %1291 = vmatpush.msra.mxu0 %v999
        %1292 = vmatpush.msra.mxu0 %v997
        %1293 = vmatpush.msra.mxu0 %v995
        %1294 = vmatpush.msra.mxu0 %v993
        %1295 = vmatpush.msra.mxu0 %v991
        %1296 = vmatpush.msra.mxu0 %v989
        %1297 = vmatmul.f32.gmra.mxu0 %v1197
        %v1298 = vpop.f32.mrf.mxu0
        %v1299 = vadd.f32 %v1273, %v1298
        %1300 = vmatmul.f32.gmra.mxu0 %v1199
        %v1301 = vpop.f32.mrf.mxu0
        %v1302 = vadd.f32 %v1276, %v1301
        %1303 = vmatmul.f32.gmra.mxu0 %v1201
        %v1304 = vpop.f32.mrf.mxu0
        %v1305 = vadd.f32 %v1279, %v1304
        %1306 = vdwg.mxu0
        %s1307 = scalar_lea.vmem %s3, 832
        %v1308 = vld [vmem:[%s1307] sm:$0xff]
        %v1309 = vld [vmem:[%s1307 + $0x8] sm:$0xff]
        %v1310 = vld [vmem:[%s1307 + $0x10] sm:$0xff]
        %v1311 = vld [vmem:[%s1307 + $0x18] sm:$0xff]
        %v1312 = vld [vmem:[%s1307 + $0x20] sm:$0xff]
        %v1313 = vld [vmem:[%s1307 + $0x28] sm:$0xff]
        %v1314 = vld [vmem:[%s1307 + $0x30] sm:$0xff]
        %v1315 = vld [vmem:[%s1307 + $0x38] sm:$0xff]
        %v1316 = vld [vmem:[%s1307 + $0x40] sm:$0xff]
        %v1317 = vld [vmem:[%s1307 + $0x48] sm:$0xff]
        %v1318 = vld [vmem:[%s1307 + $0x50] sm:$0xff]
        %v1319 = vld [vmem:[%s1307 + $0x58] sm:$0xff]
        %v1320 = vld [vmem:[%s1307 + $0x60] sm:$0xff]
        %v1321 = vld [vmem:[%s1307 + $0x68] sm:$0xff]
        %v1322 = vld [vmem:[%s1307 + $0x70] sm:$0xff]
        %v1323 = vld [vmem:[%s1307 + $0x78] sm:$0xff]
        %v1324 = vld [vmem:[%s1307 + $0x80] sm:$0xff]
        %v1325 = vld [vmem:[%s1307 + $0x88] sm:$0xff]
        %v1326 = vld [vmem:[%s1307 + $0x90] sm:$0xff]
        %v1327 = vld [vmem:[%s1307 + $0x98] sm:$0xff]
        %v1328 = vld [vmem:[%s1307 + $0xa0] sm:$0xff]
        %v1329 = vld [vmem:[%s1307 + $0xa8] sm:$0xff]
        %v1330 = vld [vmem:[%s1307 + $0xb0] sm:$0xff]
        %v1331 = vld [vmem:[%s1307 + $0xb8] sm:$0xff]
        %v1332 = vld [vmem:[%s1307 + $0xc0] sm:$0xff]
        %v1333 = vld [vmem:[%s1307 + $0xc8] sm:$0xff]
        %v1334 = vld [vmem:[%s1307 + $0xd0] sm:$0xff]
        %v1335 = vld [vmem:[%s1307 + $0xd8] sm:$0xff]
        %v1336 = vld [vmem:[%s1307 + $0xe0] sm:$0xff]
        %v1337 = vld [vmem:[%s1307 + $0xe8] sm:$0xff]
        %v1338 = vld [vmem:[%s1307 + $0xf0] sm:$0xff]
        %v1339 = vld [vmem:[%s1307 + $0xf8] sm:$0xff]
        %v1340 = vld [vmem:[%s1307 + $0x100] sm:$0xff]
        %v1341 = vld [vmem:[%s1307 + $0x108] sm:$0xff]
        %v1342 = vld [vmem:[%s1307 + $0x110] sm:$0xff]
        %v1343 = vld [vmem:[%s1307 + $0x118] sm:$0xff]
        %v1344 = vld [vmem:[%s1307 + $0x120] sm:$0xff]
        %v1345 = vld [vmem:[%s1307 + $0x128] sm:$0xff]
        %v1346 = vld [vmem:[%s1307 + $0x130] sm:$0xff]
        %v1347 = vld [vmem:[%s1307 + $0x138] sm:$0xff]
        %v1348 = vld [vmem:[%s1307 + $0x140] sm:$0xff]
        %v1349 = vld [vmem:[%s1307 + $0x148] sm:$0xff]
        %v1350 = vld [vmem:[%s1307 + $0x150] sm:$0xff]
        %v1351 = vld [vmem:[%s1307 + $0x158] sm:$0xff]
        %v1352 = vld [vmem:[%s1307 + $0x160] sm:$0xff]
        %v1353 = vld [vmem:[%s1307 + $0x168] sm:$0xff]
        %v1354 = vld [vmem:[%s1307 + $0x170] sm:$0xff]
        %v1355 = vld [vmem:[%s1307 + $0x178] sm:$0xff]
        %v1356 = vld [vmem:[%s1307 + $0x180] sm:$0xff]
        %v1357 = vld [vmem:[%s1307 + $0x188] sm:$0xff]
        %v1358 = vld [vmem:[%s1307 + $0x190] sm:$0xff]
        %v1359 = vld [vmem:[%s1307 + $0x198] sm:$0xff]
        %v1360 = vrot.slane %v948, 2
        %v1361 = vrot.slane %v950, 2
        %v1362 = vsel %vm830, %v1360, %v1361
        %v1363 = vrot.slane %v949, 2
        %v1364 = vrot.slane %v951, 2
        %v1365 = vsel %vm830, %v1363, %v1364
        %v1366 = vrot.slane %v952, 2
        %v1367 = vsel %vm830, %v1361, %v1366
        %v1368 = vrot.slane %v953, 2
        %v1369 = vsel %vm830, %v1364, %v1368
        %v1370 = vrot.slane %v954, 2
        %v1371 = vsel %vm830, %v1366, %v1370
        %v1372 = vrot.slane %v955, 2
        %v1373 = vsel %vm830, %v1368, %v1372
        %v1377 = vsel %vm1086, %v1365, 0
        %v1379 = vsel %vm1086, %v1369, 0
        %v1381 = vsel %vm1086, %v1373, 0
        %1383 = vmatpush.msra.mxu0 %v1338
        %1384 = vmatpush.msra.mxu0 %v1336
        %1385 = vmatpush.msra.mxu0 %v1334
        %1386 = vmatpush.msra.mxu0 %v1332
        %1387 = vmatpush.msra.mxu0 %v1330
        %1388 = vmatpush.msra.mxu0 %v1328
        %1389 = vmatpush.msra.mxu0 %v1326
        %1390 = vmatpush.msra.mxu0 %v1324
        %1391 = vmatpush.msra.mxu0 %v1322
        %1392 = vmatpush.msra.mxu0 %v1320
        %1393 = vmatpush.msra.mxu0 %v1318
        %1394 = vmatpush.msra.mxu0 %v1316
        %1395 = vmatpush.msra.mxu0 %v1314
        %1396 = vmatpush.msra.mxu0 %v1312
        %1397 = vmatpush.msra.mxu0 %v1310
        %1398 = vmatpush.msra.mxu0 %v1308
        %1399 = vmatmul.f32.gmra.mxu0 %v1362
        %v1400 = vpop.f32.mrf.mxu0
        %v1401 = vadd.f32 0.0, %v1400
        %1402 = vmatmul.f32.gmra.mxu0 %v1367
        %v1403 = vpop.f32.mrf.mxu0
        %v1404 = vadd.f32 0.0, %v1403
        %1405 = vmatmul.f32.gmra.mxu0 %v1371
        %v1406 = vpop.f32.mrf.mxu0
        %v1407 = vadd.f32 0.0, %v1406
        %1408 = vdwg.mxu0
        %1409 = vmatpush.msra.mxu0 0.0
        %1410 = vmatpush.msra.mxu0 0.0
        %1411 = vmatpush.msra.mxu0 0.0
        %1412 = vmatpush.msra.mxu0 0.0
        %1413 = vmatpush.msra.mxu0 0.0
        %1414 = vmatpush.msra.mxu0 0.0
        %1415 = vmatpush.msra.mxu0 %v1358
        %1416 = vmatpush.msra.mxu0 %v1356
        %1417 = vmatpush.msra.mxu0 %v1354
        %1418 = vmatpush.msra.mxu0 %v1352
        %1419 = vmatpush.msra.mxu0 %v1350
        %1420 = vmatpush.msra.mxu0 %v1348
        %1421 = vmatpush.msra.mxu0 %v1346
        %1422 = vmatpush.msra.mxu0 %v1344
        %1423 = vmatpush.msra.mxu0 %v1342
        %1424 = vmatpush.msra.mxu0 %v1340
        %1425 = vmatmul.f32.gmra.mxu0 %v1377
        %v1426 = vpop.f32.mrf.mxu0
        %v1427 = vadd.f32 %v1401, %v1426
        %1428 = vmatmul.f32.gmra.mxu0 %v1379
        %v1429 = vpop.f32.mrf.mxu0
        %v1430 = vadd.f32 %v1404, %v1429
        %1431 = vmatmul.f32.gmra.mxu0 %v1381
        %v1432 = vpop.f32.mrf.mxu0
        %v1433 = vadd.f32 %v1407, %v1432
        %1434 = vdwg.mxu0
        %1435 = vmatpush.msra.mxu0 %v1339
        %1436 = vmatpush.msra.mxu0 %v1337
        %1437 = vmatpush.msra.mxu0 %v1335
        %1438 = vmatpush.msra.mxu0 %v1333
        %1439 = vmatpush.msra.mxu0 %v1331
        %1440 = vmatpush.msra.mxu0 %v1329
        %1441 = vmatpush.msra.mxu0 %v1327
        %1442 = vmatpush.msra.mxu0 %v1325
        %1443 = vmatpush.msra.mxu0 %v1323
        %1444 = vmatpush.msra.mxu0 %v1321
        %1445 = vmatpush.msra.mxu0 %v1319
        %1446 = vmatpush.msra.mxu0 %v1317
        %1447 = vmatpush.msra.mxu0 %v1315
        %1448 = vmatpush.msra.mxu0 %v1313
        %1449 = vmatpush.msra.mxu0 %v1311
        %1450 = vmatpush.msra.mxu0 %v1309
        %1451 = vmatmul.f32.gmra.mxu0 %v1362
        %v1452 = vpop.f32.mrf.mxu0
        %v1453 = vadd.f32 0.0, %v1452
        %1454 = vmatmul.f32.gmra.mxu0 %v1367
        %v1455 = vpop.f32.mrf.mxu0
        %v1456 = vadd.f32 0.0, %v1455
        %1457 = vmatmul.f32.gmra.mxu0 %v1371
        %v1458 = vpop.f32.mrf.mxu0
        %v1459 = vadd.f32 0.0, %v1458
        %1460 = vdwg.mxu0
        %1461 = vmatpush.msra.mxu0 0.0
        %1462 = vmatpush.msra.mxu0 0.0
        %1463 = vmatpush.msra.mxu0 0.0
        %1464 = vmatpush.msra.mxu0 0.0
        %1465 = vmatpush.msra.mxu0 0.0
        %1466 = vmatpush.msra.mxu0 0.0
        %1467 = vmatpush.msra.mxu0 %v1359
        %1468 = vmatpush.msra.mxu0 %v1357
        %1469 = vmatpush.msra.mxu0 %v1355
        %1470 = vmatpush.msra.mxu0 %v1353
        %1471 = vmatpush.msra.mxu0 %v1351
        %1472 = vmatpush.msra.mxu0 %v1349
        %1473 = vmatpush.msra.mxu0 %v1347
        %1474 = vmatpush.msra.mxu0 %v1345
        %1475 = vmatpush.msra.mxu0 %v1343
        %1476 = vmatpush.msra.mxu0 %v1341
        %1477 = vmatmul.f32.gmra.mxu0 %v1377
        %v1478 = vpop.f32.mrf.mxu0
        %v1479 = vadd.f32 %v1453, %v1478
        %1480 = vmatmul.f32.gmra.mxu0 %v1379
        %v1481 = vpop.f32.mrf.mxu0
        %v1482 = vadd.f32 %v1456, %v1481
        %1483 = vmatmul.f32.gmra.mxu0 %v1381
        %v1484 = vpop.f32.mrf.mxu0
        %v1485 = vadd.f32 %v1459, %v1484
        %1486 = vdwg.mxu0
        %v1487 = vadd.f32 %v1247, %v1427
        %v1488 = vadd.f32 %v1299, %v1479
        %v1489 = vadd.f32 %v1250, %v1430
        %v1490 = vadd.f32 %v1302, %v1482
        %v1491 = vadd.f32 %v1253, %v1433
        %v1492 = vadd.f32 %v1305, %v1485
        %v1493 = vld [vmem:[%s4] sm:$0xf]
        %v1495 = vperm.slane %v1493, 0
        %v1496 = vperm.slane %v1493, 2
        %v1499 = vperm.slane %v1495, 0
        %v1500 = vperm.slane %v1496, 0
        %v1501 = vmul.f32 %v1487, %v1499
        %v1502 = vmul.f32 %v1488, %v1500
        %v1503 = vmul.f32 %v1489, %v1499
        %v1504 = vmul.f32 %v1490, %v1500
        %v1505 = vmul.f32 %v1491, %v1499
        %v1506 = vmul.f32 %v1492, %v1500
        %v1507 = vperm.slane %v1493, 1
        %v1508 = vperm.slane %v1493, 3
        %v1511 = vperm.slane %v1507, 1
        %v1512 = vperm.slane %v1508, 1
        %v1513 = vadd.f32 %v1501, %v1511
        %v1514 = vadd.f32 %v1502, %v1512
        %v1515 = vadd.f32 %v1503, %v1511
        %v1516 = vadd.f32 %v1504, %v1512
        %v1517 = vadd.f32 %v1505, %v1511
        %v1518 = vadd.f32 %v1506, %v1512
        %v1519 = vmax.f32 %v1513, 0.0
        %v1520 = vmax.f32 %v1514, 0.0
        %v1521 = vmax.f32 %v1515, 0.0
        %v1522 = vmax.f32 %v1516, 0.0
        %v1523 = vmax.f32 %v1517, 0.0
        %v1524 = vmax.f32 %v1518, 0.0
        %v1525 = vld [vmem:[%s15] sm:$0xff]
        %v1526 = vld [vmem:[%s15 + $0x8] sm:$0xf]
        %vm1527 = vcmask 195584
        %v1529 = vsel %vm1527, %v1525, 0
        %v1532 = vsel %vm1527, %v1526, 0
        %1534 = vmatpush.msra.mxu0 0.0
        %1535 = vmatpush.msra.mxu0 0.0
        %1536 = vmatpush.msra.mxu0 0.0
        %1537 = vmatpush.msra.mxu0 0.0
        %1538 = vmatpush.msra.mxu0 0.0
        %1539 = vmatpush.msra.mxu0 0.0
        %1540 = vmatpush.msra.mxu0 0.0
        %1541 = vmatpush.msra.mxu0 0.0
        %1542 = vmatpush.msra.mxu0 0.0
        %1543 = vmatpush.msra.mxu0 0.0
        %1544 = vmatpush.msra.mxu0 0.0
        %1545 = vmatpush.msra.mxu0 0.0
        %1546 = vmatpush.msra.mxu0 0.0
        %1547 = vmatpush.msra.mxu0 %v1523
        %1548 = vmatpush.msra.mxu0 %v1521
        %1549 = vmatpush.msra.mxu0 %v1519
        %1550 = vmatmul.f32.gmra.mxu0 %v1529
        %v1551 = vpop.f32.mrf.mxu0
        %v1552 = vadd.f32 0.0, %v1551
        %1553 = vmatmul.f32.gmra.mxu0 %v1532
        %v1554 = vpop.f32.mrf.mxu0
        %v1555 = vadd.f32 0.0, %v1554
        %1556 = vdwg.mxu0
        %1557 = vmatpush.msra.mxu0 0.0
        %1558 = vmatpush.msra.mxu0 0.0
        %1559 = vmatpush.msra.mxu0 0.0
        %1560 = vmatpush.msra.mxu0 0.0
        %1561 = vmatpush.msra.mxu0 0.0
        %1562 = vmatpush.msra.mxu0 0.0
        %1563 = vmatpush.msra.mxu0 0.0
        %1564 = vmatpush.msra.mxu0 0.0
        %1565 = vmatpush.msra.mxu0 0.0
        %1566 = vmatpush.msra.mxu0 0.0
        %1567 = vmatpush.msra.mxu0 0.0
        %1568 = vmatpush.msra.mxu0 0.0
        %1569 = vmatpush.msra.mxu0 0.0
        %1570 = vmatpush.msra.mxu0 %v1524
        %1571 = vmatpush.msra.mxu0 %v1522
        %1572 = vmatpush.msra.mxu0 %v1520
        %1573 = vmatmul.f32.gmra.mxu0 %v1529
        %v1574 = vpop.f32.mrf.mxu0
        %v1575 = vadd.f32 0.0, %v1574
        %1576 = vmatmul.f32.gmra.mxu0 %v1532
        %v1577 = vpop.f32.mrf.mxu0
        %v1578 = vadd.f32 0.0, %v1577
        %1579 = vdwg.mxu0
        %s1580 = scalar_lea.vmem %s15, 16
        %v1581 = vld [vmem:[%s1580] sm:$0xff]
        %v1582 = vld [vmem:[%s1580 + $0x8] sm:$0xf]
        %v1584 = vsel %vm1527, %v1581, 0
        %v1587 = vsel %vm1527, %v1582, 0
        %1589 = vmatpush.msra.mxu0 0.0
        %1590 = vmatpush.msra.mxu0 0.0
        %1591 = vmatpush.msra.mxu0 0.0
        %1592 = vmatpush.msra.mxu0 0.0
        %1593 = vmatpush.msra.mxu0 0.0
        %1594 = vmatpush.msra.mxu0 0.0
        %1595 = vmatpush.msra.mxu0 0.0
        %1596 = vmatpush.msra.mxu0 0.0
        %1597 = vmatpush.msra.mxu0 0.0
        %1598 = vmatpush.msra.mxu0 0.0
        %1599 = vmatpush.msra.mxu0 0.0
        %1600 = vmatpush.msra.mxu0 0.0
        %1601 = vmatpush.msra.mxu0 0.0
        %1602 = vmatpush.msra.mxu0 %v1523
        %1603 = vmatpush.msra.mxu0 %v1521
        %1604 = vmatpush.msra.mxu0 %v1519
        %1605 = vmatmul.f32.gmra.mxu0 %v1584
        %v1606 = vpop.f32.mrf.mxu0
        %v1607 = vadd.f32 0.0, %v1606
        %1608 = vmatmul.f32.gmra.mxu0 %v1587
        %v1609 = vpop.f32.mrf.mxu0
        %v1610 = vadd.f32 0.0, %v1609
        %1611 = vdwg.mxu0
        %1612 = vmatpush.msra.mxu0 0.0
        %1613 = vmatpush.msra.mxu0 0.0
        %1614 = vmatpush.msra.mxu0 0.0
        %1615 = vmatpush.msra.mxu0 0.0
        %1616 = vmatpush.msra.mxu0 0.0
        %1617 = vmatpush.msra.mxu0 0.0
        %1618 = vmatpush.msra.mxu0 0.0
        %1619 = vmatpush.msra.mxu0 0.0
        %1620 = vmatpush.msra.mxu0 0.0
        %1621 = vmatpush.msra.mxu0 0.0
        %1622 = vmatpush.msra.mxu0 0.0
        %1623 = vmatpush.msra.mxu0 0.0
        %1624 = vmatpush.msra.mxu0 0.0
        %1625 = vmatpush.msra.mxu0 %v1524
        %1626 = vmatpush.msra.mxu0 %v1522
        %1627 = vmatpush.msra.mxu0 %v1520
        %1628 = vmatmul.f32.gmra.mxu0 %v1584
        %v1629 = vpop.f32.mrf.mxu0
        %v1630 = vadd.f32 0.0, %v1629
        %1631 = vmatmul.f32.gmra.mxu0 %v1587
        %v1632 = vpop.f32.mrf.mxu0
        %v1633 = vadd.f32 0.0, %v1632
        %1634 = vdwg.mxu0
        %v1635 = vmax.f32 %v1552, %v1607
        %v1636 = vmax.f32 %v1575, %v1630
        %v1637 = vmax.f32 %v1555, %v1610
        %v1638 = vmax.f32 %v1578, %v1633
        %v1639 = vld [vmem:[%s16] sm:$0xff]
        %v1640 = vld [vmem:[%s16 + $0x8] sm:$0xff]
        %v1641 = vld [vmem:[%s16 + $0x10] sm:$0xff]
        %v1642 = vld [vmem:[%s16 + $0x18] sm:$0xff]
        %v1643 = vld [vmem:[%s16 + $0x20] sm:$0xff]
        %v1644 = vld [vmem:[%s16 + $0x28] sm:$0xff]
        %v1645 = vld [vmem:[%s16 + $0x30] sm:$0xff]
        %v1646 = vld [vmem:[%s16 + $0x38] sm:$0xff]
        %v1647 = vld [vmem:[%s16 + $0x40] sm:$0xff]
        %v1648 = vld [vmem:[%s16 + $0x48] sm:$0xff]
        %v1649 = vld [vmem:[%s16 + $0x50] sm:$0xff]
        %v1650 = vld [vmem:[%s16 + $0x58] sm:$0xff]
        %v1651 = vld [vmem:[%s16 + $0x60] sm:$0xff]
        %v1652 = vld [vmem:[%s16 + $0x68] sm:$0xff]
        %v1653 = vld [vmem:[%s16 + $0x70] sm:$0xff]
        %v1654 = vld [vmem:[%s16 + $0x78] sm:$0xff]
        %v1655 = vld [vmem:[%s16 + $0x80] sm:$0xff]
        %v1656 = vld [vmem:[%s16 + $0x88] sm:$0xff]
        %v1657 = vld [vmem:[%s16 + $0x90] sm:$0xff]
        %v1658 = vld [vmem:[%s16 + $0x98] sm:$0xff]
        %v1659 = vld [vmem:[%s16 + $0xa0] sm:$0xff]
        %v1660 = vld [vmem:[%s16 + $0xa8] sm:$0xff]
        %v1661 = vld [vmem:[%s16 + $0xb0] sm:$0xff]
        %v1662 = vld [vmem:[%s16 + $0xb8] sm:$0xff]
        %vm1663 = vcmask 523264
        %v1665 = vsel %vm1663, %v1636, 0
        %v1668 = vsel %vm1663, %v1638, 0
        %1670 = vmatpush.msra.mxu0 %v1654
        %1671 = vmatpush.msra.mxu0 %v1653
        %1672 = vmatpush.msra.mxu0 %v1652
        %1673 = vmatpush.msra.mxu0 %v1651
        %1674 = vmatpush.msra.mxu0 %v1650
        %1675 = vmatpush.msra.mxu0 %v1649
        %1676 = vmatpush.msra.mxu0 %v1648
        %1677 = vmatpush.msra.mxu0 %v1647
        %1678 = vmatpush.msra.mxu0 %v1646
        %1679 = vmatpush.msra.mxu0 %v1645
        %1680 = vmatpush.msra.mxu0 %v1644
        %1681 = vmatpush.msra.mxu0 %v1643
        %1682 = vmatpush.msra.mxu0 %v1642
        %1683 = vmatpush.msra.mxu0 %v1641
        %1684 = vmatpush.msra.mxu0 %v1640
        %1685 = vmatpush.msra.mxu0 %v1639
        %1686 = vmatmul.f32.gmra.mxu0 %v1635
        %v1687 = vpop.f32.mrf.mxu0
        %v1688 = vadd.f32 0.0, %v1687
        %1689 = vmatmul.f32.gmra.mxu0 %v1637
        %v1690 = vpop.f32.mrf.mxu0
        %v1691 = vadd.f32 0.0, %v1690
        %1692 = vdwg.mxu0
        %1693 = vmatpush.msra.mxu0 0.0
        %1694 = vmatpush.msra.mxu0 0.0
        %1695 = vmatpush.msra.mxu0 0.0
        %1696 = vmatpush.msra.mxu0 0.0
        %1697 = vmatpush.msra.mxu0 0.0
        %1698 = vmatpush.msra.mxu0 0.0
        %1699 = vmatpush.msra.mxu0 0.0
        %1700 = vmatpush.msra.mxu0 0.0
        %1701 = vmatpush.msra.mxu0 %v1662
        %1702 = vmatpush.msra.mxu0 %v1661
        %1703 = vmatpush.msra.mxu0 %v1660
        %1704 = vmatpush.msra.mxu0 %v1659
        %1705 = vmatpush.msra.mxu0 %v1658
        %1706 = vmatpush.msra.mxu0 %v1657
        %1707 = vmatpush.msra.mxu0 %v1656
        %1708 = vmatpush.msra.mxu0 %v1655
        %1709 = vmatmul.f32.gmra.mxu0 %v1665
        %v1710 = vpop.f32.mrf.mxu0
        %v1711 = vadd.f32 %v1688, %v1710
        %1712 = vmatmul.f32.gmra.mxu0 %v1668
        %v1713 = vpop.f32.mrf.mxu0
        %v1714 = vadd.f32 %v1691, %v1713
        %1715 = vdwg.mxu0
        %s1716 = scalar_lea.vmem %s16, 192
        %v1717 = vld [vmem:[%s1716] sm:$0xff]
        %v1718 = vld [vmem:[%s1716 + $0x8] sm:$0xff]
        %v1719 = vld [vmem:[%s1716 + $0x10] sm:$0xff]
        %v1720 = vld [vmem:[%s1716 + $0x18] sm:$0xff]
        %v1721 = vld [vmem:[%s1716 + $0x20] sm:$0xff]
        %v1722 = vld [vmem:[%s1716 + $0x28] sm:$0xff]
        %v1723 = vld [vmem:[%s1716 + $0x30] sm:$0xff]
        %v1724 = vld [vmem:[%s1716 + $0x38] sm:$0xff]
        %v1725 = vld [vmem:[%s1716 + $0x40] sm:$0xff]
        %v1726 = vld [vmem:[%s1716 + $0x48] sm:$0xff]
        %v1727 = vld [vmem:[%s1716 + $0x50] sm:$0xff]
        %v1728 = vld [vmem:[%s1716 + $0x58] sm:$0xff]
        %v1729 = vld [vmem:[%s1716 + $0x60] sm:$0xff]
        %v1730 = vld [vmem:[%s1716 + $0x68] sm:$0xff]
        %v1731 = vld [vmem:[%s1716 + $0x70] sm:$0xff]
        %v1732 = vld [vmem:[%s1716 + $0x78] sm:$0xff]
        %v1733 = vld [vmem:[%s1716 + $0x80] sm:$0xff]
        %v1734 = vld [vmem:[%s1716 + $0x88] sm:$0xff]
        %v1735 = vld [vmem:[%s1716 + $0x90] sm:$0xff]
        %v1736 = vld [vmem:[%s1716 + $0x98] sm:$0xff]
        %v1737 = vld [vmem:[%s1716 + $0xa0] sm:$0xff]
        %v1738 = vld [vmem:[%s1716 + $0xa8] sm:$0xff]
        %v1739 = vld [vmem:[%s1716 + $0xb0] sm:$0xff]
        %v1740 = vld [vmem:[%s1716 + $0xb8] sm:$0xff]
        %1741 = vmatpush.msra.mxu0 %v1732
        %1742 = vmatpush.msra.mxu0 %v1731
        %1743 = vmatpush.msra.mxu0 %v1730
        %1744 = vmatpush.msra.mxu0 %v1729
        %1745 = vmatpush.msra.mxu0 %v1728
        %1746 = vmatpush.msra.mxu0 %v1727
        %1747 = vmatpush.msra.mxu0 %v1726
        %1748 = vmatpush.msra.mxu0 %v1725
        %1749 = vmatpush.msra.mxu0 %v1724
        %1750 = vmatpush.msra.mxu0 %v1723
        %1751 = vmatpush.msra.mxu0 %v1722
        %1752 = vmatpush.msra.mxu0 %v1721
        %1753 = vmatpush.msra.mxu0 %v1720
        %1754 = vmatpush.msra.mxu0 %v1719
        %1755 = vmatpush.msra.mxu0 %v1718
        %1756 = vmatpush.msra.mxu0 %v1717
        %1757 = vmatmul.f32.gmra.mxu0 %v1635
        %v1758 = vpop.f32.mrf.mxu0
        %v1759 = vadd.f32 0.0, %v1758
        %1760 = vmatmul.f32.gmra.mxu0 %v1637
        %v1761 = vpop.f32.mrf.mxu0
        %v1762 = vadd.f32 0.0, %v1761
        %1763 = vdwg.mxu0
        %1764 = vmatpush.msra.mxu0 0.0
        %1765 = vmatpush.msra.mxu0 0.0
        %1766 = vmatpush.msra.mxu0 0.0
        %1767 = vmatpush.msra.mxu0 0.0
        %1768 = vmatpush.msra.mxu0 0.0
        %1769 = vmatpush.msra.mxu0 0.0
        %1770 = vmatpush.msra.mxu0 0.0
        %1771 = vmatpush.msra.mxu0 0.0
        %1772 = vmatpush.msra.mxu0 %v1740
        %1773 = vmatpush.msra.mxu0 %v1739
        %1774 = vmatpush.msra.mxu0 %v1738
        %1775 = vmatpush.msra.mxu0 %v1737
        %1776 = vmatpush.msra.mxu0 %v1736
        %1777 = vmatpush.msra.mxu0 %v1735
        %1778 = vmatpush.msra.mxu0 %v1734
        %1779 = vmatpush.msra.mxu0 %v1733
        %1780 = vmatmul.f32.gmra.mxu0 %v1665
        %v1781 = vpop.f32.mrf.mxu0
        %v1782 = vadd.f32 %v1759, %v1781
        %1783 = vmatmul.f32.gmra.mxu0 %v1668
        %v1784 = vpop.f32.mrf.mxu0
        %v1785 = vadd.f32 %v1762, %v1784
        %1786 = vdwg.mxu0
        %v1787 = vmax.f32 %v1711, %v1782
        %v1788 = vmax.f32 %v1714, %v1785
        %v1789 = vld [vmem:[%s5] sm:$0xff]
        %v1790 = vld [vmem:[%s5 + $0x8] sm:$0xff]
        %v1791 = vld [vmem:[%s5 + $0x10] sm:$0xff]
        %v1792 = vld [vmem:[%s5 + $0x18] sm:$0xff]
        %v1793 = vld [vmem:[%s5 + $0x20] sm:$0xff]
        %v1794 = vld [vmem:[%s5 + $0x28] sm:$0xff]
        %v1795 = vld [vmem:[%s5 + $0x30] sm:$0xff]
        %v1796 = vld [vmem:[%s5 + $0x38] sm:$0xff]
        %v1797 = vld [vmem:[%s5 + $0x40] sm:$0xff]
        %v1798 = vld [vmem:[%s5 + $0x48] sm:$0xff]
        %v1799 = vld [vmem:[%s5 + $0x50] sm:$0xff]
        %v1800 = vld [vmem:[%s5 + $0x58] sm:$0xff]
        %s1801 = scalar_lea.vmem %s5, 96
        %v1802 = vld [vmem:[%s1801] sm:$0xff]
        %v1803 = vld [vmem:[%s1801 + $0x8] sm:$0xff]
        %v1804 = vld [vmem:[%s1801 + $0x10] sm:$0xff]
        %v1805 = vld [vmem:[%s1801 + $0x18] sm:$0xff]
        %v1806 = vld [vmem:[%s1801 + $0x20] sm:$0xff]
        %v1807 = vld [vmem:[%s1801 + $0x28] sm:$0xff]
        %v1808 = vld [vmem:[%s1801 + $0x30] sm:$0xff]
        %v1809 = vld [vmem:[%s1801 + $0x38] sm:$0xff]
        %v1810 = vld [vmem:[%s1801 + $0x40] sm:$0xff]
        %v1811 = vld [vmem:[%s1801 + $0x48] sm:$0xff]
        %v1812 = vld [vmem:[%s1801 + $0x50] sm:$0xff]
        %v1813 = vld [vmem:[%s1801 + $0x58] sm:$0xff]
        %v1816 = vrot.slane %v1787, 1
        %v1817 = vrot.slane %v1788, 1
        %v1818 = vsel %vm653, %v1816, %v1817
        %vm1819 = vcmask 785408
        %v1820 = vsel %vm1819, %v1818, 0
        %v1822 = vsel %vm1819, %v1817, 0
        %1824 = vmatpush.msra.mxu0 0.0
        %1825 = vmatpush.msra.mxu0 0.0
        %1826 = vmatpush.msra.mxu0 0.0
        %1827 = vmatpush.msra.mxu0 0.0
        %1828 = vmatpush.msra.mxu0 %v1813
        %1829 = vmatpush.msra.mxu0 %v1812
        %1830 = vmatpush.msra.mxu0 %v1811
        %1831 = vmatpush.msra.mxu0 %v1810
        %1832 = vmatpush.msra.mxu0 %v1809
        %1833 = vmatpush.msra.mxu0 %v1808
        %1834 = vmatpush.msra.mxu0 %v1807
        %1835 = vmatpush.msra.mxu0 %v1806
        %1836 = vmatpush.msra.mxu0 %v1805
        %1837 = vmatpush.msra.mxu0 %v1804
        %1838 = vmatpush.msra.mxu0 %v1803
        %1839 = vmatpush.msra.mxu0 %v1802
        %1840 = vmatmul.f32.gmra.mxu0 %v1820
        %v1841 = vpop.f32.mrf.mxu0
        %v1842 = vadd.f32 0.0, %v1841
        %1843 = vmatmul.f32.gmra.mxu0 %v1822
        %v1844 = vpop.f32.mrf.mxu0
        %v1845 = vadd.f32 0.0, %v1844
        %1846 = vdwg.mxu0
        %v1847 = vsel %vm1819, %v1787, 0
        %v1849 = vsel %vm1819, %v1788, 0
        %1851 = vmatpush.msra.mxu0 0.0
        %1852 = vmatpush.msra.mxu0 0.0
        %1853 = vmatpush.msra.mxu0 0.0
        %1854 = vmatpush.msra.mxu0 0.0
        %1855 = vmatpush.msra.mxu0 %v1800
        %1856 = vmatpush.msra.mxu0 %v1799
        %1857 = vmatpush.msra.mxu0 %v1798
        %1858 = vmatpush.msra.mxu0 %v1797
        %1859 = vmatpush.msra.mxu0 %v1796
        %1860 = vmatpush.msra.mxu0 %v1795
        %1861 = vmatpush.msra.mxu0 %v1794
        %1862 = vmatpush.msra.mxu0 %v1793
        %1863 = vmatpush.msra.mxu0 %v1792
        %1864 = vmatpush.msra.mxu0 %v1791
        %1865 = vmatpush.msra.mxu0 %v1790
        %1866 = vmatpush.msra.mxu0 %v1789
        %1867 = vmatmul.f32.gmra.mxu0 %v1847
        %v1868 = vpop.f32.mrf.mxu0
        %v1869 = vadd.f32 %v1842, %v1868
        %1870 = vmatmul.f32.gmra.mxu0 %v1849
        %v1871 = vpop.f32.mrf.mxu0
        %v1872 = vadd.f32 %v1845, %v1871
        %1873 = vdwg.mxu0
        %s1874 = scalar_lea.vmem %s5, 192
        %v1875 = vld [vmem:[%s1874] sm:$0xff]
        %v1876 = vld [vmem:[%s1874 + $0x8] sm:$0xff]
        %v1877 = vld [vmem:[%s1874 + $0x10] sm:$0xff]
        %v1878 = vld [vmem:[%s1874 + $0x18] sm:$0xff]
        %v1879 = vld [vmem:[%s1874 + $0x20] sm:$0xff]
        %v1880 = vld [vmem:[%s1874 + $0x28] sm:$0xff]
        %v1881 = vld [vmem:[%s1874 + $0x30] sm:$0xff]
        %v1882 = vld [vmem:[%s1874 + $0x38] sm:$0xff]
        %v1883 = vld [vmem:[%s1874 + $0x40] sm:$0xff]
        %v1884 = vld [vmem:[%s1874 + $0x48] sm:$0xff]
        %v1885 = vld [vmem:[%s1874 + $0x50] sm:$0xff]
        %v1886 = vld [vmem:[%s1874 + $0x58] sm:$0xff]
        %v1887 = vrot.slane %v1787, 2
        %v1888 = vrot.slane %v1788, 2
        %v1889 = vsel %vm830, %v1887, %v1888
        %v1890 = vsel %vm1819, %v1889, 0
        %v1892 = vsel %vm1819, %v1888, 0
        %1894 = vmatpush.msra.mxu0 0.0
        %1895 = vmatpush.msra.mxu0 0.0
        %1896 = vmatpush.msra.mxu0 0.0
        %1897 = vmatpush.msra.mxu0 0.0
        %1898 = vmatpush.msra.mxu0 %v1886
        %1899 = vmatpush.msra.mxu0 %v1885
        %1900 = vmatpush.msra.mxu0 %v1884
        %1901 = vmatpush.msra.mxu0 %v1883
        %1902 = vmatpush.msra.mxu0 %v1882
        %1903 = vmatpush.msra.mxu0 %v1881
        %1904 = vmatpush.msra.mxu0 %v1880
        %1905 = vmatpush.msra.mxu0 %v1879
        %1906 = vmatpush.msra.mxu0 %v1878
        %1907 = vmatpush.msra.mxu0 %v1877
        %1908 = vmatpush.msra.mxu0 %v1876
        %1909 = vmatpush.msra.mxu0 %v1875
        %1910 = vmatmul.f32.gmra.mxu0 %v1890
        %v1911 = vpop.f32.mrf.mxu0
        %v1912 = vadd.f32 0.0, %v1911
        %1913 = vmatmul.f32.gmra.mxu0 %v1892
        %v1914 = vpop.f32.mrf.mxu0
        %v1915 = vadd.f32 0.0, %v1914
        %1916 = vdwg.mxu0
        %v1917 = vadd.f32 %v1869, %v1912
        %v1918 = vadd.f32 %v1872, %v1915
        %v1919 = vld [vmem:[%s6] sm:$0x3]
        %v1920 = vperm.slane %v1919, 0
        %v1921 = vmul.f32 %v1917, %v1920
        %v1922 = vmul.f32 %v1918, %v1920
        %v1923 = vperm.slane %v1919, 1
        %v1924 = vadd.f32 %v1921, %v1923
        %v1925 = vadd.f32 %v1922, %v1923
        %v1926 = vmax.f32 %v1924, 0.0
        %v1927 = vmax.f32 %v1925, 0.0
        %v1928 = vld [vmem:[%s7] sm:$0xff]
        %v1929 = vld [vmem:[%s7 + $0x8] sm:$0xff]
        %v1930 = vld [vmem:[%s7 + $0x10] sm:$0xff]
        %v1931 = vld [vmem:[%s7 + $0x18] sm:$0xff]
        %v1932 = vld [vmem:[%s7 + $0x20] sm:$0xff]
        %v1933 = vld [vmem:[%s7 + $0x28] sm:$0xff]
        %v1934 = vld [vmem:[%s7 + $0x30] sm:$0xff]
        %v1935 = vld [vmem:[%s7 + $0x38] sm:$0xff]
        %v1936 = vld [vmem:[%s7 + $0x40] sm:$0xff]
        %v1937 = vld [vmem:[%s7 + $0x48] sm:$0xff]
        %s1938 = scalar_lea.vmem %s7, 80
        %v1939 = vld [vmem:[%s1938] sm:$0xff]
        %v1940 = vld [vmem:[%s1938 + $0x8] sm:$0xff]
        %v1941 = vld [vmem:[%s1938 + $0x10] sm:$0xff]
        %v1942 = vld [vmem:[%s1938 + $0x18] sm:$0xff]
        %v1943 = vld [vmem:[%s1938 + $0x20] sm:$0xff]
        %v1944 = vld [vmem:[%s1938 + $0x28] sm:$0xff]
        %v1945 = vld [vmem:[%s1938 + $0x30] sm:$0xff]
        %v1946 = vld [vmem:[%s1938 + $0x38] sm:$0xff]
        %v1947 = vld [vmem:[%s1938 + $0x40] sm:$0xff]
        %v1948 = vld [vmem:[%s1938 + $0x48] sm:$0xff]
        %v1951 = vrot.slane %v1926, 1
        %v1952 = vrot.slane %v1927, 1
        %v1953 = vsel %vm653, %v1951, %v1952
        %v1954 = vsel %vm1086, %v1953, 0
        %1956 = vmatpush.msra.mxu0 0.0
        %1957 = vmatpush.msra.mxu0 0.0
        %1958 = vmatpush.msra.mxu0 0.0
        %1959 = vmatpush.msra.mxu0 0.0
        %1960 = vmatpush.msra.mxu0 0.0
        %1961 = vmatpush.msra.mxu0 0.0
        %1962 = vmatpush.msra.mxu0 %v1948
        %1963 = vmatpush.msra.mxu0 %v1947
        %1964 = vmatpush.msra.mxu0 %v1946
        %1965 = vmatpush.msra.mxu0 %v1945
        %1966 = vmatpush.msra.mxu0 %v1944
        %1967 = vmatpush.msra.mxu0 %v1943
        %1968 = vmatpush.msra.mxu0 %v1942
        %1969 = vmatpush.msra.mxu0 %v1941
        %1970 = vmatpush.msra.mxu0 %v1940
        %1971 = vmatpush.msra.mxu0 %v1939
        %1972 = vmatmul.f32.gmra.mxu0 %v1954
        %v1973 = vpop.f32.mrf.mxu0
        %v1974 = vadd.f32 0.0, %v1973
        %1975 = vdwg.mxu0
        %v1976 = vsel %vm1086, %v1926, 0
        %1978 = vmatpush.msra.mxu0 0.0
        %1979 = vmatpush.msra.mxu0 0.0
        %1980 = vmatpush.msra.mxu0 0.0
        %1981 = vmatpush.msra.mxu0 0.0
        %1982 = vmatpush.msra.mxu0 0.0
        %1983 = vmatpush.msra.mxu0 0.0
        %1984 = vmatpush.msra.mxu0 %v1937
        %1985 = vmatpush.msra.mxu0 %v1936
        %1986 = vmatpush.msra.mxu0 %v1935
        %1987 = vmatpush.msra.mxu0 %v1934
        %1988 = vmatpush.msra.mxu0 %v1933
        %1989 = vmatpush.msra.mxu0 %v1932
        %1990 = vmatpush.msra.mxu0 %v1931
        %1991 = vmatpush.msra.mxu0 %v1930
        %1992 = vmatpush.msra.mxu0 %v1929
        %1993 = vmatpush.msra.mxu0 %v1928
        %1994 = vmatmul.f32.gmra.mxu0 %v1976
        %v1995 = vpop.f32.mrf.mxu0
        %v1996 = vadd.f32 %v1974, %v1995
        %1997 = vdwg.mxu0
        %s1998 = scalar_lea.vmem %s7, 160
        %v1999 = vld [vmem:[%s1998] sm:$0xff]
        %v2000 = vld [vmem:[%s1998 + $0x8] sm:$0xff]
        %v2001 = vld [vmem:[%s1998 + $0x10] sm:$0xff]
        %v2002 = vld [vmem:[%s1998 + $0x18] sm:$0xff]
        %v2003 = vld [vmem:[%s1998 + $0x20] sm:$0xff]
        %v2004 = vld [vmem:[%s1998 + $0x28] sm:$0xff]
        %v2005 = vld [vmem:[%s1998 + $0x30] sm:$0xff]
        %v2006 = vld [vmem:[%s1998 + $0x38] sm:$0xff]
        %v2007 = vld [vmem:[%s1998 + $0x40] sm:$0xff]
        %v2008 = vld [vmem:[%s1998 + $0x48] sm:$0xff]
        %v2009 = vrot.slane %v1926, 2
        %v2010 = vrot.slane %v1927, 2
        %v2011 = vsel %vm830, %v2009, %v2010
        %v2012 = vsel %vm1086, %v2011, 0
        %2014 = vmatpush.msra.mxu0 0.0
        %2015 = vmatpush.msra.mxu0 0.0
        %2016 = vmatpush.msra.mxu0 0.0
        %2017 = vmatpush.msra.mxu0 0.0
        %2018 = vmatpush.msra.mxu0 0.0
        %2019 = vmatpush.msra.mxu0 0.0
        %2020 = vmatpush.msra.mxu0 %v2008
        %2021 = vmatpush.msra.mxu0 %v2007
        %2022 = vmatpush.msra.mxu0 %v2006
        %2023 = vmatpush.msra.mxu0 %v2005
        %2024 = vmatpush.msra.mxu0 %v2004
        %2025 = vmatpush.msra.mxu0 %v2003
        %2026 = vmatpush.msra.mxu0 %v2002
        %2027 = vmatpush.msra.mxu0 %v2001
        %2028 = vmatpush.msra.mxu0 %v2000
        %2029 = vmatpush.msra.mxu0 %v1999
        %2030 = vmatmul.f32.gmra.mxu0 %v2012
        %v2031 = vpop.f32.mrf.mxu0
        %v2032 = vadd.f32 0.0, %v2031
        %2033 = vdwg.mxu0
        %v2034 = vadd.f32 %v1996, %v2032
        %v2035 = vld [vmem:[%s8] sm:$0x3]
        %v2036 = vperm.slane %v2035, 0
        %v2037 = vmul.f32 %v2034, %v2036
        %v2038 = vperm.slane %v2035, 1
        %v2039 = vadd.f32 %v2037, %v2038
        %v2040 = vmax.f32 %v2039, 0.0
        %v2041 = vld [vmem:[%s9] sm:$0xff]
        %v2042 = vld [vmem:[%s9 + $0x8] sm:$0xff]
        %v2043 = vld [vmem:[%s9 + $0x10] sm:$0xff]
        %v2044 = vld [vmem:[%s9 + $0x18] sm:$0xff]
        %v2045 = vld [vmem:[%s9 + $0x20] sm:$0xff]
        %v2046 = vld [vmem:[%s9 + $0x28] sm:$0xff]
        %v2047 = vld [vmem:[%s9 + $0x30] sm:$0xff]
        %v2048 = vld [vmem:[%s9 + $0x38] sm:$0xff]
        %s2049 = scalar_lea.vmem %s9, 64
        %v2050 = vld [vmem:[%s2049] sm:$0xff]
        %v2051 = vld [vmem:[%s2049 + $0x8] sm:$0xff]
        %v2052 = vld [vmem:[%s2049 + $0x10] sm:$0xff]
        %v2053 = vld [vmem:[%s2049 + $0x18] sm:$0xff]
        %v2054 = vld [vmem:[%s2049 + $0x20] sm:$0xff]
        %v2055 = vld [vmem:[%s2049 + $0x28] sm:$0xff]
        %v2056 = vld [vmem:[%s2049 + $0x30] sm:$0xff]
        %v2057 = vld [vmem:[%s2049 + $0x38] sm:$0xff]
        %v2059 = vrot.slane %v2040, 1
        %v2060 = vsel %vm1663, %v2059, 0
        %2062 = vmatpush.msra.mxu0 0.0
        %2063 = vmatpush.msra.mxu0 0.0
        %2064 = vmatpush.msra.mxu0 0.0
        %2065 = vmatpush.msra.mxu0 0.0
        %2066 = vmatpush.msra.mxu0 0.0
        %2067 = vmatpush.msra.mxu0 0.0
        %2068 = vmatpush.msra.mxu0 0.0
        %2069 = vmatpush.msra.mxu0 0.0
        %2070 = vmatpush.msra.mxu0 %v2057
        %2071 = vmatpush.msra.mxu0 %v2056
        %2072 = vmatpush.msra.mxu0 %v2055
        %2073 = vmatpush.msra.mxu0 %v2054
        %2074 = vmatpush.msra.mxu0 %v2053
        %2075 = vmatpush.msra.mxu0 %v2052
        %2076 = vmatpush.msra.mxu0 %v2051
        %2077 = vmatpush.msra.mxu0 %v2050
        %2078 = vmatmul.f32.gmra.mxu0 %v2060
        %v2079 = vpop.f32.mrf.mxu0
        %v2080 = vadd.f32 0.0, %v2079
        %2081 = vdwg.mxu0
        %v2082 = vsel %vm1663, %v2040, 0
        %2084 = vmatpush.msra.mxu0 0.0
        %2085 = vmatpush.msra.mxu0 0.0
        %2086 = vmatpush.msra.mxu0 0.0
        %2087 = vmatpush.msra.mxu0 0.0
        %2088 = vmatpush.msra.mxu0 0.0
        %2089 = vmatpush.msra.mxu0 0.0
        %2090 = vmatpush.msra.mxu0 0.0
        %2091 = vmatpush.msra.mxu0 0.0
        %2092 = vmatpush.msra.mxu0 %v2048
        %2093 = vmatpush.msra.mxu0 %v2047
        %2094 = vmatpush.msra.mxu0 %v2046
        %2095 = vmatpush.msra.mxu0 %v2045
        %2096 = vmatpush.msra.mxu0 %v2044
        %2097 = vmatpush.msra.mxu0 %v2043
        %2098 = vmatpush.msra.mxu0 %v2042
        %2099 = vmatpush.msra.mxu0 %v2041
        %2100 = vmatmul.f32.gmra.mxu0 %v2082
        %v2101 = vpop.f32.mrf.mxu0
        %v2102 = vadd.f32 %v2080, %v2101
        %2103 = vdwg.mxu0
        %s2104 = scalar_lea.vmem %s9, 128
        %v2105 = vld [vmem:[%s2104] sm:$0xff]
        %v2106 = vld [vmem:[%s2104 + $0x8] sm:$0xff]
        %v2107 = vld [vmem:[%s2104 + $0x10] sm:$0xff]
        %v2108 = vld [vmem:[%s2104 + $0x18] sm:$0xff]
        %v2109 = vld [vmem:[%s2104 + $0x20] sm:$0xff]
        %v2110 = vld [vmem:[%s2104 + $0x28] sm:$0xff]
        %v2111 = vld [vmem:[%s2104 + $0x30] sm:$0xff]
        %v2112 = vld [vmem:[%s2104 + $0x38] sm:$0xff]
        %v2113 = vrot.slane %v2040, 2
        %v2114 = vsel %vm1663, %v2113, 0
        %2116 = vmatpush.msra.mxu0 0.0
        %2117 = vmatpush.msra.mxu0 0.0
        %2118 = vmatpush.msra.mxu0 0.0
        %2119 = vmatpush.msra.mxu0 0.0
        %2120 = vmatpush.msra.mxu0 0.0
        %2121 = vmatpush.msra.mxu0 0.0
        %2122 = vmatpush.msra.mxu0 0.0
        %2123 = vmatpush.msra.mxu0 0.0
        %2124 = vmatpush.msra.mxu0 %v2112
        %2125 = vmatpush.msra.mxu0 %v2111
        %2126 = vmatpush.msra.mxu0 %v2110
        %2127 = vmatpush.msra.mxu0 %v2109
        %2128 = vmatpush.msra.mxu0 %v2108
        %2129 = vmatpush.msra.mxu0 %v2107
        %2130 = vmatpush.msra.mxu0 %v2106
        %2131 = vmatpush.msra.mxu0 %v2105
        %2132 = vmatmul.f32.gmra.mxu0 %v2114
        %v2133 = vpop.f32.mrf.mxu0
        %v2134 = vadd.f32 0.0, %v2133
        %2135 = vdwg.mxu0
        %v2136 = vadd.f32 %v2102, %v2134
        %v2137 = vld [vmem:[%s10] sm:$0x3]
        %v2138 = vperm.slane %v2137, 0
        %v2139 = vmul.f32 %v2136, %v2138
        %v2140 = vperm.slane %v2137, 1
        %v2141 = vadd.f32 %v2139, %v2140
        %v2142 = vmax.f32 %v2141, 0.0
        %v2143 = vld [vmem:[%s11] sm:$0xff]
        %v2144 = vld [vmem:[%s11 + $0x8] sm:$0xff]
        %v2145 = vld [vmem:[%s11 + $0x10] sm:$0xff]
        %v2146 = vld [vmem:[%s11 + $0x18] sm:$0xff]
        %v2147 = vld [vmem:[%s11 + $0x20] sm:$0xff]
        %v2148 = vld [vmem:[%s11 + $0x28] sm:$0xff]
        %s2149 = scalar_lea.vmem %s11, 48
        %v2150 = vld [vmem:[%s2149] sm:$0xff]
        %v2151 = vld [vmem:[%s2149 + $0x8] sm:$0xff]
        %v2152 = vld [vmem:[%s2149 + $0x10] sm:$0xff]
        %v2153 = vld [vmem:[%s2149 + $0x18] sm:$0xff]
        %v2154 = vld [vmem:[%s2149 + $0x20] sm:$0xff]
        %v2155 = vld [vmem:[%s2149 + $0x28] sm:$0xff]
        %v2157 = vrot.slane %v2142, 1
        %vm2158 = vcmask 392192
        %v2159 = vsel %vm2158, %v2157, 0
        %2161 = vmatpush.msra.mxu0 0.0
        %2162 = vmatpush.msra.mxu0 0.0
        %2163 = vmatpush.msra.mxu0 0.0
        %2164 = vmatpush.msra.mxu0 0.0
        %2165 = vmatpush.msra.mxu0 0.0
        %2166 = vmatpush.msra.mxu0 0.0
        %2167 = vmatpush.msra.mxu0 0.0
        %2168 = vmatpush.msra.mxu0 0.0
        %2169 = vmatpush.msra.mxu0 0.0
        %2170 = vmatpush.msra.mxu0 0.0
        %2171 = vmatpush.msra.mxu0 %v2155
        %2172 = vmatpush.msra.mxu0 %v2154
        %2173 = vmatpush.msra.mxu0 %v2153
        %2174 = vmatpush.msra.mxu0 %v2152
        %2175 = vmatpush.msra.mxu0 %v2151
        %2176 = vmatpush.msra.mxu0 %v2150
        %2177 = vmatmul.f32.gmra.mxu0 %v2159
        %v2178 = vpop.f32.mrf.mxu0
        %v2179 = vadd.f32 0.0, %v2178
        %2180 = vdwg.mxu0
        %v2181 = vsel %vm2158, %v2142, 0
        %2183 = vmatpush.msra.mxu0 0.0
        %2184 = vmatpush.msra.mxu0 0.0
        %2185 = vmatpush.msra.mxu0 0.0
        %2186 = vmatpush.msra.mxu0 0.0
        %2187 = vmatpush.msra.mxu0 0.0
        %2188 = vmatpush.msra.mxu0 0.0
        %2189 = vmatpush.msra.mxu0 0.0
        %2190 = vmatpush.msra.mxu0 0.0
        %2191 = vmatpush.msra.mxu0 0.0
        %2192 = vmatpush.msra.mxu0 0.0
        %2193 = vmatpush.msra.mxu0 %v2148
        %2194 = vmatpush.msra.mxu0 %v2147
        %2195 = vmatpush.msra.mxu0 %v2146
        %2196 = vmatpush.msra.mxu0 %v2145
        %2197 = vmatpush.msra.mxu0 %v2144
        %2198 = vmatpush.msra.mxu0 %v2143
        %2199 = vmatmul.f32.gmra.mxu0 %v2181
        %v2200 = vpop.f32.mrf.mxu0
        %v2201 = vadd.f32 %v2179, %v2200
        %2202 = vdwg.mxu0
        %s2203 = scalar_lea.vmem %s11, 96
        %v2204 = vld [vmem:[%s2203] sm:$0xff]
        %v2205 = vld [vmem:[%s2203 + $0x8] sm:$0xff]
        %v2206 = vld [vmem:[%s2203 + $0x10] sm:$0xff]
        %v2207 = vld [vmem:[%s2203 + $0x18] sm:$0xff]
        %v2208 = vld [vmem:[%s2203 + $0x20] sm:$0xff]
        %v2209 = vld [vmem:[%s2203 + $0x28] sm:$0xff]
        %v2210 = vrot.slane %v2142, 2
        %v2211 = vsel %vm2158, %v2210, 0
        %2213 = vmatpush.msra.mxu0 0.0
        %2214 = vmatpush.msra.mxu0 0.0
        %2215 = vmatpush.msra.mxu0 0.0
        %2216 = vmatpush.msra.mxu0 0.0
        %2217 = vmatpush.msra.mxu0 0.0
        %2218 = vmatpush.msra.mxu0 0.0
        %2219 = vmatpush.msra.mxu0 0.0
        %2220 = vmatpush.msra.mxu0 0.0
        %2221 = vmatpush.msra.mxu0 0.0
        %2222 = vmatpush.msra.mxu0 0.0
        %2223 = vmatpush.msra.mxu0 %v2209
        %2224 = vmatpush.msra.mxu0 %v2208
        %2225 = vmatpush.msra.mxu0 %v2207
        %2226 = vmatpush.msra.mxu0 %v2206
        %2227 = vmatpush.msra.mxu0 %v2205
        %2228 = vmatpush.msra.mxu0 %v2204
        %2229 = vmatmul.f32.gmra.mxu0 %v2211
        %v2230 = vpop.f32.mrf.mxu0
        %v2231 = vadd.f32 0.0, %v2230
        %2232 = vdwg.mxu0
        %v2233 = vadd.f32 %v2201, %v2231
        %v2234 = vld [vmem:[%s12] sm:$0x3]
        %v2235 = vperm.slane %v2234, 0
        %v2236 = vmul.f32 %v2233, %v2235
        %v2237 = vperm.slane %v2234, 1
        %v2238 = vadd.f32 %v2236, %v2237
        %v2239 = vmax.f32 %v2238, 0.0
        %v2240 = vld [vmem:[%s13] sm:$0xff]
        %v2241 = vld [vmem:[%s13 + $0x8] sm:$0xff]
        %v2242 = vld [vmem:[%s13 + $0x10] sm:$0xff]
        %v2243 = vld [vmem:[%s13 + $0x18] sm:$0xff]
        %s2244 = scalar_lea.vmem %s13, 32
        %v2245 = vld [vmem:[%s2244] sm:$0xff]
        %v2246 = vld [vmem:[%s2244 + $0x8] sm:$0xff]
        %v2247 = vld [vmem:[%s2244 + $0x10] sm:$0xff]
        %v2248 = vld [vmem:[%s2244 + $0x18] sm:$0xff]
        %v2250 = vrot.slane %v2239, 1
        %vm2251 = vcmask 261120
        %v2252 = vsel %vm2251, %v2250, 0
        %2254 = vmatpush.msra.mxu0 0.0
        %2255 = vmatpush.msra.mxu0 0.0
        %2256 = vmatpush.msra.mxu0 0.0
        %2257 = vmatpush.msra.mxu0 0.0
        %2258 = vmatpush.msra.mxu0 0.0
        %2259 = vmatpush.msra.mxu0 0.0
        %2260 = vmatpush.msra.mxu0 0.0
        %2261 = vmatpush.msra.mxu0 0.0
        %2262 = vmatpush.msra.mxu0 0.0
        %2263 = vmatpush.msra.mxu0 0.0
        %2264 = vmatpush.msra.mxu0 0.0
        %2265 = vmatpush.msra.mxu0 0.0
        %2266 = vmatpush.msra.mxu0 %v2248
        %2267 = vmatpush.msra.mxu0 %v2247
        %2268 = vmatpush.msra.mxu0 %v2246
        %2269 = vmatpush.msra.mxu0 %v2245
        %2270 = vmatmul.f32.gmra.mxu0 %v2252
        %v2271 = vpop.f32.mrf.mxu0
        %v2272 = vadd.f32 0.0, %v2271
        %2273 = vdwg.mxu0
        %v2274 = vsel %vm2251, %v2239, 0
        %2276 = vmatpush.msra.mxu0 0.0
        %2277 = vmatpush.msra.mxu0 0.0
        %2278 = vmatpush.msra.mxu0 0.0
        %2279 = vmatpush.msra.mxu0 0.0
        %2280 = vmatpush.msra.mxu0 0.0
        %2281 = vmatpush.msra.mxu0 0.0
        %2282 = vmatpush.msra.mxu0 0.0
        %2283 = vmatpush.msra.mxu0 0.0
        %2284 = vmatpush.msra.mxu0 0.0
        %2285 = vmatpush.msra.mxu0 0.0
        %2286 = vmatpush.msra.mxu0 0.0
        %2287 = vmatpush.msra.mxu0 0.0
        %2288 = vmatpush.msra.mxu0 %v2243
        %2289 = vmatpush.msra.mxu0 %v2242
        %2290 = vmatpush.msra.mxu0 %v2241
        %2291 = vmatpush.msra.mxu0 %v2240
        %2292 = vmatmul.f32.gmra.mxu0 %v2274
        %v2293 = vpop.f32.mrf.mxu0
        %v2294 = vadd.f32 %v2272, %v2293
        %2295 = vdwg.mxu0
        %s2296 = scalar_lea.vmem %s13, 64
        %v2297 = vld [vmem:[%s2296] sm:$0xff]
        %v2298 = vld [vmem:[%s2296 + $0x8] sm:$0xff]
        %v2299 = vld [vmem:[%s2296 + $0x10] sm:$0xff]
        %v2300 = vld [vmem:[%s2296 + $0x18] sm:$0xff]
        %v2301 = vrot.slane %v2239, 2
        %v2302 = vsel %vm2251, %v2301, 0
        %2304 = vmatpush.msra.mxu0 0.0
        %2305 = vmatpush.msra.mxu0 0.0
        %2306 = vmatpush.msra.mxu0 0.0
        %2307 = vmatpush.msra.mxu0 0.0
        %2308 = vmatpush.msra.mxu0 0.0
        %2309 = vmatpush.msra.mxu0 0.0
        %2310 = vmatpush.msra.mxu0 0.0
        %2311 = vmatpush.msra.mxu0 0.0
        %2312 = vmatpush.msra.mxu0 0.0
        %2313 = vmatpush.msra.mxu0 0.0
        %2314 = vmatpush.msra.mxu0 0.0
        %2315 = vmatpush.msra.mxu0 0.0
        %2316 = vmatpush.msra.mxu0 %v2300
        %2317 = vmatpush.msra.mxu0 %v2299
        %2318 = vmatpush.msra.mxu0 %v2298
        %2319 = vmatpush.msra.mxu0 %v2297
        %2320 = vmatmul.f32.gmra.mxu0 %v2302
        %v2321 = vpop.f32.mrf.mxu0
        %v2322 = vadd.f32 0.0, %v2321
        %2323 = vdwg.mxu0
        %v2324 = vadd.f32 %v2294, %v2322
        %s2325 = scalar_lea.vmem %s13, 96
        %v2326 = vld [vmem:[%s2325] sm:$0xff]
        %v2327 = vld [vmem:[%s2325 + $0x8] sm:$0xff]
        %v2328 = vld [vmem:[%s2325 + $0x10] sm:$0xff]
        %v2329 = vld [vmem:[%s2325 + $0x18] sm:$0xff]
        %v2330 = vrot.slane %v2239, 3
        %v2331 = vsel %vm2251, %v2330, 0
        %2333 = vmatpush.msra.mxu0 0.0
        %2334 = vmatpush.msra.mxu0 0.0
        %2335 = vmatpush.msra.mxu0 0.0
        %2336 = vmatpush.msra.mxu0 0.0
        %2337 = vmatpush.msra.mxu0 0.0
        %2338 = vmatpush.msra.mxu0 0.0
        %2339 = vmatpush.msra.mxu0 0.0
        %2340 = vmatpush.msra.mxu0 0.0
        %2341 = vmatpush.msra.mxu0 0.0
        %2342 = vmatpush.msra.mxu0 0.0
        %2343 = vmatpush.msra.mxu0 0.0
        %2344 = vmatpush.msra.mxu0 0.0
        %2345 = vmatpush.msra.mxu0 %v2329
        %2346 = vmatpush.msra.mxu0 %v2328
        %2347 = vmatpush.msra.mxu0 %v2327
        %2348 = vmatpush.msra.mxu0 %v2326
        %2349 = vmatmul.f32.gmra.mxu0 %v2331
        %v2350 = vpop.f32.mrf.mxu0
        %v2351 = vadd.f32 0.0, %v2350
        %2352 = vdwg.mxu0
        %v2353 = vadd.f32 %v2324, %v2351
        %v2354 = vld [vmem:[%s14] sm:$0x3]
        %v2355 = vmul.f32 %v2353, %v2354
        %v2357 = vrot.slane %v2354, 1
        %v2359 = vadd.f32 %v2355, %v2357
        %v2360 = vmax.f32 %v2359, 0.0
        %v2361 = vld [vmem:[%s17] sm:$0xff]
        %v2362 = vld [vmem:[%s18] sm:$0x1]
        %vm2363 = vcmask 64512
        %v2365 = vsel %vm2363, %v2360, 0
        %2367 = vmatpush.msra.mxu0 0.0
        %2368 = vmatpush.msra.mxu0 0.0
        %2369 = vmatpush.msra.mxu0 0.0
        %2370 = vmatpush.msra.mxu0 0.0
        %2371 = vmatpush.msra.mxu0 0.0
        %2372 = vmatpush.msra.mxu0 0.0
        %2373 = vmatpush.msra.mxu0 0.0
        %2374 = vmatpush.msra.mxu0 0.0
        %2375 = vmatpush.msra.mxu0 0.0
        %2376 = vmatpush.msra.mxu0 0.0
        %2377 = vmatpush.msra.mxu0 0.0
        %2378 = vmatpush.msra.mxu0 0.0
        %2379 = vmatpush.msra.mxu0 0.0
        %2380 = vmatpush.msra.mxu0 0.0
        %2381 = vmatpush.msra.mxu0 0.0
        %2382 = vmatpush.msra.mxu0 %v2361
        %2383 = vmatmul.f32.gmra.mxu0 %v2365
        %v2384 = vpop.f32.mrf.mxu0
        %v2385 = vadd.f32 %v2362, %v2384
        %2386 = vdwg.mxu0
        %vm2387 = vcmask 73728
        %v2388 = vsel %vm2387, %v2385, -inf
        %2389 = vmax.xlane.f32.xlu0 %v2388
        %v2390 = vpop.xlane.xlu0 %2389
        %v2391 = vsub.f32 %v2385, %v2390
        %v2392 = vmul.f32 %v2391, 1.442695
        %v2393 = vpow.pop %v2392
        %v2394 = vsel %vm2387, %v2393, 0.0
        %2395 = vadd.xlane.f32.xlu0 %v2394
        %v2396 = vpop.xlane.xlu0 %2395
        %v2397 = vlog2.pop %v2396
        %v2398 = vmul.f32 %v2397, 0.6931472
        %v2399 = vsub.f32 %v2391, %v2398
        %2400 = vst.msk [vmem:[%s594] sm:$0x1] %vm2387, %v2399
        %s2401 = sand.u32 %s445, 1
        %s2402 = scalar_lea.sflag [#allocation3], %s2401
        %s2403 = sand.u32 %s445, 1
        %s2404 = scalar_lea.vmem [#allocation2], %s2403
        // Predicated region
        $region97: #{cnn_forward.1} parent=95 // pred_check
          %p2405 = pneg %p455
        $region98: #{cnn_forward.1} parent=95 // pred_check_branch
          %2407 = sbr.rel (%p2405) target = $region100
        $region99: #{cnn_forward.1} parent=95 // pred_region
          %2409 = vsyncadd %s2402, 0
          %s2410 = scalar_lea.hbm %s19, %s33
          %s2412 = sshll.u32 %s2404, 4
          %s2413 = int_to_ptr.vmem [resolvable:$true] %s2412
          %s2414 = sshll.u32 %s2410, 4
          %s2415 = int_to_ptr.hbm [resolvable:$true] %s2414
          %2417 = dma.vmem_to_hbm [thread:$0]  %s2413, 16, %s2415, %s2402
        $region100: #{cnn_forward.1} parent=95 // pred_fallthru
          _
      $region96: #{cnn_forward.1} parent=5 // pred_fallthru
        _
      %p2418 = scmp.le.s32.totalorder 2, %s28
      // Predicated region
      $region101: #{cnn_forward.1} parent=5 // pred_check
        %p2419 = pneg %p2418
      $region102: #{cnn_forward.1} parent=5 // pred_check_branch
        %2421 = sbr.rel (%p2419) target = $region104
      $region103: #{cnn_forward.1} parent=5 // pred_region
        %s2422 = ssub.s32 %s28, 2
        // Predicated region
        $region105: #{cnn_forward.1} parent=103 // pred_check
          %p2423 = pneg %p461
        $region106: #{cnn_forward.1} parent=103 // pred_check_branch
          %2425 = sbr.rel (%p2423) target = $region108
        $region107: #{cnn_forward.1} parent=103 // pred_region
          %s2426 = sand.u32 %s446, 1
          %s2427 = scalar_lea.sflag [#allocation3], %s2426
          %s2428 = sand.u32 %s446, 1
          %s2429 = scalar_lea.vmem [#allocation2], %s2428
          %2431 = dma.done %s2427, 16
        $region108: #{cnn_forward.1} parent=103 // pred_fallthru
          _
      $region104: #{cnn_forward.1} parent=5 // pred_fallthru
        _
    $region6: #{cnn_forward.1} parent=1 // loop_footer
      %s32 = sadd.s32 1, %s28
    $region7: #{cnn_forward.1} parent=1 // loop_footer_branch
      %27 = sbr.rel target = $region3
    $region8: #{cnn_forward.1} parent=1 // loop_exit
      _
    %2432 = vsyncpa [#allocation3], 1
    %s2433 = scalar_lea.sflag [#allocation3], 1
    %2434 = vsyncpa %s2433, 1

</llo_original>
